<compile_context>
chip_gen: v5e
topology: v5e:2x2
jax: 0.10.0
libtpu: 0.0.40
codegen_flags: <defaults>
</compile_context>

<pallas_src>
import functools
from dataclasses import dataclass

import jax
import jax.numpy as jnp
from jax.experimental import pallas as pl
from jax.experimental.pallas import tpu as pltpu


@dataclass
class GUTNetConfig:
    model_type: str = "with_attention"   # anything else -> linear branch
    max_variables: int = 16
    input_dim: int = 4
    hidden_size: int = 32
    layer_norm_eps: float = 1e-12
    hidden_dropout_prob: float = 0.1


def _round_up(a, b):
    return -(-a // b) * b


# ---------------------------------------------------------------------------
# Fused kernel: emb = x @ W + bias ; grouped LayerNorm over each H-lane group.
#   x_ref   : (tile_r, K)   packed input rows
#   w_ref   : (K, L)        block-diagonal embedding matrix (resident)
#   g_ref   : (L, L)        kron(I_groups, ones(H,H)/H)  -- group-mean matrix
#   vec_ref : (3, L)        rows: bias, gamma, beta (each tiled per group)
#   out_ref : (tile_r, L)   lane-dense output rows
# All three matmuls hit the MXU; precision=HIGHEST keeps them f32-exact so the
# result matches the f32 PyTorch reference to ~1e-6.
# ---------------------------------------------------------------------------
def _fused_embed_ln_kernel(x_ref, w_ref, g_ref, vec_ref, out_ref, *, eps):
    hi = jax.lax.Precision.HIGHEST
    emb = jnp.dot(x_ref[...], w_ref[...], precision=hi,
                  preferred_element_type=jnp.float32) + vec_ref[0:1, :]
    mean = jnp.dot(emb, g_ref[...], precision=hi,
                   preferred_element_type=jnp.float32)
    cent = emb - mean
    var = jnp.dot(cent * cent, g_ref[...], precision=hi,
                  preferred_element_type=jnp.float32)
    inv = jax.lax.rsqrt(var + eps)
    out_ref[...] = cent * inv * vec_ref[1:2, :] + vec_ref[2:3, :]


def _fused_embed_layernorm(x2, w_big, g, vecs, eps, *, tile_rows=4096):
    """Rows of x2 -> GroupedLayerNorm(x2 @ w_big + bias). All f32."""
    R, K = x2.shape
    L = w_big.shape[1]

    # --- tiling ------------------------------------------------------------
    # VMEM footprint (double-buffered x + out, f32); the x tile lane-pads its
    # minor dim to >=128 in VMEM, so count that, not K.  Keep <= ~8 MiB so we
    # stay well under v5e's 16 MiB scoped-VMEM default (v6e/v7x have 32 MiB).
    k_pad = max(_round_up(K, 128), 128)
    bytes_per_row = 2 * 4 * (k_pad + L)
    vmem_budget = 8 * 1024 * 1024
    tile_rows = max(64, min(tile_rows, vmem_budget // bytes_per_row))

    n_steps = pl.cdiv(R, tile_rows)
    if n_steps == 1 and R > 1024:
        n_steps = 2                      # keep both v7x TensorCores busy
    tile_r = min(_round_up(pl.cdiv(R, n_steps), 8), _round_up(R, 8))
    if tile_r >= R:
        tile_r = R                       # single full block (any alignment ok)
    grid = (pl.cdiv(R, tile_r),)         # uneven tail block is masked by Pallas

    kernel = functools.partial(_fused_embed_ln_kernel, eps=eps)
    return pl.pallas_call(
        kernel,
        out_shape=jax.ShapeDtypeStruct((R, L), jnp.float32),
        grid=grid,
        in_specs=[
            pl.BlockSpec((tile_r, K), lambda i: (i, 0)),
            pl.BlockSpec((K, L), lambda i: (0, 0)),      # resident
            pl.BlockSpec((L, L), lambda i: (0, 0)),      # resident
            pl.BlockSpec((3, L), lambda i: (0, 0)),      # resident
        ],
        out_specs=pl.BlockSpec((tile_r, L), lambda i: (i, 0)),
        compiler_params=pltpu.CompilerParams(
            dimension_semantics=("parallel",)),
    )(x2, w_big, g, vecs)


# ---------------------------------------------------------------------------
# Linear branch: emb = x @ W^T + b, then LayerNorm.  x: (B, S, D) -> (B, S, H)
# Rows are packed `pack = 128 // H` side-by-side so the kernel is lane-dense.
# ---------------------------------------------------------------------------
def embeddings_linear(x, w, b, gamma, beta, eps, *, tile_rows=4096):
    B, S, D = x.shape
    H = w.shape[0]                                  # torch Linear weight: (H, D)
    R = B * S

    # Lane packing only when H divides 128; otherwise pack=1 (correct but
    # lane-sparse stores for odd H).
    pack = 128 // H if (H < 128 and 128 % H == 0) else 1
    P = pl.cdiv(R, pack)

    x2 = x.reshape(R, D).astype(jnp.float32)
    if P * pack != R:
        # Ragged rows: pad so the (R, D) -> (P, pack*D) repack is a free
        # row-major reshape.  TODO(synk): this pad and the final [:R] slice are
        # one extra HBM pass each; only hit when batch*seq % pack != 0.
        x2 = jnp.pad(x2, ((0, P * pack - R), (0, 0)))
    xp = x2.reshape(P, pack * D)                    # free row-major repack

    eye = jnp.eye(pack, dtype=jnp.float32)
    w_big = jnp.kron(eye, w.T.astype(jnp.float32))              # (pack*D, pack*H)
    g = jnp.kron(eye, jnp.full((H, H), 1.0 / H, jnp.float32))   # (pack*H, pack*H)
    vecs = jnp.stack([jnp.tile(b.astype(jnp.float32), pack),
                      jnp.tile(gamma.astype(jnp.float32), pack),
                      jnp.tile(beta.astype(jnp.float32), pack)])  # (3, pack*H)

    out = _fused_embed_layernorm(xp, w_big, g, vecs, eps, tile_rows=tile_rows)
    out = out.reshape(P * pack, H)
    if P * pack != R:
        out = out[:R]
    return out.reshape(B, S, H)


# ---------------------------------------------------------------------------
# 'with_attention' branch:
#   embeddings = variable_embeddings[None, :, :] * x[:, :, None] -> LayerNorm
# Lane-dense: the output is computed as (B, S*H) (free reshape back), with the
# per-position table folded into a block matrix so emb = x @ M on the MXU.
# ---------------------------------------------------------------------------
def embeddings_with_attention(x, table, gamma, beta, eps, *, tile_rows=4096):
    B, S = x.shape
    H = table.shape[1]
    t = table.astype(jnp.float32)

    # M[s, s*H:(s+1)*H] = table[s];  (x @ M)[b, s*H+j] = x[b,s] * table[s,j]
    m = (jnp.eye(S, dtype=jnp.float32)[:, :, None] * t[None, :, :]).reshape(S, S * H)
    g = jnp.kron(jnp.eye(S, dtype=jnp.float32),
                 jnp.full((H, H), 1.0 / H, jnp.float32))         # (S*H, S*H)
    vecs = jnp.stack([jnp.zeros((S * H,), jnp.float32),          # no bias
                      jnp.tile(gamma.astype(jnp.float32), S),
                      jnp.tile(beta.astype(jnp.float32), S)])    # (3, S*H)

    out = _fused_embed_layernorm(x.astype(jnp.float32), m, g, vecs, eps,
                                 tile_rows=tile_rows)
    return out.reshape(B, S, H)


# ---------------------------------------------------------------------------
# Module wrapper with deterministic parameter init (matches __init__ shapes).
# ---------------------------------------------------------------------------
class GUTNetEmbeddings:
    """JAX/Pallas port of the PyTorch GUTNetEmbeddings forward pass."""

    def __init__(self, config: GUTNetConfig, key):
        self.config = config
        k1, k2, k3 = jax.random.split(key, 3)
        H, D = config.hidden_size, config.input_dim
        if config.model_type == "with_attention":
            # nn.Embedding(max_variables, hidden_size)
            self.variable_embeddings = jax.random.normal(
                k1, (config.max_variables, H), jnp.float32)
        # nn.Linear(input_dim, hidden_size): weight (H, D), bias (H,)
        self.linear_w = jax.random.normal(k2, (H, D), jnp.float32) * 0.1
        self.linear_b = jax.random.normal(k3, (H,), jnp.float32) * 0.1
        # nn.LayerNorm default init
        self.ln_gamma = jnp.ones((H,), jnp.float32)
        self.ln_beta = jnp.zeros((H,), jnp.float32)
        # TODO(synk): nn.Dropout is the inference-mode identity here (no RNG mask).

    def __call__(self, x):
        eps = self.config.layer_norm_eps
        if self.config.model_type == "with_attention":
            S = x.shape[1]
            assert S <= self.config.max_variables, "seq_length > max_variables"
            table = self.variable_embeddings[:S]      # embedding(arange(S))
            return embeddings_with_attention(
                x, table, self.ln_gamma, self.ln_beta, eps)
        return embeddings_linear(
            x, self.linear_w, self.linear_b, self.ln_gamma, self.ln_beta, eps)


# ---------------------------------------------------------------------------
# Pure-JAX references for validation.
# ---------------------------------------------------------------------------
def _ref_layernorm(emb, gamma, beta, eps):
    mean = jnp.mean(emb, axis=-1, keepdims=True)
    var = jnp.mean(jnp.square(emb - mean), axis=-1, keepdims=True)
    return (emb - mean) * jax.lax.rsqrt(var + eps) * gamma + beta


def _ref_attn(x, table, gamma, beta, eps):
    emb = table[None, :, :] * x[:, :, None]
    return _ref_layernorm(emb, gamma, beta, eps)


def _ref_linear(x, w, b, gamma, beta, eps):
    emb = jnp.einsum("bsd,hd->bsh", x, w,
                     precision=jax.lax.Precision.HIGHEST) + b
    return _ref_layernorm(emb, gamma, beta, eps)


if __name__ == "__main__":
    key = jax.random.PRNGKey(0)
    kp, kg, kb, kx1, kx2, kx3 = jax.random.split(key, 6)

    # --- with_attention branch: x is (batch=2, seq=8) scalars ---------------
    cfg_attn = GUTNetConfig(model_type="with_attention",
                            max_variables=16, input_dim=4, hidden_size=32)
    mod_attn = GUTNetEmbeddings(cfg_attn, kp)
    # exercise the affine LayerNorm params (torch default init is ones/zeros)
    mod_attn.ln_gamma = 1.0 + 0.1 * jax.random.normal(kg, (32,), jnp.float32)
    mod_attn.ln_beta = 0.1 * jax.random.normal(kb, (32,), jnp.float32)
    x_attn = jax.random.normal(kx1, (2, 8), jnp.float32)
    out_attn = jax.block_until_ready(mod_attn(x_attn))
    ref_attn = _ref_attn(x_attn, mod_attn.variable_embeddings[:8],
                         mod_attn.ln_gamma, mod_attn.ln_beta,
                         cfg_attn.layer_norm_eps)
    assert out_attn.shape == (2, 8, 32)
    assert jnp.allclose(out_attn, ref_attn, atol=1e-5, rtol=1e-5)

    # --- linear branch: x is (batch=2, seq=8, input_dim=4) ------------------
    cfg_lin = GUTNetConfig(model_type="no_attention",
                           max_variables=16, input_dim=4, hidden_size=32)
    mod_lin = GUTNetEmbeddings(cfg_lin, kp)
    mod_lin.ln_gamma = mod_attn.ln_gamma
    mod_lin.ln_beta = mod_attn.ln_beta
    x_lin = jax.random.normal(kx2, (2, 8, 4), jnp.float32)
    out_lin = jax.block_until_ready(mod_lin(x_lin))
    ref_lin = _ref_linear(x_lin, mod_lin.linear_w, mod_lin.linear_b,
                          mod_lin.ln_gamma, mod_lin.ln_beta,
                          cfg_lin.layer_norm_eps)
    assert out_lin.shape == (2, 8, 32)
    assert jnp.allclose(out_lin, ref_lin, atol=1e-5, rtol=1e-5)

    # --- linear branch, ragged rows (batch*seq not a multiple of pack) ------
    x_rag = jax.random.normal(kx3, (3, 7, 4), jnp.float32)
    out_rag = jax.block_until_ready(mod_lin(x_rag))
    ref_rag = _ref_linear(x_rag, mod_lin.linear_w, mod_lin.linear_b,
                          mod_lin.ln_gamma, mod_lin.ln_beta,
                          cfg_lin.layer_norm_eps)
    assert out_rag.shape == (3, 7, 32)
    assert jnp.allclose(out_rag, ref_rag, atol=1e-5, rtol=1e-5)

    print("KERNEL_OK")
</pallas_src>

<mosaic_0001>
module attributes {stable_mosaic.version = 11 : i64} {
  func.func @_fused_embed_ln_kernel(%arg0: i32, %arg1: memref<2x8xf32, #tpu.memory_space<vmem>>, %arg2: memref<8x256xf32, #tpu.memory_space<vmem>>, %arg3: memref<256x256xf32, #tpu.memory_space<vmem>>, %arg4: memref<3x256xf32, #tpu.memory_space<vmem>>, %arg5: memref<2x256xf32, #tpu.memory_space<vmem>>) attributes {dimension_semantics = [#tpu.dimension_semantics<parallel>], iteration_bounds = array<i64: 1>, scalar_prefetch = 0 : i64, scratch_operands = 0 : i64, tpu.core_type = #tpu.core_type<tc>, window_params = [{transform_indices = @transform_0, window_bounds = array<i64: 2, 8>}, {pipeline_mode = #tpu.pipeline_mode<synchronous>, transform_indices = @transform_1, window_bounds = array<i64: 8, 256>}, {pipeline_mode = #tpu.pipeline_mode<synchronous>, transform_indices = @transform_2, window_bounds = array<i64: 256, 256>}, {pipeline_mode = #tpu.pipeline_mode<synchronous>, transform_indices = @transform_3, window_bounds = array<i64: 3, 256>}, {transform_indices = @transform_4, window_bounds = array<i64: 2, 256>}]} {
    %c0 = arith.constant 0 : index
    %c0_0 = arith.constant 0 : index
    %0 = vector.load %arg1[%c0, %c0_0] : memref<2x8xf32, #tpu.memory_space<vmem>>, vector<2x8xf32>
    %c0_1 = arith.constant 0 : index
    %c0_2 = arith.constant 0 : index
    %1 = vector.load %arg2[%c0_1, %c0_2] : memref<8x256xf32, #tpu.memory_space<vmem>>, vector<8x256xf32>
    %cst = arith.constant dense<0.000000e+00> : vector<2x256xf32>
    %2 = tpu.matmul %0, %1, %cst {dimension_numbers = #tpu.dot_dimension_numbers<[1], [0], [0], [1], [0, 0, 1, 1], [], []>, precision = #tpu.contract_precision<fp32>} : vector<2x8xf32>, vector<8x256xf32>, vector<2x256xf32> -> vector<2x256xf32>
    %c0_3 = arith.constant 0 : index
    %c0_4 = arith.constant 0 : index
    %3 = vector.load %arg4[%c0_3, %c0_4] : memref<3x256xf32, #tpu.memory_space<vmem>>, vector<1x256xf32>
    %4 = vector.broadcast %3 : vector<1x256xf32> to vector<2x256xf32>
    %5 = arith.addf %2, %4 : vector<2x256xf32>
    %c0_5 = arith.constant 0 : index
    %c0_6 = arith.constant 0 : index
    %6 = vector.load %arg3[%c0_5, %c0_6] : memref<256x256xf32, #tpu.memory_space<vmem>>, vector<256x256xf32>
    %cst_7 = arith.constant dense<0.000000e+00> : vector<2x256xf32>
    %7 = tpu.matmul %5, %6, %cst_7 {dimension_numbers = #tpu.dot_dimension_numbers<[1], [0], [0], [1], [0, 0, 1, 1], [], []>, precision = #tpu.contract_precision<fp32>} : vector<2x256xf32>, vector<256x256xf32>, vector<2x256xf32> -> vector<2x256xf32>
    %8 = arith.subf %5, %7 : vector<2x256xf32>
    %9 = arith.mulf %8, %8 : vector<2x256xf32>
    %c0_8 = arith.constant 0 : index
    %c0_9 = arith.constant 0 : index
    %10 = vector.load %arg3[%c0_8, %c0_9] : memref<256x256xf32, #tpu.memory_space<vmem>>, vector<256x256xf32>
    %cst_10 = arith.constant dense<0.000000e+00> : vector<2x256xf32>
    %11 = tpu.matmul %9, %10, %cst_10 {dimension_numbers = #tpu.dot_dimension_numbers<[1], [0], [0], [1], [0, 0, 1, 1], [], []>, precision = #tpu.contract_precision<fp32>} : vector<2x256xf32>, vector<256x256xf32>, vector<2x256xf32> -> vector<2x256xf32>
    %cst_11 = arith.constant 9.99999996E-13 : f32
    %12 = vector.broadcast %cst_11 : f32 to vector<2x256xf32>
    %13 = arith.addf %11, %12 : vector<2x256xf32>
    %14 = math.rsqrt %13 : vector<2x256xf32>
    %15 = arith.mulf %8, %14 : vector<2x256xf32>
    %c1 = arith.constant 1 : index
    %c0_12 = arith.constant 0 : index
    %16 = vector.load %arg4[%c1, %c0_12] : memref<3x256xf32, #tpu.memory_space<vmem>>, vector<1x256xf32>
    %17 = vector.broadcast %16 : vector<1x256xf32> to vector<2x256xf32>
    %18 = arith.mulf %15, %17 : vector<2x256xf32>
    %c2 = arith.constant 2 : index
    %c0_13 = arith.constant 0 : index
    %19 = vector.load %arg4[%c2, %c0_13] : memref<3x256xf32, #tpu.memory_space<vmem>>, vector<1x256xf32>
    %20 = vector.broadcast %19 : vector<1x256xf32> to vector<2x256xf32>
    %21 = arith.addf %18, %20 : vector<2x256xf32>
    %c0_14 = arith.constant 0 : index
    %c0_15 = arith.constant 0 : index
    %22 = vector.load %arg5[%c0_14, %c0_15] : memref<2x256xf32, #tpu.memory_space<vmem>>, vector<2x256xf32>
    tpu.vector_store %arg5[%c0_14, %c0_15], %21 {strides = array<i32>} : memref<2x256xf32, #tpu.memory_space<vmem>>, vector<2x256xf32>,
    return
  }
  func.func @transform_0(%arg0: i32) -> (i32, i32) {
    %c0_i32 = arith.constant 0 : i32
    %c0_i32_0 = arith.constant 0 : i32
    return %arg0, %c0_i32 : i32, i32
  }
  func.func @transform_1(%arg0: i32) -> (i32, i32) {
    %c0_i32 = arith.constant 0 : i32
    %c0_i32_0 = arith.constant 0 : i32
    %c0_i32_1 = arith.constant 0 : i32
    return %c0_i32, %c0_i32_0 : i32, i32
  }
  func.func @transform_2(%arg0: i32) -> (i32, i32) {
    %c0_i32 = arith.constant 0 : i32
    %c0_i32_0 = arith.constant 0 : i32
    %c0_i32_1 = arith.constant 0 : i32
    return %c0_i32, %c0_i32_0 : i32, i32
  }
  func.func @transform_3(%arg0: i32) -> (i32, i32) {
    %c0_i32 = arith.constant 0 : i32
    %c0_i32_0 = arith.constant 0 : i32
    %c0_i32_1 = arith.constant 0 : i32
    return %c0_i32, %c0_i32_0 : i32, i32
  }
  func.func @transform_4(%arg0: i32) -> (i32, i32) {
    %c0_i32 = arith.constant 0 : i32
    %c0_i32_0 = arith.constant 0 : i32
    return %arg0, %c0_i32 : i32, i32
  }
}

</mosaic_0001>

<llo_original>
// kernel: tpu_custom_call.1
$region0: #{tpu_custom_call.1}
  #allocation0 [shape = 'u32[]', space=smem, size = 0x4, offset = 0x4, fixed_abs, tag = 'smem constant byte address 0x4 - core index']
  #allocation1 [shape = 'u32[72,128]{1,0:T(1,128)}', space=vmem, size = 0x9000, scoped, tag = 'internal scratch']
  %s0 = inlined_call_operand.hbm [shape: f32[2,8], index: 0, kind: input, shape index: {}]
  %s1 = inlined_call_operand.hbm [shape: f32[8,256], index: 1, kind: input, shape index: {}]
  %s2 = inlined_call_operand.hbm [shape: f32[256,256], index: 2, kind: input, shape index: {}]
  %s3 = inlined_call_operand.hbm [shape: f32[3,256], index: 3, kind: input, shape index: {}]
  %s4 = inlined_call_operand.hbm [shape: f32[2,256], index: 4, kind: output, shape index: {}]
  %s5 = sld [smem:[#allocation0]]
  $region42: #{tpu_custom_call.1} parent=0
    _
  %s7 = ssub.s32 1, %s5
  %s8 = scalar_select 0, %s7, %s5
  $region1: #{tpu_custom_call.1} parent=0
    #allocation2 [shape = 'u8[1024]{0}', space=vmem, size = 0x400, scoped, tag = 'input window, operand 0, single buffered']
    #allocation3 [shape = 's32[1]{0}', space=sflag, size = 0x4, scoped, tag = 'scoped memory for tpu_custom_call.1']
    #allocation4 [shape = 's32[1]{0}', space=sflag, size = 0x4, scoped, tag = 'scoped memory for tpu_custom_call.1']
    #allocation5 [shape = 'u8[8192]{0}', space=vmem, size = 0x2000, scoped, tag = 'input window, operand 1, single buffered']
    #allocation6 [shape = 's32[1]{0}', space=sflag, size = 0x4, scoped, tag = 'scoped memory for tpu_custom_call.1']
    #allocation7 [shape = 'u8[262144]{0}', space=vmem, size = 0x40000, scoped, tag = 'input window, operand 2, single buffered']
    #allocation8 [shape = 'u8[4096]{0}', space=vmem, size = 0x1000, scoped, tag = 'input window, operand 3, single buffered']
    #allocation9 [shape = 's32[1]{0}', space=sflag, size = 0x4, scoped, tag = 'scoped memory for tpu_custom_call.1']
    #allocation10 [shape = 'u8[2048]{0}', space=vmem, size = 0x800, scoped, tag = 'output window, operand 0, single buffered']
    %9 = vsyncpa [#allocation3], 0
    %10 = vsyncpa [#allocation6], 0
    %11 = vsyncpa [#allocation9], 0
    %12 = vsyncpa [#allocation4], 0
    // Predicated region
    $region2: #{tpu_custom_call.1} parent=1 // pred_check
      _
    $region3: #{tpu_custom_call.1} parent=1 // pred_check_branch
      %14 = sbr.rel (0) target = $region5
    $region4: #{tpu_custom_call.1} parent=1 // pred_region
      %16 = vsyncadd [#allocation3], 0
      %s18 = sshll.u32 %s0, 4
      %s19 = int_to_ptr.hbm [resolvable:$true] %s18
      %s20 = sshll.u32 [#allocation2], 4
      %s21 = int_to_ptr.vmem [resolvable:$true] %s20
      %23 = dma.hbm_to_vmem [thread:$0]  %s19, 32, %s21, [#allocation3]
    $region5: #{tpu_custom_call.1} parent=1 // pred_fallthru
      _
    // Predicated region
    $region6: #{tpu_custom_call.1} parent=1 // pred_check
      _
    $region7: #{tpu_custom_call.1} parent=1 // pred_check_branch
      %25 = sbr.rel (0) target = $region9
    $region8: #{tpu_custom_call.1} parent=1 // pred_region
      %27 = vsyncadd [#allocation6], 0
      %s29 = sshll.u32 %s1, 4
      %s30 = int_to_ptr.hbm [resolvable:$true] %s29
      %s31 = sshll.u32 [#allocation5], 4
      %s32 = int_to_ptr.vmem [resolvable:$true] %s31
      %34 = dma.hbm_to_vmem [thread:$0]  %s30, 256, %s32, [#allocation6]
    $region9: #{tpu_custom_call.1} parent=1 // pred_fallthru
      _
    // Predicated region
    $region10: #{tpu_custom_call.1} parent=1 // pred_check
      _
    $region11: #{tpu_custom_call.1} parent=1 // pred_check_branch
      %36 = sbr.rel (0) target = $region13
    $region12: #{tpu_custom_call.1} parent=1 // pred_region
      %38 = vsyncadd [#allocation6], 0
      %s39 = sshll.u32 %s2, 4
      %s40 = int_to_ptr.hbm [resolvable:$true] %s39
      %s41 = sshll.u32 [#allocation7], 4
      %s42 = int_to_ptr.vmem [resolvable:$true] %s41
      %47 = dma.hbm_to_vmem [thread:$0]  %s40, 8192, %s42, [#allocation6], 256, 256, 16
    $region13: #{tpu_custom_call.1} parent=1 // pred_fallthru
      _
    // Predicated region
    $region14: #{tpu_custom_call.1} parent=1 // pred_check
      _
    $region15: #{tpu_custom_call.1} parent=1 // pred_check_branch
      %49 = sbr.rel (0) target = $region17
    $region16: #{tpu_custom_call.1} parent=1 // pred_region
      %51 = vsyncadd [#allocation9], 0
      %s53 = sshll.u32 %s3, 4
      %s54 = int_to_ptr.hbm [resolvable:$true] %s53
      %s55 = sshll.u32 [#allocation8], 4
      %s56 = int_to_ptr.vmem [resolvable:$true] %s55
      %58 = dma.hbm_to_vmem [thread:$0]  %s54, 128, %s56, [#allocation9]
    $region17: #{tpu_custom_call.1} parent=1 // pred_fallthru
      _
    // Predicated region
    $region18: #{tpu_custom_call.1} parent=1 // pred_check
      _
    $region19: #{tpu_custom_call.1} parent=1 // pred_check_branch
      %60 = sbr.rel (0) target = $region21
    $region20: #{tpu_custom_call.1} parent=1 // pred_region
      %62 = dma.done [#allocation3], 32
    $region21: #{tpu_custom_call.1} parent=1 // pred_fallthru
      _
    // Predicated region
    $region22: #{tpu_custom_call.1} parent=1 // pred_check
      _
    $region23: #{tpu_custom_call.1} parent=1 // pred_check_branch
      %64 = sbr.rel (0) target = $region25
    $region24: #{tpu_custom_call.1} parent=1 // pred_region
      %66 = dma.done [#allocation6], 256
    $region25: #{tpu_custom_call.1} parent=1 // pred_fallthru
      _
    // Predicated region
    $region26: #{tpu_custom_call.1} parent=1 // pred_check
      _
    $region27: #{tpu_custom_call.1} parent=1 // pred_check_branch
      %68 = sbr.rel (0) target = $region29
    $region28: #{tpu_custom_call.1} parent=1 // pred_region
      %70 = dma.done [#allocation6], 8192
    $region29: #{tpu_custom_call.1} parent=1 // pred_fallthru
      _
    // Predicated region
    $region30: #{tpu_custom_call.1} parent=1 // pred_check
      _
    $region31: #{tpu_custom_call.1} parent=1 // pred_check_branch
      %72 = sbr.rel (0) target = $region33
    $region32: #{tpu_custom_call.1} parent=1 // pred_region
      %74 = dma.done [#allocation9], 128
    $region33: #{tpu_custom_call.1} parent=1 // pred_fallthru
      _
    %v75 = vld [vmem:[#allocation2] sm:$0x3]
    %v76 = vld [vmem:[#allocation5] sm:$0xff]
    %v77 = vld [vmem:[#allocation5 + $0x8] sm:$0xff]
    %v78 = vld [vmem:[#allocation8] ss:$4 sm:$0x3]
    %v80 = vperm.slane %v78, 0
    %v81 = vperm.slane %v78, 1
    %vm84 = vcmask 64512
    %v86 = vsel %vm84, %v75, 0
    %88 = vmatpush.msra.mxu0 0.0
    %89 = vmatpush.msra.mxu0 0.0
    %90 = vmatpush.msra.mxu0 0.0
    %91 = vmatpush.msra.mxu0 0.0
    %92 = vmatpush.msra.mxu0 0.0
    %93 = vmatpush.msra.mxu0 0.0
    %94 = vmatpush.msra.mxu0 0.0
    %95 = vmatpush.msra.mxu0 0.0
    %96 = vmatpush.msra.mxu0 0.0
    %97 = vmatpush.msra.mxu0 0.0
    %98 = vmatpush.msra.mxu0 0.0
    %99 = vmatpush.msra.mxu0 0.0
    %100 = vmatpush.msra.mxu0 0.0
    %101 = vmatpush.msra.mxu0 0.0
    %102 = vmatpush.msra.mxu0 0.0
    %v103 = vand.u32 %v76, 4294901760
    %104 = vmatpush.msra.mxu0 %v103
    %v105 = vand.u32 %v86, 4294901760
    %v106 = vsub.f32 %v86, %v105
    %v107 = vand.u32 %v106, 4294901760
    %v108 = vsub.f32 %v106, %v107
    %v109 = vand.u32 %v108, 4294901760
    %110 = vmatmul.f32.gmra.mxu0 %v109
    %v111 = vpop.f32.mrf.mxu0
    %v112 = vadd.f32 %v80, %v111
    %113 = vdwg.mxu0
    %114 = vmatpush.msra.mxu0 0.0
    %115 = vmatpush.msra.mxu0 0.0
    %116 = vmatpush.msra.mxu0 0.0
    %117 = vmatpush.msra.mxu0 0.0
    %118 = vmatpush.msra.mxu0 0.0
    %119 = vmatpush.msra.mxu0 0.0
    %120 = vmatpush.msra.mxu0 0.0
    %121 = vmatpush.msra.mxu0 0.0
    %122 = vmatpush.msra.mxu0 0.0
    %123 = vmatpush.msra.mxu0 0.0
    %124 = vmatpush.msra.mxu0 0.0
    %125 = vmatpush.msra.mxu0 0.0
    %126 = vmatpush.msra.mxu0 0.0
    %127 = vmatpush.msra.mxu0 0.0
    %128 = vmatpush.msra.mxu0 0.0
    %v129 = vand.u32 %v76, 4294901760
    %v130 = vsub.f32 %v76, %v129
    %v131 = vand.u32 %v130, 4294901760
    %v132 = vsub.f32 %v130, %v131
    %v133 = vand.u32 %v132, 4294901760
    %134 = vmatpush.msra.mxu0 %v133
    %v135 = vand.u32 %v86, 4294901760
    %136 = vmatmul.f32.gmra.mxu0 %v135
    %v137 = vpop.f32.mrf.mxu0
    %v138 = vadd.f32 %v112, %v137
    %139 = vdwg.mxu0
    %140 = vmatpush.msra.mxu0 0.0
    %141 = vmatpush.msra.mxu0 0.0
    %142 = vmatpush.msra.mxu0 0.0
    %143 = vmatpush.msra.mxu0 0.0
    %144 = vmatpush.msra.mxu0 0.0
    %145 = vmatpush.msra.mxu0 0.0
    %146 = vmatpush.msra.mxu0 0.0
    %147 = vmatpush.msra.mxu0 0.0
    %148 = vmatpush.msra.mxu0 0.0
    %149 = vmatpush.msra.mxu0 0.0
    %150 = vmatpush.msra.mxu0 0.0
    %151 = vmatpush.msra.mxu0 0.0
    %152 = vmatpush.msra.mxu0 0.0
    %153 = vmatpush.msra.mxu0 0.0
    %154 = vmatpush.msra.mxu0 0.0
    %v155 = vand.u32 %v76, 4294901760
    %v156 = vsub.f32 %v76, %v155
    %157 = vmatpush.msra.mxu0 %v156
    %v158 = vand.u32 %v86, 4294901760
    %v159 = vsub.f32 %v86, %v158
    %160 = vmatmul.f32.gmra.mxu0 %v159
    %v161 = vpop.f32.mrf.mxu0
    %v162 = vadd.f32 %v138, %v161
    %163 = vdwg.mxu0
    %164 = vmatpush.msra.mxu0 0.0
    %165 = vmatpush.msra.mxu0 0.0
    %166 = vmatpush.msra.mxu0 0.0
    %167 = vmatpush.msra.mxu0 0.0
    %168 = vmatpush.msra.mxu0 0.0
    %169 = vmatpush.msra.mxu0 0.0
    %170 = vmatpush.msra.mxu0 0.0
    %171 = vmatpush.msra.mxu0 0.0
    %172 = vmatpush.msra.mxu0 0.0
    %173 = vmatpush.msra.mxu0 0.0
    %174 = vmatpush.msra.mxu0 0.0
    %175 = vmatpush.msra.mxu0 0.0
    %176 = vmatpush.msra.mxu0 0.0
    %177 = vmatpush.msra.mxu0 0.0
    %178 = vmatpush.msra.mxu0 0.0
    %v179 = vand.u32 %v76, 4294901760
    %180 = vmatpush.msra.mxu0 %v179
    %v181 = vand.u32 %v86, 4294901760
    %v182 = vsub.f32 %v86, %v181
    %v183 = vand.u32 %v182, 4294901760
    %184 = vmatmul.f32.gmra.mxu0 %v183
    %v185 = vpop.f32.mrf.mxu0
    %v186 = vadd.f32 %v162, %v185
    %187 = vdwg.mxu0
    %188 = vmatpush.msra.mxu0 0.0
    %189 = vmatpush.msra.mxu0 0.0
    %190 = vmatpush.msra.mxu0 0.0
    %191 = vmatpush.msra.mxu0 0.0
    %192 = vmatpush.msra.mxu0 0.0
    %193 = vmatpush.msra.mxu0 0.0
    %194 = vmatpush.msra.mxu0 0.0
    %195 = vmatpush.msra.mxu0 0.0
    %196 = vmatpush.msra.mxu0 0.0
    %197 = vmatpush.msra.mxu0 0.0
    %198 = vmatpush.msra.mxu0 0.0
    %199 = vmatpush.msra.mxu0 0.0
    %200 = vmatpush.msra.mxu0 0.0
    %201 = vmatpush.msra.mxu0 0.0
    %202 = vmatpush.msra.mxu0 0.0
    %v203 = vand.u32 %v76, 4294901760
    %v204 = vsub.f32 %v76, %v203
    %v205 = vand.u32 %v204, 4294901760
    %206 = vmatpush.msra.mxu0 %v205
    %v207 = vand.u32 %v86, 4294901760
    %208 = vmatmul.f32.gmra.mxu0 %v207
    %v209 = vpop.f32.mrf.mxu0
    %v210 = vadd.f32 %v186, %v209
    %211 = vdwg.mxu0
    %212 = vmatpush.msra.mxu0 0.0
    %213 = vmatpush.msra.mxu0 0.0
    %214 = vmatpush.msra.mxu0 0.0
    %215 = vmatpush.msra.mxu0 0.0
    %216 = vmatpush.msra.mxu0 0.0
    %217 = vmatpush.msra.mxu0 0.0
    %218 = vmatpush.msra.mxu0 0.0
    %219 = vmatpush.msra.mxu0 0.0
    %220 = vmatpush.msra.mxu0 0.0
    %221 = vmatpush.msra.mxu0 0.0
    %222 = vmatpush.msra.mxu0 0.0
    %223 = vmatpush.msra.mxu0 0.0
    %224 = vmatpush.msra.mxu0 0.0
    %225 = vmatpush.msra.mxu0 0.0
    %226 = vmatpush.msra.mxu0 0.0
    %v227 = vand.u32 %v76, 4294901760
    %228 = vmatpush.msra.mxu0 %v227
    %v229 = vand.u32 %v86, 4294901760
    %230 = vmatmul.f32.gmra.mxu0 %v229
    %v231 = vpop.f32.mrf.mxu0
    %v232 = vadd.f32 %v210, %v231
    %233 = vdwg.mxu0
    %234 = vmatpush.msra.mxu0 0.0
    %235 = vmatpush.msra.mxu0 0.0
    %236 = vmatpush.msra.mxu0 0.0
    %237 = vmatpush.msra.mxu0 0.0
    %238 = vmatpush.msra.mxu0 0.0
    %239 = vmatpush.msra.mxu0 0.0
    %240 = vmatpush.msra.mxu0 0.0
    %241 = vmatpush.msra.mxu0 0.0
    %242 = vmatpush.msra.mxu0 0.0
    %243 = vmatpush.msra.mxu0 0.0
    %244 = vmatpush.msra.mxu0 0.0
    %245 = vmatpush.msra.mxu0 0.0
    %246 = vmatpush.msra.mxu0 0.0
    %247 = vmatpush.msra.mxu0 0.0
    %248 = vmatpush.msra.mxu0 0.0
    %v249 = vand.u32 %v77, 4294901760
    %250 = vmatpush.msra.mxu0 %v249
    %v251 = vand.u32 %v86, 4294901760
    %v252 = vsub.f32 %v86, %v251
    %v253 = vand.u32 %v252, 4294901760
    %v254 = vsub.f32 %v252, %v253
    %v255 = vand.u32 %v254, 4294901760
    %256 = vmatmul.f32.gmra.mxu0 %v255
    %v257 = vpop.f32.mrf.mxu0
    %v258 = vadd.f32 %v81, %v257
    %259 = vdwg.mxu0
    %260 = vmatpush.msra.mxu0 0.0
    %261 = vmatpush.msra.mxu0 0.0
    %262 = vmatpush.msra.mxu0 0.0
    %263 = vmatpush.msra.mxu0 0.0
    %264 = vmatpush.msra.mxu0 0.0
    %265 = vmatpush.msra.mxu0 0.0
    %266 = vmatpush.msra.mxu0 0.0
    %267 = vmatpush.msra.mxu0 0.0
    %268 = vmatpush.msra.mxu0 0.0
    %269 = vmatpush.msra.mxu0 0.0
    %270 = vmatpush.msra.mxu0 0.0
    %271 = vmatpush.msra.mxu0 0.0
    %272 = vmatpush.msra.mxu0 0.0
    %273 = vmatpush.msra.mxu0 0.0
    %274 = vmatpush.msra.mxu0 0.0
    %v275 = vand.u32 %v77, 4294901760
    %v276 = vsub.f32 %v77, %v275
    %v277 = vand.u32 %v276, 4294901760
    %v278 = vsub.f32 %v276, %v277
    %v279 = vand.u32 %v278, 4294901760
    %280 = vmatpush.msra.mxu0 %v279
    %v281 = vand.u32 %v86, 4294901760
    %282 = vmatmul.f32.gmra.mxu0 %v281
    %v283 = vpop.f32.mrf.mxu0
    %v284 = vadd.f32 %v258, %v283
    %285 = vdwg.mxu0
    %286 = vmatpush.msra.mxu0 0.0
    %287 = vmatpush.msra.mxu0 0.0
    %288 = vmatpush.msra.mxu0 0.0
    %289 = vmatpush.msra.mxu0 0.0
    %290 = vmatpush.msra.mxu0 0.0
    %291 = vmatpush.msra.mxu0 0.0
    %292 = vmatpush.msra.mxu0 0.0
    %293 = vmatpush.msra.mxu0 0.0
    %294 = vmatpush.msra.mxu0 0.0
    %295 = vmatpush.msra.mxu0 0.0
    %296 = vmatpush.msra.mxu0 0.0
    %297 = vmatpush.msra.mxu0 0.0
    %298 = vmatpush.msra.mxu0 0.0
    %299 = vmatpush.msra.mxu0 0.0
    %300 = vmatpush.msra.mxu0 0.0
    %v301 = vand.u32 %v77, 4294901760
    %v302 = vsub.f32 %v77, %v301
    %303 = vmatpush.msra.mxu0 %v302
    %v304 = vand.u32 %v86, 4294901760
    %v305 = vsub.f32 %v86, %v304
    %306 = vmatmul.f32.gmra.mxu0 %v305
    %v307 = vpop.f32.mrf.mxu0
    %v308 = vadd.f32 %v284, %v307
    %309 = vdwg.mxu0
    %310 = vmatpush.msra.mxu0 0.0
    %311 = vmatpush.msra.mxu0 0.0
    %312 = vmatpush.msra.mxu0 0.0
    %313 = vmatpush.msra.mxu0 0.0
    %314 = vmatpush.msra.mxu0 0.0
    %315 = vmatpush.msra.mxu0 0.0
    %316 = vmatpush.msra.mxu0 0.0
    %317 = vmatpush.msra.mxu0 0.0
    %318 = vmatpush.msra.mxu0 0.0
    %319 = vmatpush.msra.mxu0 0.0
    %320 = vmatpush.msra.mxu0 0.0
    %321 = vmatpush.msra.mxu0 0.0
    %322 = vmatpush.msra.mxu0 0.0
    %323 = vmatpush.msra.mxu0 0.0
    %324 = vmatpush.msra.mxu0 0.0
    %v325 = vand.u32 %v77, 4294901760
    %326 = vmatpush.msra.mxu0 %v325
    %v327 = vand.u32 %v86, 4294901760
    %v328 = vsub.f32 %v86, %v327
    %v329 = vand.u32 %v328, 4294901760
    %330 = vmatmul.f32.gmra.mxu0 %v329
    %v331 = vpop.f32.mrf.mxu0
    %v332 = vadd.f32 %v308, %v331
    %333 = vdwg.mxu0
    %334 = vmatpush.msra.mxu0 0.0
    %335 = vmatpush.msra.mxu0 0.0
    %336 = vmatpush.msra.mxu0 0.0
    %337 = vmatpush.msra.mxu0 0.0
    %338 = vmatpush.msra.mxu0 0.0
    %339 = vmatpush.msra.mxu0 0.0
    %340 = vmatpush.msra.mxu0 0.0
    %341 = vmatpush.msra.mxu0 0.0
    %342 = vmatpush.msra.mxu0 0.0
    %343 = vmatpush.msra.mxu0 0.0
    %344 = vmatpush.msra.mxu0 0.0
    %345 = vmatpush.msra.mxu0 0.0
    %346 = vmatpush.msra.mxu0 0.0
    %347 = vmatpush.msra.mxu0 0.0
    %348 = vmatpush.msra.mxu0 0.0
    %v349 = vand.u32 %v77, 4294901760
    %v350 = vsub.f32 %v77, %v349
    %v351 = vand.u32 %v350, 4294901760
    %352 = vmatpush.msra.mxu0 %v351
    %v353 = vand.u32 %v86, 4294901760
    %354 = vmatmul.f32.gmra.mxu0 %v353
    %v355 = vpop.f32.mrf.mxu0
    %v356 = vadd.f32 %v332, %v355
    %357 = vdwg.mxu0
    %358 = vmatpush.msra.mxu0 0.0
    %359 = vmatpush.msra.mxu0 0.0
    %360 = vmatpush.msra.mxu0 0.0
    %361 = vmatpush.msra.mxu0 0.0
    %362 = vmatpush.msra.mxu0 0.0
    %363 = vmatpush.msra.mxu0 0.0
    %364 = vmatpush.msra.mxu0 0.0
    %365 = vmatpush.msra.mxu0 0.0
    %366 = vmatpush.msra.mxu0 0.0
    %367 = vmatpush.msra.mxu0 0.0
    %368 = vmatpush.msra.mxu0 0.0
    %369 = vmatpush.msra.mxu0 0.0
    %370 = vmatpush.msra.mxu0 0.0
    %371 = vmatpush.msra.mxu0 0.0
    %372 = vmatpush.msra.mxu0 0.0
    %v373 = vand.u32 %v77, 4294901760
    %374 = vmatpush.msra.mxu0 %v373
    %v375 = vand.u32 %v86, 4294901760
    %376 = vmatmul.f32.gmra.mxu0 %v375
    %v377 = vpop.f32.mrf.mxu0
    %v378 = vadd.f32 %v356, %v377
    %379 = vdwg.mxu0
    %v380 = vld [vmem:[#allocation7] sm:$0xff]
    %v381 = vld [vmem:[#allocation7 + $0x8] sm:$0xff]
    %v382 = vld [vmem:[#allocation7 + $0x10] sm:$0xff]
    %v383 = vld [vmem:[#allocation7 + $0x18] sm:$0xff]
    %v384 = vld [vmem:[#allocation7 + $0x20] sm:$0xff]
    %v385 = vld [vmem:[#allocation7 + $0x28] sm:$0xff]
    %v386 = vld [vmem:[#allocation7 + $0x30] sm:$0xff]
    %v387 = vld [vmem:[#allocation7 + $0x38] sm:$0xff]
    %v388 = vld [vmem:[#allocation7 + $0x40] sm:$0xff]
    %v389 = vld [vmem:[#allocation7 + $0x48] sm:$0xff]
    %v390 = vld [vmem:[#allocation7 + $0x50] sm:$0xff]
    %v391 = vld [vmem:[#allocation7 + $0x58] sm:$0xff]
    %v392 = vld [vmem:[#allocation7 + $0x60] sm:$0xff]
    %v393 = vld [vmem:[#allocation7 + $0x68] sm:$0xff]
    %v394 = vld [vmem:[#allocation7 + $0x70] sm:$0xff]
    %v395 = vld [vmem:[#allocation7 + $0x78] sm:$0xff]
    %v396 = vld [vmem:[#allocation7 + $0x80] sm:$0xff]
    %v397 = vld [vmem:[#allocation7 + $0x88] sm:$0xff]
    %v398 = vld [vmem:[#allocation7 + $0x90] sm:$0xff]
    %v399 = vld [vmem:[#allocation7 + $0x98] sm:$0xff]
    %v400 = vld [vmem:[#allocation7 + $0xa0] sm:$0xff]
    %v401 = vld [vmem:[#allocation7 + $0xa8] sm:$0xff]
    %v402 = vld [vmem:[#allocation7 + $0xb0] sm:$0xff]
    %v403 = vld [vmem:[#allocation7 + $0xb8] sm:$0xff]
    %v404 = vld [vmem:[#allocation7 + $0xc0] sm:$0xff]
    %v405 = vld [vmem:[#allocation7 + $0xc8] sm:$0xff]
    %v406 = vld [vmem:[#allocation7 + $0xd0] sm:$0xff]
    %v407 = vld [vmem:[#allocation7 + $0xd8] sm:$0xff]
    %v408 = vld [vmem:[#allocation7 + $0xe0] sm:$0xff]
    %v409 = vld [vmem:[#allocation7 + $0xe8] sm:$0xff]
    %v410 = vld [vmem:[#allocation7 + $0xf0] sm:$0xff]
    %v411 = vld [vmem:[#allocation7 + $0xf8] sm:$0xff]
    %v412 = vld [vmem:[#allocation7 + $0x100] sm:$0xff]
    %v413 = vld [vmem:[#allocation7 + $0x108] sm:$0xff]
    %v414 = vld [vmem:[#allocation7 + $0x110] sm:$0xff]
    %v415 = vld [vmem:[#allocation7 + $0x118] sm:$0xff]
    %v416 = vld [vmem:[#allocation7 + $0x120] sm:$0xff]
    %v417 = vld [vmem:[#allocation7 + $0x128] sm:$0xff]
    %v418 = vld [vmem:[#allocation7 + $0x130] sm:$0xff]
    %v419 = vld [vmem:[#allocation7 + $0x138] sm:$0xff]
    %v420 = vld [vmem:[#allocation7 + $0x140] sm:$0xff]
    %v421 = vld [vmem:[#allocation7 + $0x148] sm:$0xff]
    %v422 = vld [vmem:[#allocation7 + $0x150] sm:$0xff]
    %v423 = vld [vmem:[#allocation7 + $0x158] sm:$0xff]
    %v424 = vld [vmem:[#allocation7 + $0x160] sm:$0xff]
    %v425 = vld [vmem:[#allocation7 + $0x168] sm:$0xff]
    %v426 = vld [vmem:[#allocation7 + $0x170] sm:$0xff]
    %v427 = vld [vmem:[#allocation7 + $0x178] sm:$0xff]
    %v428 = vld [vmem:[#allocation7 + $0x180] sm:$0xff]
    %v429 = vld [vmem:[#allocation7 + $0x188] sm:$0xff]
    %v430 = vld [vmem:[#allocation7 + $0x190] sm:$0xff]
    %v431 = vld [vmem:[#allocation7 + $0x198] sm:$0xff]
    %v432 = vld [vmem:[#allocation7 + $0x1a0] sm:$0xff]
    %v433 = vld [vmem:[#allocation7 + $0x1a8] sm:$0xff]
    %v434 = vld [vmem:[#allocation7 + $0x1b0] sm:$0xff]
    %v435 = vld [vmem:[#allocation7 + $0x1b8] sm:$0xff]
    %v436 = vld [vmem:[#allocation7 + $0x1c0] sm:$0xff]
    %v437 = vld [vmem:[#allocation7 + $0x1c8] sm:$0xff]
    %v438 = vld [vmem:[#allocation7 + $0x1d0] sm:$0xff]
    %v439 = vld [vmem:[#allocation7 + $0x1d8] sm:$0xff]
    %v440 = vld [vmem:[#allocation7 + $0x1e0] sm:$0xff]
    %v441 = vld [vmem:[#allocation7 + $0x1e8] sm:$0xff]
    %v442 = vld [vmem:[#allocation7 + $0x1f0] sm:$0xff]
    %v443 = vld [vmem:[#allocation7 + $0x1f8] sm:$0xff]
    %v444 = vand.u32 %v410, 4294901760
    %445 = vmatpush.msra.mxu0 %v444
    %v446 = vand.u32 %v408, 4294901760
    %447 = vmatpush.msra.mxu0 %v446
    %v448 = vand.u32 %v406, 4294901760
    %449 = vmatpush.msra.mxu0 %v448
    %v450 = vand.u32 %v404, 4294901760
    %451 = vmatpush.msra.mxu0 %v450
    %v452 = vand.u32 %v402, 4294901760
    %453 = vmatpush.msra.mxu0 %v452
    %v454 = vand.u32 %v400, 4294901760
    %455 = vmatpush.msra.mxu0 %v454
    %v456 = vand.u32 %v398, 4294901760
    %457 = vmatpush.msra.mxu0 %v456
    %v458 = vand.u32 %v396, 4294901760
    %459 = vmatpush.msra.mxu0 %v458
    %v460 = vand.u32 %v394, 4294901760
    %461 = vmatpush.msra.mxu0 %v460
    %v462 = vand.u32 %v392, 4294901760
    %463 = vmatpush.msra.mxu0 %v462
    %v464 = vand.u32 %v390, 4294901760
    %465 = vmatpush.msra.mxu0 %v464
    %v466 = vand.u32 %v388, 4294901760
    %467 = vmatpush.msra.mxu0 %v466
    %v468 = vand.u32 %v386, 4294901760
    %469 = vmatpush.msra.mxu0 %v468
    %v470 = vand.u32 %v384, 4294901760
    %471 = vmatpush.msra.mxu0 %v470
    %v472 = vand.u32 %v382, 4294901760
    %473 = vmatpush.msra.mxu0 %v472
    %v474 = vand.u32 %v380, 4294901760
    %475 = vmatpush.msra.mxu0 %v474
    %v476 = vand.u32 %v232, 4294901760
    %v477 = vsub.f32 %v232, %v476
    %v478 = vand.u32 %v477, 4294901760
    %v479 = vsub.f32 %v477, %v478
    %v480 = vand.u32 %v479, 4294901760
    %481 = vmatmul.f32.gmra.mxu0 %v480
    %v482 = vpop.f32.mrf.mxu0
    %v483 = vadd.f32 0.0, %v482
    %484 = vdwg.mxu0
    %v485 = vand.u32 %v410, 4294901760
    %v486 = vsub.f32 %v410, %v485
    %v487 = vand.u32 %v486, 4294901760
    %v488 = vsub.f32 %v486, %v487
    %v489 = vand.u32 %v488, 4294901760
    %490 = vmatpush.msra.mxu0 %v489
    %v491 = vand.u32 %v408, 4294901760
    %v492 = vsub.f32 %v408, %v491
    %v493 = vand.u32 %v492, 4294901760
    %v494 = vsub.f32 %v492, %v493
    %v495 = vand.u32 %v494, 4294901760
    %496 = vmatpush.msra.mxu0 %v495
    %v497 = vand.u32 %v406, 4294901760
    %v498 = vsub.f32 %v406, %v497
    %v499 = vand.u32 %v498, 4294901760
    %v500 = vsub.f32 %v498, %v499
    %v501 = vand.u32 %v500, 4294901760
    %502 = vmatpush.msra.mxu0 %v501
    %v503 = vand.u32 %v404, 4294901760
    %v504 = vsub.f32 %v404, %v503
    %v505 = vand.u32 %v504, 4294901760
    %v506 = vsub.f32 %v504, %v505
    %v507 = vand.u32 %v506, 4294901760
    %508 = vmatpush.msra.mxu0 %v507
    %v509 = vand.u32 %v402, 4294901760
    %v510 = vsub.f32 %v402, %v509
    %v511 = vand.u32 %v510, 4294901760
    %v512 = vsub.f32 %v510, %v511
    %v513 = vand.u32 %v512, 4294901760
    %514 = vmatpush.msra.mxu0 %v513
    %v515 = vand.u32 %v400, 4294901760
    %v516 = vsub.f32 %v400, %v515
    %v517 = vand.u32 %v516, 4294901760
    %v518 = vsub.f32 %v516, %v517
    %v519 = vand.u32 %v518, 4294901760
    %520 = vmatpush.msra.mxu0 %v519
    %v521 = vand.u32 %v398, 4294901760
    %v522 = vsub.f32 %v398, %v521
    %v523 = vand.u32 %v522, 4294901760
    %v524 = vsub.f32 %v522, %v523
    %v525 = vand.u32 %v524, 4294901760
    %526 = vmatpush.msra.mxu0 %v525
    %v527 = vand.u32 %v396, 4294901760
    %v528 = vsub.f32 %v396, %v527
    %v529 = vand.u32 %v528, 4294901760
    %v530 = vsub.f32 %v528, %v529
    %v531 = vand.u32 %v530, 4294901760
    %532 = vmatpush.msra.mxu0 %v531
    %v533 = vand.u32 %v394, 4294901760
    %v534 = vsub.f32 %v394, %v533
    %v535 = vand.u32 %v534, 4294901760
    %v536 = vsub.f32 %v534, %v535
    %v537 = vand.u32 %v536, 4294901760
    %538 = vmatpush.msra.mxu0 %v537
    %v539 = vand.u32 %v392, 4294901760
    %v540 = vsub.f32 %v392, %v539
    %v541 = vand.u32 %v540, 4294901760
    %v542 = vsub.f32 %v540, %v541
    %v543 = vand.u32 %v542, 4294901760
    %544 = vmatpush.msra.mxu0 %v543
    %v545 = vand.u32 %v390, 4294901760
    %v546 = vsub.f32 %v390, %v545
    %v547 = vand.u32 %v546, 4294901760
    %v548 = vsub.f32 %v546, %v547
    %v549 = vand.u32 %v548, 4294901760
    %550 = vmatpush.msra.mxu0 %v549
    %v551 = vand.u32 %v388, 4294901760
    %v552 = vsub.f32 %v388, %v551
    %v553 = vand.u32 %v552, 4294901760
    %v554 = vsub.f32 %v552, %v553
    %v555 = vand.u32 %v554, 4294901760
    %556 = vmatpush.msra.mxu0 %v555
    %v557 = vand.u32 %v386, 4294901760
    %v558 = vsub.f32 %v386, %v557
    %v559 = vand.u32 %v558, 4294901760
    %v560 = vsub.f32 %v558, %v559
    %v561 = vand.u32 %v560, 4294901760
    %562 = vmatpush.msra.mxu0 %v561
    %v563 = vand.u32 %v384, 4294901760
    %v564 = vsub.f32 %v384, %v563
    %v565 = vand.u32 %v564, 4294901760
    %v566 = vsub.f32 %v564, %v565
    %v567 = vand.u32 %v566, 4294901760
    %568 = vmatpush.msra.mxu0 %v567
    %v569 = vand.u32 %v382, 4294901760
    %v570 = vsub.f32 %v382, %v569
    %v571 = vand.u32 %v570, 4294901760
    %v572 = vsub.f32 %v570, %v571
    %v573 = vand.u32 %v572, 4294901760
    %574 = vmatpush.msra.mxu0 %v573
    %v575 = vand.u32 %v380, 4294901760
    %v576 = vsub.f32 %v380, %v575
    %v577 = vand.u32 %v576, 4294901760
    %v578 = vsub.f32 %v576, %v577
    %v579 = vand.u32 %v578, 4294901760
    %580 = vmatpush.msra.mxu0 %v579
    %v581 = vand.u32 %v232, 4294901760
    %582 = vmatmul.f32.gmra.mxu0 %v581
    %v583 = vpop.f32.mrf.mxu0
    %v584 = vadd.f32 %v483, %v583
    %585 = vdwg.mxu0
    %v586 = vand.u32 %v410, 4294901760
    %v587 = vsub.f32 %v410, %v586
    %588 = vmatpush.msra.mxu0 %v587
    %v589 = vand.u32 %v408, 4294901760
    %v590 = vsub.f32 %v408, %v589
    %591 = vmatpush.msra.mxu0 %v590
    %v592 = vand.u32 %v406, 4294901760
    %v593 = vsub.f32 %v406, %v592
    %594 = vmatpush.msra.mxu0 %v593
    %v595 = vand.u32 %v404, 4294901760
    %v596 = vsub.f32 %v404, %v595
    %597 = vmatpush.msra.mxu0 %v596
    %v598 = vand.u32 %v402, 4294901760
    %v599 = vsub.f32 %v402, %v598
    %600 = vmatpush.msra.mxu0 %v599
    %v601 = vand.u32 %v400, 4294901760
    %v602 = vsub.f32 %v400, %v601
    %603 = vmatpush.msra.mxu0 %v602
    %v604 = vand.u32 %v398, 4294901760
    %v605 = vsub.f32 %v398, %v604
    %606 = vmatpush.msra.mxu0 %v605
    %v607 = vand.u32 %v396, 4294901760
    %v608 = vsub.f32 %v396, %v607
    %609 = vmatpush.msra.mxu0 %v608
    %v610 = vand.u32 %v394, 4294901760
    %v611 = vsub.f32 %v394, %v610
    %612 = vmatpush.msra.mxu0 %v611
    %v613 = vand.u32 %v392, 4294901760
    %v614 = vsub.f32 %v392, %v613
    %615 = vmatpush.msra.mxu0 %v614
    %v616 = vand.u32 %v390, 4294901760
    %v617 = vsub.f32 %v390, %v616
    %618 = vmatpush.msra.mxu0 %v617
    %v619 = vand.u32 %v388, 4294901760
    %v620 = vsub.f32 %v388, %v619
    %621 = vmatpush.msra.mxu0 %v620
    %v622 = vand.u32 %v386, 4294901760
    %v623 = vsub.f32 %v386, %v622
    %624 = vmatpush.msra.mxu0 %v623
    %v625 = vand.u32 %v384, 4294901760
    %v626 = vsub.f32 %v384, %v625
    %627 = vmatpush.msra.mxu0 %v626
    %v628 = vand.u32 %v382, 4294901760
    %v629 = vsub.f32 %v382, %v628
    %630 = vmatpush.msra.mxu0 %v629
    %v631 = vand.u32 %v380, 4294901760
    %v632 = vsub.f32 %v380, %v631
    %633 = vmatpush.msra.mxu0 %v632
    %v634 = vand.u32 %v232, 4294901760
    %v635 = vsub.f32 %v232, %v634
    %636 = vmatmul.f32.gmra.mxu0 %v635
    %v637 = vpop.f32.mrf.mxu0
    %v638 = vadd.f32 %v584, %v637
    %639 = vdwg.mxu0
    %v640 = vand.u32 %v410, 4294901760
    %641 = vmatpush.msra.mxu0 %v640
    %v642 = vand.u32 %v408, 4294901760
    %643 = vmatpush.msra.mxu0 %v642
    %v644 = vand.u32 %v406, 4294901760
    %645 = vmatpush.msra.mxu0 %v644
    %v646 = vand.u32 %v404, 4294901760
    %647 = vmatpush.msra.mxu0 %v646
    %v648 = vand.u32 %v402, 4294901760
    %649 = vmatpush.msra.mxu0 %v648
    %v650 = vand.u32 %v400, 4294901760
    %651 = vmatpush.msra.mxu0 %v650
    %v652 = vand.u32 %v398, 4294901760
    %653 = vmatpush.msra.mxu0 %v652
    %v654 = vand.u32 %v396, 4294901760
    %655 = vmatpush.msra.mxu0 %v654
    %v656 = vand.u32 %v394, 4294901760
    %657 = vmatpush.msra.mxu0 %v656
    %v658 = vand.u32 %v392, 4294901760
    %659 = vmatpush.msra.mxu0 %v658
    %v660 = vand.u32 %v390, 4294901760
    %661 = vmatpush.msra.mxu0 %v660
    %v662 = vand.u32 %v388, 4294901760
    %663 = vmatpush.msra.mxu0 %v662
    %v664 = vand.u32 %v386, 4294901760
    %665 = vmatpush.msra.mxu0 %v664
    %v666 = vand.u32 %v384, 4294901760
    %667 = vmatpush.msra.mxu0 %v666
    %v668 = vand.u32 %v382, 4294901760
    %669 = vmatpush.msra.mxu0 %v668
    %v670 = vand.u32 %v380, 4294901760
    %671 = vmatpush.msra.mxu0 %v670
    %v672 = vand.u32 %v232, 4294901760
    %v673 = vsub.f32 %v232, %v672
    %v674 = vand.u32 %v673, 4294901760
    %675 = vmatmul.f32.gmra.mxu0 %v674
    %v676 = vpop.f32.mrf.mxu0
    %v677 = vadd.f32 %v638, %v676
    %678 = vdwg.mxu0
    %v679 = vand.u32 %v410, 4294901760
    %v680 = vsub.f32 %v410, %v679
    %v681 = vand.u32 %v680, 4294901760
    %682 = vmatpush.msra.mxu0 %v681
    %v683 = vand.u32 %v408, 4294901760
    %v684 = vsub.f32 %v408, %v683
    %v685 = vand.u32 %v684, 4294901760
    %686 = vmatpush.msra.mxu0 %v685
    %v687 = vand.u32 %v406, 4294901760
    %v688 = vsub.f32 %v406, %v687
    %v689 = vand.u32 %v688, 4294901760
    %690 = vmatpush.msra.mxu0 %v689
    %v691 = vand.u32 %v404, 4294901760
    %v692 = vsub.f32 %v404, %v691
    %v693 = vand.u32 %v692, 4294901760
    %694 = vmatpush.msra.mxu0 %v693
    %v695 = vand.u32 %v402, 4294901760
    %v696 = vsub.f32 %v402, %v695
    %v697 = vand.u32 %v696, 4294901760
    %698 = vmatpush.msra.mxu0 %v697
    %v699 = vand.u32 %v400, 4294901760
    %v700 = vsub.f32 %v400, %v699
    %v701 = vand.u32 %v700, 4294901760
    %702 = vmatpush.msra.mxu0 %v701
    %v703 = vand.u32 %v398, 4294901760
    %v704 = vsub.f32 %v398, %v703
    %v705 = vand.u32 %v704, 4294901760
    %706 = vmatpush.msra.mxu0 %v705
    %v707 = vand.u32 %v396, 4294901760
    %v708 = vsub.f32 %v396, %v707
    %v709 = vand.u32 %v708, 4294901760
    %710 = vmatpush.msra.mxu0 %v709
    %v711 = vand.u32 %v394, 4294901760
    %v712 = vsub.f32 %v394, %v711
    %v713 = vand.u32 %v712, 4294901760
    %714 = vmatpush.msra.mxu0 %v713
    %v715 = vand.u32 %v392, 4294901760
    %v716 = vsub.f32 %v392, %v715
    %v717 = vand.u32 %v716, 4294901760
    %718 = vmatpush.msra.mxu0 %v717
    %v719 = vand.u32 %v390, 4294901760
    %v720 = vsub.f32 %v390, %v719
    %v721 = vand.u32 %v720, 4294901760
    %722 = vmatpush.msra.mxu0 %v721
    %v723 = vand.u32 %v388, 4294901760
    %v724 = vsub.f32 %v388, %v723
    %v725 = vand.u32 %v724, 4294901760
    %726 = vmatpush.msra.mxu0 %v725
    %v727 = vand.u32 %v386, 4294901760
    %v728 = vsub.f32 %v386, %v727
    %v729 = vand.u32 %v728, 4294901760
    %730 = vmatpush.msra.mxu0 %v729
    %v731 = vand.u32 %v384, 4294901760
    %v732 = vsub.f32 %v384, %v731
    %v733 = vand.u32 %v732, 4294901760
    %734 = vmatpush.msra.mxu0 %v733
    %v735 = vand.u32 %v382, 4294901760
    %v736 = vsub.f32 %v382, %v735
    %v737 = vand.u32 %v736, 4294901760
    %738 = vmatpush.msra.mxu0 %v737
    %v739 = vand.u32 %v380, 4294901760
    %v740 = vsub.f32 %v380, %v739
    %v741 = vand.u32 %v740, 4294901760
    %742 = vmatpush.msra.mxu0 %v741
    %v743 = vand.u32 %v232, 4294901760
    %744 = vmatmul.f32.gmra.mxu0 %v743
    %v745 = vpop.f32.mrf.mxu0
    %v746 = vadd.f32 %v677, %v745
    %747 = vdwg.mxu0
    %v748 = vand.u32 %v410, 4294901760
    %749 = vmatpush.msra.mxu0 %v748
    %v750 = vand.u32 %v408, 4294901760
    %751 = vmatpush.msra.mxu0 %v750
    %v752 = vand.u32 %v406, 4294901760
    %753 = vmatpush.msra.mxu0 %v752
    %v754 = vand.u32 %v404, 4294901760
    %755 = vmatpush.msra.mxu0 %v754
    %v756 = vand.u32 %v402, 4294901760
    %757 = vmatpush.msra.mxu0 %v756
    %v758 = vand.u32 %v400, 4294901760
    %759 = vmatpush.msra.mxu0 %v758
    %v760 = vand.u32 %v398, 4294901760
    %761 = vmatpush.msra.mxu0 %v760
    %v762 = vand.u32 %v396, 4294901760
    %763 = vmatpush.msra.mxu0 %v762
    %v764 = vand.u32 %v394, 4294901760
    %765 = vmatpush.msra.mxu0 %v764
    %v766 = vand.u32 %v392, 4294901760
    %767 = vmatpush.msra.mxu0 %v766
    %v768 = vand.u32 %v390, 4294901760
    %769 = vmatpush.msra.mxu0 %v768
    %v770 = vand.u32 %v388, 4294901760
    %771 = vmatpush.msra.mxu0 %v770
    %v772 = vand.u32 %v386, 4294901760
    %773 = vmatpush.msra.mxu0 %v772
    %v774 = vand.u32 %v384, 4294901760
    %775 = vmatpush.msra.mxu0 %v774
    %v776 = vand.u32 %v382, 4294901760
    %777 = vmatpush.msra.mxu0 %v776
    %v778 = vand.u32 %v380, 4294901760
    %779 = vmatpush.msra.mxu0 %v778
    %v780 = vand.u32 %v232, 4294901760
    %781 = vmatmul.f32.gmra.mxu0 %v780
    %v782 = vpop.f32.mrf.mxu0
    %v783 = vadd.f32 %v746, %v782
    %784 = vdwg.mxu0
    %v785 = vand.u32 %v442, 4294901760
    %786 = vmatpush.msra.mxu0 %v785
    %v787 = vand.u32 %v440, 4294901760
    %788 = vmatpush.msra.mxu0 %v787
    %v789 = vand.u32 %v438, 4294901760
    %790 = vmatpush.msra.mxu0 %v789
    %v791 = vand.u32 %v436, 4294901760
    %792 = vmatpush.msra.mxu0 %v791
    %v793 = vand.u32 %v434, 4294901760
    %794 = vmatpush.msra.mxu0 %v793
    %v795 = vand.u32 %v432, 4294901760
    %796 = vmatpush.msra.mxu0 %v795
    %v797 = vand.u32 %v430, 4294901760
    %798 = vmatpush.msra.mxu0 %v797
    %v799 = vand.u32 %v428, 4294901760
    %800 = vmatpush.msra.mxu0 %v799
    %v801 = vand.u32 %v426, 4294901760
    %802 = vmatpush.msra.mxu0 %v801
    %v803 = vand.u32 %v424, 4294901760
    %804 = vmatpush.msra.mxu0 %v803
    %v805 = vand.u32 %v422, 4294901760
    %806 = vmatpush.msra.mxu0 %v805
    %v807 = vand.u32 %v420, 4294901760
    %808 = vmatpush.msra.mxu0 %v807
    %v809 = vand.u32 %v418, 4294901760
    %810 = vmatpush.msra.mxu0 %v809
    %v811 = vand.u32 %v416, 4294901760
    %812 = vmatpush.msra.mxu0 %v811
    %v813 = vand.u32 %v414, 4294901760
    %814 = vmatpush.msra.mxu0 %v813
    %v815 = vand.u32 %v412, 4294901760
    %816 = vmatpush.msra.mxu0 %v815
    %v817 = vand.u32 %v378, 4294901760
    %v818 = vsub.f32 %v378, %v817
    %v819 = vand.u32 %v818, 4294901760
    %v820 = vsub.f32 %v818, %v819
    %v821 = vand.u32 %v820, 4294901760
    %822 = vmatmul.f32.gmra.mxu0 %v821
    %v823 = vpop.f32.mrf.mxu0
    %v824 = vadd.f32 %v783, %v823
    %825 = vdwg.mxu0
    %v826 = vand.u32 %v442, 4294901760
    %v827 = vsub.f32 %v442, %v826
    %v828 = vand.u32 %v827, 4294901760
    %v829 = vsub.f32 %v827, %v828
    %v830 = vand.u32 %v829, 4294901760
    %831 = vmatpush.msra.mxu0 %v830
    %v832 = vand.u32 %v440, 4294901760
    %v833 = vsub.f32 %v440, %v832
    %v834 = vand.u32 %v833, 4294901760
    %v835 = vsub.f32 %v833, %v834
    %v836 = vand.u32 %v835, 4294901760
    %837 = vmatpush.msra.mxu0 %v836
    %v838 = vand.u32 %v438, 4294901760
    %v839 = vsub.f32 %v438, %v838
    %v840 = vand.u32 %v839, 4294901760
    %v841 = vsub.f32 %v839, %v840
    %v842 = vand.u32 %v841, 4294901760
    %843 = vmatpush.msra.mxu0 %v842
    %v844 = vand.u32 %v436, 4294901760
    %v845 = vsub.f32 %v436, %v844
    %v846 = vand.u32 %v845, 4294901760
    %v847 = vsub.f32 %v845, %v846
    %v848 = vand.u32 %v847, 4294901760
    %849 = vmatpush.msra.mxu0 %v848
    %v850 = vand.u32 %v434, 4294901760
    %v851 = vsub.f32 %v434, %v850
    %v852 = vand.u32 %v851, 4294901760
    %v853 = vsub.f32 %v851, %v852
    %v854 = vand.u32 %v853, 4294901760
    %855 = vmatpush.msra.mxu0 %v854
    %v856 = vand.u32 %v432, 4294901760
    %v857 = vsub.f32 %v432, %v856
    %v858 = vand.u32 %v857, 4294901760
    %v859 = vsub.f32 %v857, %v858
    %v860 = vand.u32 %v859, 4294901760
    %861 = vmatpush.msra.mxu0 %v860
    %v862 = vand.u32 %v430, 4294901760
    %v863 = vsub.f32 %v430, %v862
    %v864 = vand.u32 %v863, 4294901760
    %v865 = vsub.f32 %v863, %v864
    %v866 = vand.u32 %v865, 4294901760
    %867 = vmatpush.msra.mxu0 %v866
    %v868 = vand.u32 %v428, 4294901760
    %v869 = vsub.f32 %v428, %v868
    %v870 = vand.u32 %v869, 4294901760
    %v871 = vsub.f32 %v869, %v870
    %v872 = vand.u32 %v871, 4294901760
    %873 = vmatpush.msra.mxu0 %v872
    %v874 = vand.u32 %v426, 4294901760
    %v875 = vsub.f32 %v426, %v874
    %v876 = vand.u32 %v875, 4294901760
    %v877 = vsub.f32 %v875, %v876
    %v878 = vand.u32 %v877, 4294901760
    %879 = vmatpush.msra.mxu0 %v878
    %v880 = vand.u32 %v424, 4294901760
    %v881 = vsub.f32 %v424, %v880
    %v882 = vand.u32 %v881, 4294901760
    %v883 = vsub.f32 %v881, %v882
    %v884 = vand.u32 %v883, 4294901760
    %885 = vmatpush.msra.mxu0 %v884
    %v886 = vand.u32 %v422, 4294901760
    %v887 = vsub.f32 %v422, %v886
    %v888 = vand.u32 %v887, 4294901760
    %v889 = vsub.f32 %v887, %v888
    %v890 = vand.u32 %v889, 4294901760
    %891 = vmatpush.msra.mxu0 %v890
    %v892 = vand.u32 %v420, 4294901760
    %v893 = vsub.f32 %v420, %v892
    %v894 = vand.u32 %v893, 4294901760
    %v895 = vsub.f32 %v893, %v894
    %v896 = vand.u32 %v895, 4294901760
    %897 = vmatpush.msra.mxu0 %v896
    %v898 = vand.u32 %v418, 4294901760
    %v899 = vsub.f32 %v418, %v898
    %v900 = vand.u32 %v899, 4294901760
    %v901 = vsub.f32 %v899, %v900
    %v902 = vand.u32 %v901, 4294901760
    %903 = vmatpush.msra.mxu0 %v902
    %v904 = vand.u32 %v416, 4294901760
    %v905 = vsub.f32 %v416, %v904
    %v906 = vand.u32 %v905, 4294901760
    %v907 = vsub.f32 %v905, %v906
    %v908 = vand.u32 %v907, 4294901760
    %909 = vmatpush.msra.mxu0 %v908
    %v910 = vand.u32 %v414, 4294901760
    %v911 = vsub.f32 %v414, %v910
    %v912 = vand.u32 %v911, 4294901760
    %v913 = vsub.f32 %v911, %v912
    %v914 = vand.u32 %v913, 4294901760
    %915 = vmatpush.msra.mxu0 %v914
    %v916 = vand.u32 %v412, 4294901760
    %v917 = vsub.f32 %v412, %v916
    %v918 = vand.u32 %v917, 4294901760
    %v919 = vsub.f32 %v917, %v918
    %v920 = vand.u32 %v919, 4294901760
    %921 = vmatpush.msra.mxu0 %v920
    %v922 = vand.u32 %v378, 4294901760
    %923 = vmatmul.f32.gmra.mxu0 %v922
    %v924 = vpop.f32.mrf.mxu0
    %v925 = vadd.f32 %v824, %v924
    %926 = vdwg.mxu0
    %v927 = vand.u32 %v442, 4294901760
    %v928 = vsub.f32 %v442, %v927
    %929 = vmatpush.msra.mxu0 %v928
    %v930 = vand.u32 %v440, 4294901760
    %v931 = vsub.f32 %v440, %v930
    %932 = vmatpush.msra.mxu0 %v931
    %v933 = vand.u32 %v438, 4294901760
    %v934 = vsub.f32 %v438, %v933
    %935 = vmatpush.msra.mxu0 %v934
    %v936 = vand.u32 %v436, 4294901760
    %v937 = vsub.f32 %v436, %v936
    %938 = vmatpush.msra.mxu0 %v937
    %v939 = vand.u32 %v434, 4294901760
    %v940 = vsub.f32 %v434, %v939
    %941 = vmatpush.msra.mxu0 %v940
    %v942 = vand.u32 %v432, 4294901760
    %v943 = vsub.f32 %v432, %v942
    %944 = vmatpush.msra.mxu0 %v943
    %v945 = vand.u32 %v430, 4294901760
    %v946 = vsub.f32 %v430, %v945
    %947 = vmatpush.msra.mxu0 %v946
    %v948 = vand.u32 %v428, 4294901760
    %v949 = vsub.f32 %v428, %v948
    %950 = vmatpush.msra.mxu0 %v949
    %v951 = vand.u32 %v426, 4294901760
    %v952 = vsub.f32 %v426, %v951
    %953 = vmatpush.msra.mxu0 %v952
    %v954 = vand.u32 %v424, 4294901760
    %v955 = vsub.f32 %v424, %v954
    %956 = vmatpush.msra.mxu0 %v955
    %v957 = vand.u32 %v422, 4294901760
    %v958 = vsub.f32 %v422, %v957
    %959 = vmatpush.msra.mxu0 %v958
    %v960 = vand.u32 %v420, 4294901760
    %v961 = vsub.f32 %v420, %v960
    %962 = vmatpush.msra.mxu0 %v961
    %v963 = vand.u32 %v418, 4294901760
    %v964 = vsub.f32 %v418, %v963
    %965 = vmatpush.msra.mxu0 %v964
    %v966 = vand.u32 %v416, 4294901760
    %v967 = vsub.f32 %v416, %v966
    %968 = vmatpush.msra.mxu0 %v967
    %v969 = vand.u32 %v414, 4294901760
    %v970 = vsub.f32 %v414, %v969
    %971 = vmatpush.msra.mxu0 %v970
    %v972 = vand.u32 %v412, 4294901760
    %v973 = vsub.f32 %v412, %v972
    %974 = vmatpush.msra.mxu0 %v973
    %v975 = vand.u32 %v378, 4294901760
    %v976 = vsub.f32 %v378, %v975
    %977 = vmatmul.f32.gmra.mxu0 %v976
    %v978 = vpop.f32.mrf.mxu0
    %v979 = vadd.f32 %v925, %v978
    %980 = vdwg.mxu0
    %v981 = vand.u32 %v442, 4294901760
    %982 = vmatpush.msra.mxu0 %v981
    %v983 = vand.u32 %v440, 4294901760
    %984 = vmatpush.msra.mxu0 %v983
    %v985 = vand.u32 %v438, 4294901760
    %986 = vmatpush.msra.mxu0 %v985
    %v987 = vand.u32 %v436, 4294901760
    %988 = vmatpush.msra.mxu0 %v987
    %v989 = vand.u32 %v434, 4294901760
    %990 = vmatpush.msra.mxu0 %v989
    %v991 = vand.u32 %v432, 4294901760
    %992 = vmatpush.msra.mxu0 %v991
    %v993 = vand.u32 %v430, 4294901760
    %994 = vmatpush.msra.mxu0 %v993
    %v995 = vand.u32 %v428, 4294901760
    %996 = vmatpush.msra.mxu0 %v995
    %v997 = vand.u32 %v426, 4294901760
    %998 = vmatpush.msra.mxu0 %v997
    %v999 = vand.u32 %v424, 4294901760
    %1000 = vmatpush.msra.mxu0 %v999
    %v1001 = vand.u32 %v422, 4294901760
    %1002 = vmatpush.msra.mxu0 %v1001
    %v1003 = vand.u32 %v420, 4294901760
    %1004 = vmatpush.msra.mxu0 %v1003
    %v1005 = vand.u32 %v418, 4294901760
    %1006 = vmatpush.msra.mxu0 %v1005
    %v1007 = vand.u32 %v416, 4294901760
    %1008 = vmatpush.msra.mxu0 %v1007
    %v1009 = vand.u32 %v414, 4294901760
    %1010 = vmatpush.msra.mxu0 %v1009
    %v1011 = vand.u32 %v412, 4294901760
    %1012 = vmatpush.msra.mxu0 %v1011
    %v1013 = vand.u32 %v378, 4294901760
    %v1014 = vsub.f32 %v378, %v1013
    %v1015 = vand.u32 %v1014, 4294901760
    %1016 = vmatmul.f32.gmra.mxu0 %v1015
    %v1017 = vpop.f32.mrf.mxu0
    %v1018 = vadd.f32 %v979, %v1017
    %1019 = vdwg.mxu0
    %v1020 = vand.u32 %v442, 4294901760
    %v1021 = vsub.f32 %v442, %v1020
    %v1022 = vand.u32 %v1021, 4294901760
    %1023 = vmatpush.msra.mxu0 %v1022
    %v1024 = vand.u32 %v440, 4294901760
    %v1025 = vsub.f32 %v440, %v1024
    %v1026 = vand.u32 %v1025, 4294901760
    %1027 = vmatpush.msra.mxu0 %v1026
    %v1028 = vand.u32 %v438, 4294901760
    %v1029 = vsub.f32 %v438, %v1028
    %v1030 = vand.u32 %v1029, 4294901760
    %1031 = vmatpush.msra.mxu0 %v1030
    %v1032 = vand.u32 %v436, 4294901760
    %v1033 = vsub.f32 %v436, %v1032
    %v1034 = vand.u32 %v1033, 4294901760
    %1035 = vmatpush.msra.mxu0 %v1034
    %v1036 = vand.u32 %v434, 4294901760
    %v1037 = vsub.f32 %v434, %v1036
    %v1038 = vand.u32 %v1037, 4294901760
    %1039 = vmatpush.msra.mxu0 %v1038
    %v1040 = vand.u32 %v432, 4294901760
    %v1041 = vsub.f32 %v432, %v1040
    %v1042 = vand.u32 %v1041, 4294901760
    %1043 = vmatpush.msra.mxu0 %v1042
    %v1044 = vand.u32 %v430, 4294901760
    %v1045 = vsub.f32 %v430, %v1044
    %v1046 = vand.u32 %v1045, 4294901760
    %1047 = vmatpush.msra.mxu0 %v1046
    %v1048 = vand.u32 %v428, 4294901760
    %v1049 = vsub.f32 %v428, %v1048
    %v1050 = vand.u32 %v1049, 4294901760
    %1051 = vmatpush.msra.mxu0 %v1050
    %v1052 = vand.u32 %v426, 4294901760
    %v1053 = vsub.f32 %v426, %v1052
    %v1054 = vand.u32 %v1053, 4294901760
    %1055 = vmatpush.msra.mxu0 %v1054
    %v1056 = vand.u32 %v424, 4294901760
    %v1057 = vsub.f32 %v424, %v1056
    %v1058 = vand.u32 %v1057, 4294901760
    %1059 = vmatpush.msra.mxu0 %v1058
    %v1060 = vand.u32 %v422, 4294901760
    %v1061 = vsub.f32 %v422, %v1060
    %v1062 = vand.u32 %v1061, 4294901760
    %1063 = vmatpush.msra.mxu0 %v1062
    %v1064 = vand.u32 %v420, 4294901760
    %v1065 = vsub.f32 %v420, %v1064
    %v1066 = vand.u32 %v1065, 4294901760
    %1067 = vmatpush.msra.mxu0 %v1066
    %v1068 = vand.u32 %v418, 4294901760
    %v1069 = vsub.f32 %v418, %v1068
    %v1070 = vand.u32 %v1069, 4294901760
    %1071 = vmatpush.msra.mxu0 %v1070
    %v1072 = vand.u32 %v416, 4294901760
    %v1073 = vsub.f32 %v416, %v1072
    %v1074 = vand.u32 %v1073, 4294901760
    %1075 = vmatpush.msra.mxu0 %v1074
    %v1076 = vand.u32 %v414, 4294901760
    %v1077 = vsub.f32 %v414, %v1076
    %v1078 = vand.u32 %v1077, 4294901760
    %1079 = vmatpush.msra.mxu0 %v1078
    %v1080 = vand.u32 %v412, 4294901760
    %v1081 = vsub.f32 %v412, %v1080
    %v1082 = vand.u32 %v1081, 4294901760
    %1083 = vmatpush.msra.mxu0 %v1082
    %v1084 = vand.u32 %v378, 4294901760
    %1085 = vmatmul.f32.gmra.mxu0 %v1084
    %v1086 = vpop.f32.mrf.mxu0
    %v1087 = vadd.f32 %v1018, %v1086
    %1088 = vdwg.mxu0
    %v1089 = vand.u32 %v442, 4294901760
    %1090 = vmatpush.msra.mxu0 %v1089
    %v1091 = vand.u32 %v440, 4294901760
    %1092 = vmatpush.msra.mxu0 %v1091
    %v1093 = vand.u32 %v438, 4294901760
    %1094 = vmatpush.msra.mxu0 %v1093
    %v1095 = vand.u32 %v436, 4294901760
    %1096 = vmatpush.msra.mxu0 %v1095
    %v1097 = vand.u32 %v434, 4294901760
    %1098 = vmatpush.msra.mxu0 %v1097
    %v1099 = vand.u32 %v432, 4294901760
    %1100 = vmatpush.msra.mxu0 %v1099
    %v1101 = vand.u32 %v430, 4294901760
    %1102 = vmatpush.msra.mxu0 %v1101
    %v1103 = vand.u32 %v428, 4294901760
    %1104 = vmatpush.msra.mxu0 %v1103
    %v1105 = vand.u32 %v426, 4294901760
    %1106 = vmatpush.msra.mxu0 %v1105
    %v1107 = vand.u32 %v424, 4294901760
    %1108 = vmatpush.msra.mxu0 %v1107
    %v1109 = vand.u32 %v422, 4294901760
    %1110 = vmatpush.msra.mxu0 %v1109
    %v1111 = vand.u32 %v420, 4294901760
    %1112 = vmatpush.msra.mxu0 %v1111
    %v1113 = vand.u32 %v418, 4294901760
    %1114 = vmatpush.msra.mxu0 %v1113
    %v1115 = vand.u32 %v416, 4294901760
    %1116 = vmatpush.msra.mxu0 %v1115
    %v1117 = vand.u32 %v414, 4294901760
    %1118 = vmatpush.msra.mxu0 %v1117
    %v1119 = vand.u32 %v412, 4294901760
    %1120 = vmatpush.msra.mxu0 %v1119
    %v1121 = vand.u32 %v378, 4294901760
    %1122 = vmatmul.f32.gmra.mxu0 %v1121
    %v1123 = vpop.f32.mrf.mxu0
    %v1124 = vadd.f32 %v1087, %v1123
    %1125 = vdwg.mxu0
    %v1126 = vand.u32 %v411, 4294901760
    %1127 = vmatpush.msra.mxu0 %v1126
    %v1128 = vand.u32 %v409, 4294901760
    %1129 = vmatpush.msra.mxu0 %v1128
    %v1130 = vand.u32 %v407, 4294901760
    %1131 = vmatpush.msra.mxu0 %v1130
    %v1132 = vand.u32 %v405, 4294901760
    %1133 = vmatpush.msra.mxu0 %v1132
    %v1134 = vand.u32 %v403, 4294901760
    %1135 = vmatpush.msra.mxu0 %v1134
    %v1136 = vand.u32 %v401, 4294901760
    %1137 = vmatpush.msra.mxu0 %v1136
    %v1138 = vand.u32 %v399, 4294901760
    %1139 = vmatpush.msra.mxu0 %v1138
    %v1140 = vand.u32 %v397, 4294901760
    %1141 = vmatpush.msra.mxu0 %v1140
    %v1142 = vand.u32 %v395, 4294901760
    %1143 = vmatpush.msra.mxu0 %v1142
    %v1144 = vand.u32 %v393, 4294901760
    %1145 = vmatpush.msra.mxu0 %v1144
    %v1146 = vand.u32 %v391, 4294901760
    %1147 = vmatpush.msra.mxu0 %v1146
    %v1148 = vand.u32 %v389, 4294901760
    %1149 = vmatpush.msra.mxu0 %v1148
    %v1150 = vand.u32 %v387, 4294901760
    %1151 = vmatpush.msra.mxu0 %v1150
    %v1152 = vand.u32 %v385, 4294901760
    %1153 = vmatpush.msra.mxu0 %v1152
    %v1154 = vand.u32 %v383, 4294901760
    %1155 = vmatpush.msra.mxu0 %v1154
    %v1156 = vand.u32 %v381, 4294901760
    %1157 = vmatpush.msra.mxu0 %v1156
    %v1158 = vand.u32 %v232, 4294901760
    %v1159 = vsub.f32 %v232, %v1158
    %v1160 = vand.u32 %v1159, 4294901760
    %v1161 = vsub.f32 %v1159, %v1160
    %v1162 = vand.u32 %v1161, 4294901760
    %1163 = vmatmul.f32.gmra.mxu0 %v1162
    %v1164 = vpop.f32.mrf.mxu0
    %v1165 = vadd.f32 0.0, %v1164
    %1166 = vdwg.mxu0
    %v1167 = vand.u32 %v411, 4294901760
    %v1168 = vsub.f32 %v411, %v1167
    %v1169 = vand.u32 %v1168, 4294901760
    %v1170 = vsub.f32 %v1168, %v1169
    %v1171 = vand.u32 %v1170, 4294901760
    %1172 = vmatpush.msra.mxu0 %v1171
    %v1173 = vand.u32 %v409, 4294901760
    %v1174 = vsub.f32 %v409, %v1173
    %v1175 = vand.u32 %v1174, 4294901760
    %v1176 = vsub.f32 %v1174, %v1175
    %v1177 = vand.u32 %v1176, 4294901760
    %1178 = vmatpush.msra.mxu0 %v1177
    %v1179 = vand.u32 %v407, 4294901760
    %v1180 = vsub.f32 %v407, %v1179
    %v1181 = vand.u32 %v1180, 4294901760
    %v1182 = vsub.f32 %v1180, %v1181
    %v1183 = vand.u32 %v1182, 4294901760
    %1184 = vmatpush.msra.mxu0 %v1183
    %v1185 = vand.u32 %v405, 4294901760
    %v1186 = vsub.f32 %v405, %v1185
    %v1187 = vand.u32 %v1186, 4294901760
    %v1188 = vsub.f32 %v1186, %v1187
    %v1189 = vand.u32 %v1188, 4294901760
    %1190 = vmatpush.msra.mxu0 %v1189
    %v1191 = vand.u32 %v403, 4294901760
    %v1192 = vsub.f32 %v403, %v1191
    %v1193 = vand.u32 %v1192, 4294901760
    %v1194 = vsub.f32 %v1192, %v1193
    %v1195 = vand.u32 %v1194, 4294901760
    %1196 = vmatpush.msra.mxu0 %v1195
    %v1197 = vand.u32 %v401, 4294901760
    %v1198 = vsub.f32 %v401, %v1197
    %v1199 = vand.u32 %v1198, 4294901760
    %v1200 = vsub.f32 %v1198, %v1199
    %v1201 = vand.u32 %v1200, 4294901760
    %1202 = vmatpush.msra.mxu0 %v1201
    %v1203 = vand.u32 %v399, 4294901760
    %v1204 = vsub.f32 %v399, %v1203
    %v1205 = vand.u32 %v1204, 4294901760
    %v1206 = vsub.f32 %v1204, %v1205
    %v1207 = vand.u32 %v1206, 4294901760
    %1208 = vmatpush.msra.mxu0 %v1207
    %v1209 = vand.u32 %v397, 4294901760
    %v1210 = vsub.f32 %v397, %v1209
    %v1211 = vand.u32 %v1210, 4294901760
    %v1212 = vsub.f32 %v1210, %v1211
    %v1213 = vand.u32 %v1212, 4294901760
    %1214 = vmatpush.msra.mxu0 %v1213
    %v1215 = vand.u32 %v395, 4294901760
    %v1216 = vsub.f32 %v395, %v1215
    %v1217 = vand.u32 %v1216, 4294901760
    %v1218 = vsub.f32 %v1216, %v1217
    %v1219 = vand.u32 %v1218, 4294901760
    %1220 = vmatpush.msra.mxu0 %v1219
    %v1221 = vand.u32 %v393, 4294901760
    %v1222 = vsub.f32 %v393, %v1221
    %v1223 = vand.u32 %v1222, 4294901760
    %v1224 = vsub.f32 %v1222, %v1223
    %v1225 = vand.u32 %v1224, 4294901760
    %1226 = vmatpush.msra.mxu0 %v1225
    %v1227 = vand.u32 %v391, 4294901760
    %v1228 = vsub.f32 %v391, %v1227
    %v1229 = vand.u32 %v1228, 4294901760
    %v1230 = vsub.f32 %v1228, %v1229
    %v1231 = vand.u32 %v1230, 4294901760
    %1232 = vmatpush.msra.mxu0 %v1231
    %v1233 = vand.u32 %v389, 4294901760
    %v1234 = vsub.f32 %v389, %v1233
    %v1235 = vand.u32 %v1234, 4294901760
    %v1236 = vsub.f32 %v1234, %v1235
    %v1237 = vand.u32 %v1236, 4294901760
    %1238 = vmatpush.msra.mxu0 %v1237
    %v1239 = vand.u32 %v387, 4294901760
    %v1240 = vsub.f32 %v387, %v1239
    %v1241 = vand.u32 %v1240, 4294901760
    %v1242 = vsub.f32 %v1240, %v1241
    %v1243 = vand.u32 %v1242, 4294901760
    %1244 = vmatpush.msra.mxu0 %v1243
    %v1245 = vand.u32 %v385, 4294901760
    %v1246 = vsub.f32 %v385, %v1245
    %v1247 = vand.u32 %v1246, 4294901760
    %v1248 = vsub.f32 %v1246, %v1247
    %v1249 = vand.u32 %v1248, 4294901760
    %1250 = vmatpush.msra.mxu0 %v1249
    %v1251 = vand.u32 %v383, 4294901760
    %v1252 = vsub.f32 %v383, %v1251
    %v1253 = vand.u32 %v1252, 4294901760
    %v1254 = vsub.f32 %v1252, %v1253
    %v1255 = vand.u32 %v1254, 4294901760
    %1256 = vmatpush.msra.mxu0 %v1255
    %v1257 = vand.u32 %v381, 4294901760
    %v1258 = vsub.f32 %v381, %v1257
    %v1259 = vand.u32 %v1258, 4294901760
    %v1260 = vsub.f32 %v1258, %v1259
    %v1261 = vand.u32 %v1260, 4294901760
    %1262 = vmatpush.msra.mxu0 %v1261
    %v1263 = vand.u32 %v232, 4294901760
    %1264 = vmatmul.f32.gmra.mxu0 %v1263
    %v1265 = vpop.f32.mrf.mxu0
    %v1266 = vadd.f32 %v1165, %v1265
    %1267 = vdwg.mxu0
    %v1268 = vand.u32 %v411, 4294901760
    %v1269 = vsub.f32 %v411, %v1268
    %1270 = vmatpush.msra.mxu0 %v1269
    %v1271 = vand.u32 %v409, 4294901760
    %v1272 = vsub.f32 %v409, %v1271
    %1273 = vmatpush.msra.mxu0 %v1272
    %v1274 = vand.u32 %v407, 4294901760
    %v1275 = vsub.f32 %v407, %v1274
    %1276 = vmatpush.msra.mxu0 %v1275
    %v1277 = vand.u32 %v405, 4294901760
    %v1278 = vsub.f32 %v405, %v1277
    %1279 = vmatpush.msra.mxu0 %v1278
    %v1280 = vand.u32 %v403, 4294901760
    %v1281 = vsub.f32 %v403, %v1280
    %1282 = vmatpush.msra.mxu0 %v1281
    %v1283 = vand.u32 %v401, 4294901760
    %v1284 = vsub.f32 %v401, %v1283
    %1285 = vmatpush.msra.mxu0 %v1284
    %v1286 = vand.u32 %v399, 4294901760
    %v1287 = vsub.f32 %v399, %v1286
    %1288 = vmatpush.msra.mxu0 %v1287
    %v1289 = vand.u32 %v397, 4294901760
    %v1290 = vsub.f32 %v397, %v1289
    %1291 = vmatpush.msra.mxu0 %v1290
    %v1292 = vand.u32 %v395, 4294901760
    %v1293 = vsub.f32 %v395, %v1292
    %1294 = vmatpush.msra.mxu0 %v1293
    %v1295 = vand.u32 %v393, 4294901760
    %v1296 = vsub.f32 %v393, %v1295
    %1297 = vmatpush.msra.mxu0 %v1296
    %v1298 = vand.u32 %v391, 4294901760
    %v1299 = vsub.f32 %v391, %v1298
    %1300 = vmatpush.msra.mxu0 %v1299
    %v1301 = vand.u32 %v389, 4294901760
    %v1302 = vsub.f32 %v389, %v1301
    %1303 = vmatpush.msra.mxu0 %v1302
    %v1304 = vand.u32 %v387, 4294901760
    %v1305 = vsub.f32 %v387, %v1304
    %1306 = vmatpush.msra.mxu0 %v1305
    %v1307 = vand.u32 %v385, 4294901760
    %v1308 = vsub.f32 %v385, %v1307
    %1309 = vmatpush.msra.mxu0 %v1308
    %v1310 = vand.u32 %v383, 4294901760
    %v1311 = vsub.f32 %v383, %v1310
    %1312 = vmatpush.msra.mxu0 %v1311
    %v1313 = vand.u32 %v381, 4294901760
    %v1314 = vsub.f32 %v381, %v1313
    %1315 = vmatpush.msra.mxu0 %v1314
    %v1316 = vand.u32 %v232, 4294901760
    %v1317 = vsub.f32 %v232, %v1316
    %1318 = vmatmul.f32.gmra.mxu0 %v1317
    %v1319 = vpop.f32.mrf.mxu0
    %v1320 = vadd.f32 %v1266, %v1319
    %1321 = vdwg.mxu0
    %v1322 = vand.u32 %v411, 4294901760
    %1323 = vmatpush.msra.mxu0 %v1322
    %v1324 = vand.u32 %v409, 4294901760
    %1325 = vmatpush.msra.mxu0 %v1324
    %v1326 = vand.u32 %v407, 4294901760
    %1327 = vmatpush.msra.mxu0 %v1326
    %v1328 = vand.u32 %v405, 4294901760
    %1329 = vmatpush.msra.mxu0 %v1328
    %v1330 = vand.u32 %v403, 4294901760
    %1331 = vmatpush.msra.mxu0 %v1330
    %v1332 = vand.u32 %v401, 4294901760
    %1333 = vmatpush.msra.mxu0 %v1332
    %v1334 = vand.u32 %v399, 4294901760
    %1335 = vmatpush.msra.mxu0 %v1334
    %v1336 = vand.u32 %v397, 4294901760
    %1337 = vmatpush.msra.mxu0 %v1336
    %v1338 = vand.u32 %v395, 4294901760
    %1339 = vmatpush.msra.mxu0 %v1338
    %v1340 = vand.u32 %v393, 4294901760
    %1341 = vmatpush.msra.mxu0 %v1340
    %v1342 = vand.u32 %v391, 4294901760
    %1343 = vmatpush.msra.mxu0 %v1342
    %v1344 = vand.u32 %v389, 4294901760
    %1345 = vmatpush.msra.mxu0 %v1344
    %v1346 = vand.u32 %v387, 4294901760
    %1347 = vmatpush.msra.mxu0 %v1346
    %v1348 = vand.u32 %v385, 4294901760
    %1349 = vmatpush.msra.mxu0 %v1348
    %v1350 = vand.u32 %v383, 4294901760
    %1351 = vmatpush.msra.mxu0 %v1350
    %v1352 = vand.u32 %v381, 4294901760
    %1353 = vmatpush.msra.mxu0 %v1352
    %v1354 = vand.u32 %v232, 4294901760
    %v1355 = vsub.f32 %v232, %v1354
    %v1356 = vand.u32 %v1355, 4294901760
    %1357 = vmatmul.f32.gmra.mxu0 %v1356
    %v1358 = vpop.f32.mrf.mxu0
    %v1359 = vadd.f32 %v1320, %v1358
    %1360 = vdwg.mxu0
    %v1361 = vand.u32 %v411, 4294901760
    %v1362 = vsub.f32 %v411, %v1361
    %v1363 = vand.u32 %v1362, 4294901760
    %1364 = vmatpush.msra.mxu0 %v1363
    %v1365 = vand.u32 %v409, 4294901760
    %v1366 = vsub.f32 %v409, %v1365
    %v1367 = vand.u32 %v1366, 4294901760
    %1368 = vmatpush.msra.mxu0 %v1367
    %v1369 = vand.u32 %v407, 4294901760
    %v1370 = vsub.f32 %v407, %v1369
    %v1371 = vand.u32 %v1370, 4294901760
    %1372 = vmatpush.msra.mxu0 %v1371
    %v1373 = vand.u32 %v405, 4294901760
    %v1374 = vsub.f32 %v405, %v1373
    %v1375 = vand.u32 %v1374, 4294901760
    %1376 = vmatpush.msra.mxu0 %v1375
    %v1377 = vand.u32 %v403, 4294901760
    %v1378 = vsub.f32 %v403, %v1377
    %v1379 = vand.u32 %v1378, 4294901760
    %1380 = vmatpush.msra.mxu0 %v1379
    %v1381 = vand.u32 %v401, 4294901760
    %v1382 = vsub.f32 %v401, %v1381
    %v1383 = vand.u32 %v1382, 4294901760
    %1384 = vmatpush.msra.mxu0 %v1383
    %v1385 = vand.u32 %v399, 4294901760
    %v1386 = vsub.f32 %v399, %v1385
    %v1387 = vand.u32 %v1386, 4294901760
    %1388 = vmatpush.msra.mxu0 %v1387
    %v1389 = vand.u32 %v397, 4294901760
    %v1390 = vsub.f32 %v397, %v1389
    %v1391 = vand.u32 %v1390, 4294901760
    %1392 = vmatpush.msra.mxu0 %v1391
    %v1393 = vand.u32 %v395, 4294901760
    %v1394 = vsub.f32 %v395, %v1393
    %v1395 = vand.u32 %v1394, 4294901760
    %1396 = vmatpush.msra.mxu0 %v1395
    %v1397 = vand.u32 %v393, 4294901760
    %v1398 = vsub.f32 %v393, %v1397
    %v1399 = vand.u32 %v1398, 4294901760
    %1400 = vmatpush.msra.mxu0 %v1399
    %v1401 = vand.u32 %v391, 4294901760
    %v1402 = vsub.f32 %v391, %v1401
    %v1403 = vand.u32 %v1402, 4294901760
    %1404 = vmatpush.msra.mxu0 %v1403
    %v1405 = vand.u32 %v389, 4294901760
    %v1406 = vsub.f32 %v389, %v1405
    %v1407 = vand.u32 %v1406, 4294901760
    %1408 = vmatpush.msra.mxu0 %v1407
    %v1409 = vand.u32 %v387, 4294901760
    %v1410 = vsub.f32 %v387, %v1409
    %v1411 = vand.u32 %v1410, 4294901760
    %1412 = vmatpush.msra.mxu0 %v1411
    %v1413 = vand.u32 %v385, 4294901760
    %v1414 = vsub.f32 %v385, %v1413
    %v1415 = vand.u32 %v1414, 4294901760
    %1416 = vmatpush.msra.mxu0 %v1415
    %v1417 = vand.u32 %v383, 4294901760
    %v1418 = vsub.f32 %v383, %v1417
    %v1419 = vand.u32 %v1418, 4294901760
    %1420 = vmatpush.msra.mxu0 %v1419
    %v1421 = vand.u32 %v381, 4294901760
    %v1422 = vsub.f32 %v381, %v1421
    %v1423 = vand.u32 %v1422, 4294901760
    %1424 = vmatpush.msra.mxu0 %v1423
    %v1425 = vand.u32 %v232, 4294901760
    %1426 = vmatmul.f32.gmra.mxu0 %v1425
    %v1427 = vpop.f32.mrf.mxu0
    %v1428 = vadd.f32 %v1359, %v1427
    %1429 = vdwg.mxu0
    %v1430 = vand.u32 %v411, 4294901760
    %1431 = vmatpush.msra.mxu0 %v1430
    %v1432 = vand.u32 %v409, 4294901760
    %1433 = vmatpush.msra.mxu0 %v1432
    %v1434 = vand.u32 %v407, 4294901760
    %1435 = vmatpush.msra.mxu0 %v1434
    %v1436 = vand.u32 %v405, 4294901760
    %1437 = vmatpush.msra.mxu0 %v1436
    %v1438 = vand.u32 %v403, 4294901760
    %1439 = vmatpush.msra.mxu0 %v1438
    %v1440 = vand.u32 %v401, 4294901760
    %1441 = vmatpush.msra.mxu0 %v1440
    %v1442 = vand.u32 %v399, 4294901760
    %1443 = vmatpush.msra.mxu0 %v1442
    %v1444 = vand.u32 %v397, 4294901760
    %1445 = vmatpush.msra.mxu0 %v1444
    %v1446 = vand.u32 %v395, 4294901760
    %1447 = vmatpush.msra.mxu0 %v1446
    %v1448 = vand.u32 %v393, 4294901760
    %1449 = vmatpush.msra.mxu0 %v1448
    %v1450 = vand.u32 %v391, 4294901760
    %1451 = vmatpush.msra.mxu0 %v1450
    %v1452 = vand.u32 %v389, 4294901760
    %1453 = vmatpush.msra.mxu0 %v1452
    %v1454 = vand.u32 %v387, 4294901760
    %1455 = vmatpush.msra.mxu0 %v1454
    %v1456 = vand.u32 %v385, 4294901760
    %1457 = vmatpush.msra.mxu0 %v1456
    %v1458 = vand.u32 %v383, 4294901760
    %1459 = vmatpush.msra.mxu0 %v1458
    %v1460 = vand.u32 %v381, 4294901760
    %1461 = vmatpush.msra.mxu0 %v1460
    %v1462 = vand.u32 %v232, 4294901760
    %1463 = vmatmul.f32.gmra.mxu0 %v1462
    %v1464 = vpop.f32.mrf.mxu0
    %v1465 = vadd.f32 %v1428, %v1464
    %1466 = vdwg.mxu0
    %v1467 = vand.u32 %v443, 4294901760
    %1468 = vmatpush.msra.mxu0 %v1467
    %v1469 = vand.u32 %v441, 4294901760
    %1470 = vmatpush.msra.mxu0 %v1469
    %v1471 = vand.u32 %v439, 4294901760
    %1472 = vmatpush.msra.mxu0 %v1471
    %v1473 = vand.u32 %v437, 4294901760
    %1474 = vmatpush.msra.mxu0 %v1473
    %v1475 = vand.u32 %v435, 4294901760
    %1476 = vmatpush.msra.mxu0 %v1475
    %v1477 = vand.u32 %v433, 4294901760
    %1478 = vmatpush.msra.mxu0 %v1477
    %v1479 = vand.u32 %v431, 4294901760
    %1480 = vmatpush.msra.mxu0 %v1479
    %v1481 = vand.u32 %v429, 4294901760
    %1482 = vmatpush.msra.mxu0 %v1481
    %v1483 = vand.u32 %v427, 4294901760
    %1484 = vmatpush.msra.mxu0 %v1483
    %v1485 = vand.u32 %v425, 4294901760
    %1486 = vmatpush.msra.mxu0 %v1485
    %v1487 = vand.u32 %v423, 4294901760
    %1488 = vmatpush.msra.mxu0 %v1487
    %v1489 = vand.u32 %v421, 4294901760
    %1490 = vmatpush.msra.mxu0 %v1489
    %v1491 = vand.u32 %v419, 4294901760
    %1492 = vmatpush.msra.mxu0 %v1491
    %v1493 = vand.u32 %v417, 4294901760
    %1494 = vmatpush.msra.mxu0 %v1493
    %v1495 = vand.u32 %v415, 4294901760
    %1496 = vmatpush.msra.mxu0 %v1495
    %v1497 = vand.u32 %v413, 4294901760
    %1498 = vmatpush.msra.mxu0 %v1497
    %v1499 = vand.u32 %v378, 4294901760
    %v1500 = vsub.f32 %v378, %v1499
    %v1501 = vand.u32 %v1500, 4294901760
    %v1502 = vsub.f32 %v1500, %v1501
    %v1503 = vand.u32 %v1502, 4294901760
    %1504 = vmatmul.f32.gmra.mxu0 %v1503
    %v1505 = vpop.f32.mrf.mxu0
    %v1506 = vadd.f32 %v1465, %v1505
    %1507 = vdwg.mxu0
    %v1508 = vand.u32 %v443, 4294901760
    %v1509 = vsub.f32 %v443, %v1508
    %v1510 = vand.u32 %v1509, 4294901760
    %v1511 = vsub.f32 %v1509, %v1510
    %v1512 = vand.u32 %v1511, 4294901760
    %1513 = vmatpush.msra.mxu0 %v1512
    %v1514 = vand.u32 %v441, 4294901760
    %v1515 = vsub.f32 %v441, %v1514
    %v1516 = vand.u32 %v1515, 4294901760
    %v1517 = vsub.f32 %v1515, %v1516
    %v1518 = vand.u32 %v1517, 4294901760
    %1519 = vmatpush.msra.mxu0 %v1518
    %v1520 = vand.u32 %v439, 4294901760
    %v1521 = vsub.f32 %v439, %v1520
    %v1522 = vand.u32 %v1521, 4294901760
    %v1523 = vsub.f32 %v1521, %v1522
    %v1524 = vand.u32 %v1523, 4294901760
    %1525 = vmatpush.msra.mxu0 %v1524
    %v1526 = vand.u32 %v437, 4294901760
    %v1527 = vsub.f32 %v437, %v1526
    %v1528 = vand.u32 %v1527, 4294901760
    %v1529 = vsub.f32 %v1527, %v1528
    %v1530 = vand.u32 %v1529, 4294901760
    %1531 = vmatpush.msra.mxu0 %v1530
    %v1532 = vand.u32 %v435, 4294901760
    %v1533 = vsub.f32 %v435, %v1532
    %v1534 = vand.u32 %v1533, 4294901760
    %v1535 = vsub.f32 %v1533, %v1534
    %v1536 = vand.u32 %v1535, 4294901760
    %1537 = vmatpush.msra.mxu0 %v1536
    %v1538 = vand.u32 %v433, 4294901760
    %v1539 = vsub.f32 %v433, %v1538
    %v1540 = vand.u32 %v1539, 4294901760
    %v1541 = vsub.f32 %v1539, %v1540
    %v1542 = vand.u32 %v1541, 4294901760
    %1543 = vmatpush.msra.mxu0 %v1542
    %v1544 = vand.u32 %v431, 4294901760
    %v1545 = vsub.f32 %v431, %v1544
    %v1546 = vand.u32 %v1545, 4294901760
    %v1547 = vsub.f32 %v1545, %v1546
    %v1548 = vand.u32 %v1547, 4294901760
    %1549 = vmatpush.msra.mxu0 %v1548
    %v1550 = vand.u32 %v429, 4294901760
    %v1551 = vsub.f32 %v429, %v1550
    %v1552 = vand.u32 %v1551, 4294901760
    %v1553 = vsub.f32 %v1551, %v1552
    %v1554 = vand.u32 %v1553, 4294901760
    %1555 = vmatpush.msra.mxu0 %v1554
    %v1556 = vand.u32 %v427, 4294901760
    %v1557 = vsub.f32 %v427, %v1556
    %v1558 = vand.u32 %v1557, 4294901760
    %v1559 = vsub.f32 %v1557, %v1558
    %v1560 = vand.u32 %v1559, 4294901760
    %1561 = vmatpush.msra.mxu0 %v1560
    %v1562 = vand.u32 %v425, 4294901760
    %v1563 = vsub.f32 %v425, %v1562
    %v1564 = vand.u32 %v1563, 4294901760
    %v1565 = vsub.f32 %v1563, %v1564
    %v1566 = vand.u32 %v1565, 4294901760
    %1567 = vmatpush.msra.mxu0 %v1566
    %v1568 = vand.u32 %v423, 4294901760
    %v1569 = vsub.f32 %v423, %v1568
    %v1570 = vand.u32 %v1569, 4294901760
    %v1571 = vsub.f32 %v1569, %v1570
    %v1572 = vand.u32 %v1571, 4294901760
    %1573 = vmatpush.msra.mxu0 %v1572
    %v1574 = vand.u32 %v421, 4294901760
    %v1575 = vsub.f32 %v421, %v1574
    %v1576 = vand.u32 %v1575, 4294901760
    %v1577 = vsub.f32 %v1575, %v1576
    %v1578 = vand.u32 %v1577, 4294901760
    %1579 = vmatpush.msra.mxu0 %v1578
    %v1580 = vand.u32 %v419, 4294901760
    %v1581 = vsub.f32 %v419, %v1580
    %v1582 = vand.u32 %v1581, 4294901760
    %v1583 = vsub.f32 %v1581, %v1582
    %v1584 = vand.u32 %v1583, 4294901760
    %1585 = vmatpush.msra.mxu0 %v1584
    %v1586 = vand.u32 %v417, 4294901760
    %v1587 = vsub.f32 %v417, %v1586
    %v1588 = vand.u32 %v1587, 4294901760
    %v1589 = vsub.f32 %v1587, %v1588
    %v1590 = vand.u32 %v1589, 4294901760
    %1591 = vmatpush.msra.mxu0 %v1590
    %v1592 = vand.u32 %v415, 4294901760
    %v1593 = vsub.f32 %v415, %v1592
    %v1594 = vand.u32 %v1593, 4294901760
    %v1595 = vsub.f32 %v1593, %v1594
    %v1596 = vand.u32 %v1595, 4294901760
    %1597 = vmatpush.msra.mxu0 %v1596
    %v1598 = vand.u32 %v413, 4294901760
    %v1599 = vsub.f32 %v413, %v1598
    %v1600 = vand.u32 %v1599, 4294901760
    %v1601 = vsub.f32 %v1599, %v1600
    %v1602 = vand.u32 %v1601, 4294901760
    %1603 = vmatpush.msra.mxu0 %v1602
    %v1604 = vand.u32 %v378, 4294901760
    %1605 = vmatmul.f32.gmra.mxu0 %v1604
    %v1606 = vpop.f32.mrf.mxu0
    %v1607 = vadd.f32 %v1506, %v1606
    %1608 = vdwg.mxu0
    %v1609 = vand.u32 %v443, 4294901760
    %v1610 = vsub.f32 %v443, %v1609
    %1611 = vmatpush.msra.mxu0 %v1610
    %v1612 = vand.u32 %v441, 4294901760
    %v1613 = vsub.f32 %v441, %v1612
    %1614 = vmatpush.msra.mxu0 %v1613
    %v1615 = vand.u32 %v439, 4294901760
    %v1616 = vsub.f32 %v439, %v1615
    %1617 = vmatpush.msra.mxu0 %v1616
    %v1618 = vand.u32 %v437, 4294901760
    %v1619 = vsub.f32 %v437, %v1618
    %1620 = vmatpush.msra.mxu0 %v1619
    %v1621 = vand.u32 %v435, 4294901760
    %v1622 = vsub.f32 %v435, %v1621
    %1623 = vmatpush.msra.mxu0 %v1622
    %v1624 = vand.u32 %v433, 4294901760
    %v1625 = vsub.f32 %v433, %v1624
    %1626 = vmatpush.msra.mxu0 %v1625
    %v1627 = vand.u32 %v431, 4294901760
    %v1628 = vsub.f32 %v431, %v1627
    %1629 = vmatpush.msra.mxu0 %v1628
    %v1630 = vand.u32 %v429, 4294901760
    %v1631 = vsub.f32 %v429, %v1630
    %1632 = vmatpush.msra.mxu0 %v1631
    %v1633 = vand.u32 %v427, 4294901760
    %v1634 = vsub.f32 %v427, %v1633
    %1635 = vmatpush.msra.mxu0 %v1634
    %v1636 = vand.u32 %v425, 4294901760
    %v1637 = vsub.f32 %v425, %v1636
    %1638 = vmatpush.msra.mxu0 %v1637
    %v1639 = vand.u32 %v423, 4294901760
    %v1640 = vsub.f32 %v423, %v1639
    %1641 = vmatpush.msra.mxu0 %v1640
    %v1642 = vand.u32 %v421, 4294901760
    %v1643 = vsub.f32 %v421, %v1642
    %1644 = vmatpush.msra.mxu0 %v1643
    %v1645 = vand.u32 %v419, 4294901760
    %v1646 = vsub.f32 %v419, %v1645
    %1647 = vmatpush.msra.mxu0 %v1646
    %v1648 = vand.u32 %v417, 4294901760
    %v1649 = vsub.f32 %v417, %v1648
    %1650 = vmatpush.msra.mxu0 %v1649
    %v1651 = vand.u32 %v415, 4294901760
    %v1652 = vsub.f32 %v415, %v1651
    %1653 = vmatpush.msra.mxu0 %v1652
    %v1654 = vand.u32 %v413, 4294901760
    %v1655 = vsub.f32 %v413, %v1654
    %1656 = vmatpush.msra.mxu0 %v1655
    %v1657 = vand.u32 %v378, 4294901760
    %v1658 = vsub.f32 %v378, %v1657
    %1659 = vmatmul.f32.gmra.mxu0 %v1658
    %v1660 = vpop.f32.mrf.mxu0
    %v1661 = vadd.f32 %v1607, %v1660
    %1662 = vdwg.mxu0
    %v1663 = vand.u32 %v443, 4294901760
    %1664 = vmatpush.msra.mxu0 %v1663
    %v1665 = vand.u32 %v441, 4294901760
    %1666 = vmatpush.msra.mxu0 %v1665
    %v1667 = vand.u32 %v439, 4294901760
    %1668 = vmatpush.msra.mxu0 %v1667
    %v1669 = vand.u32 %v437, 4294901760
    %1670 = vmatpush.msra.mxu0 %v1669
    %v1671 = vand.u32 %v435, 4294901760
    %1672 = vmatpush.msra.mxu0 %v1671
    %v1673 = vand.u32 %v433, 4294901760
    %1674 = vmatpush.msra.mxu0 %v1673
    %v1675 = vand.u32 %v431, 4294901760
    %1676 = vmatpush.msra.mxu0 %v1675
    %v1677 = vand.u32 %v429, 4294901760
    %1678 = vmatpush.msra.mxu0 %v1677
    %v1679 = vand.u32 %v427, 4294901760
    %1680 = vmatpush.msra.mxu0 %v1679
    %v1681 = vand.u32 %v425, 4294901760
    %1682 = vmatpush.msra.mxu0 %v1681
    %v1683 = vand.u32 %v423, 4294901760
    %1684 = vmatpush.msra.mxu0 %v1683
    %v1685 = vand.u32 %v421, 4294901760
    %1686 = vmatpush.msra.mxu0 %v1685
    %v1687 = vand.u32 %v419, 4294901760
    %1688 = vmatpush.msra.mxu0 %v1687
    %v1689 = vand.u32 %v417, 4294901760
    %1690 = vmatpush.msra.mxu0 %v1689
    %v1691 = vand.u32 %v415, 4294901760
    %1692 = vmatpush.msra.mxu0 %v1691
    %v1693 = vand.u32 %v413, 4294901760
    %1694 = vmatpush.msra.mxu0 %v1693
    %v1695 = vand.u32 %v378, 4294901760
    %v1696 = vsub.f32 %v378, %v1695
    %v1697 = vand.u32 %v1696, 4294901760
    %1698 = vmatmul.f32.gmra.mxu0 %v1697
    %v1699 = vpop.f32.mrf.mxu0
    %v1700 = vadd.f32 %v1661, %v1699
    %1701 = vdwg.mxu0
    %v1702 = vand.u32 %v443, 4294901760
    %v1703 = vsub.f32 %v443, %v1702
    %v1704 = vand.u32 %v1703, 4294901760
    %1705 = vmatpush.msra.mxu0 %v1704
    %v1706 = vand.u32 %v441, 4294901760
    %v1707 = vsub.f32 %v441, %v1706
    %v1708 = vand.u32 %v1707, 4294901760
    %1709 = vmatpush.msra.mxu0 %v1708
    %v1710 = vand.u32 %v439, 4294901760
    %v1711 = vsub.f32 %v439, %v1710
    %v1712 = vand.u32 %v1711, 4294901760
    %1713 = vmatpush.msra.mxu0 %v1712
    %v1714 = vand.u32 %v437, 4294901760
    %v1715 = vsub.f32 %v437, %v1714
    %v1716 = vand.u32 %v1715, 4294901760
    %1717 = vmatpush.msra.mxu0 %v1716
    %v1718 = vand.u32 %v435, 4294901760
    %v1719 = vsub.f32 %v435, %v1718
    %v1720 = vand.u32 %v1719, 4294901760
    %1721 = vmatpush.msra.mxu0 %v1720
    %v1722 = vand.u32 %v433, 4294901760
    %v1723 = vsub.f32 %v433, %v1722
    %v1724 = vand.u32 %v1723, 4294901760
    %1725 = vmatpush.msra.mxu0 %v1724
    %v1726 = vand.u32 %v431, 4294901760
    %v1727 = vsub.f32 %v431, %v1726
    %v1728 = vand.u32 %v1727, 4294901760
    %1729 = vmatpush.msra.mxu0 %v1728
    %v1730 = vand.u32 %v429, 4294901760
    %v1731 = vsub.f32 %v429, %v1730
    %v1732 = vand.u32 %v1731, 4294901760
    %1733 = vmatpush.msra.mxu0 %v1732
    %v1734 = vand.u32 %v427, 4294901760
    %v1735 = vsub.f32 %v427, %v1734
    %v1736 = vand.u32 %v1735, 4294901760
    %1737 = vmatpush.msra.mxu0 %v1736
    %v1738 = vand.u32 %v425, 4294901760
    %v1739 = vsub.f32 %v425, %v1738
    %v1740 = vand.u32 %v1739, 4294901760
    %1741 = vmatpush.msra.mxu0 %v1740
    %v1742 = vand.u32 %v423, 4294901760
    %v1743 = vsub.f32 %v423, %v1742
    %v1744 = vand.u32 %v1743, 4294901760
    %1745 = vmatpush.msra.mxu0 %v1744
    %v1746 = vand.u32 %v421, 4294901760
    %v1747 = vsub.f32 %v421, %v1746
    %v1748 = vand.u32 %v1747, 4294901760
    %1749 = vmatpush.msra.mxu0 %v1748
    %v1750 = vand.u32 %v419, 4294901760
    %v1751 = vsub.f32 %v419, %v1750
    %v1752 = vand.u32 %v1751, 4294901760
    %1753 = vmatpush.msra.mxu0 %v1752
    %v1754 = vand.u32 %v417, 4294901760
    %v1755 = vsub.f32 %v417, %v1754
    %v1756 = vand.u32 %v1755, 4294901760
    %1757 = vmatpush.msra.mxu0 %v1756
    %v1758 = vand.u32 %v415, 4294901760
    %v1759 = vsub.f32 %v415, %v1758
    %v1760 = vand.u32 %v1759, 4294901760
    %1761 = vmatpush.msra.mxu0 %v1760
    %v1762 = vand.u32 %v413, 4294901760
    %v1763 = vsub.f32 %v413, %v1762
    %v1764 = vand.u32 %v1763, 4294901760
    %1765 = vmatpush.msra.mxu0 %v1764
    %v1766 = vand.u32 %v378, 4294901760
    %1767 = vmatmul.f32.gmra.mxu0 %v1766
    %v1768 = vpop.f32.mrf.mxu0
    %v1769 = vadd.f32 %v1700, %v1768
    %1770 = vdwg.mxu0
    %v1771 = vand.u32 %v443, 4294901760
    %1772 = vmatpush.msra.mxu0 %v1771
    %v1773 = vand.u32 %v441, 4294901760
    %1774 = vmatpush.msra.mxu0 %v1773
    %v1775 = vand.u32 %v439, 4294901760
    %1776 = vmatpush.msra.mxu0 %v1775
    %v1777 = vand.u32 %v437, 4294901760
    %1778 = vmatpush.msra.mxu0 %v1777
    %v1779 = vand.u32 %v435, 4294901760
    %1780 = vmatpush.msra.mxu0 %v1779
    %v1781 = vand.u32 %v433, 4294901760
    %1782 = vmatpush.msra.mxu0 %v1781
    %v1783 = vand.u32 %v431, 4294901760
    %1784 = vmatpush.msra.mxu0 %v1783
    %v1785 = vand.u32 %v429, 4294901760
    %1786 = vmatpush.msra.mxu0 %v1785
    %v1787 = vand.u32 %v427, 4294901760
    %1788 = vmatpush.msra.mxu0 %v1787
    %v1789 = vand.u32 %v425, 4294901760
    %1790 = vmatpush.msra.mxu0 %v1789
    %v1791 = vand.u32 %v423, 4294901760
    %1792 = vmatpush.msra.mxu0 %v1791
    %v1793 = vand.u32 %v421, 4294901760
    %1794 = vmatpush.msra.mxu0 %v1793
    %v1795 = vand.u32 %v419, 4294901760
    %1796 = vmatpush.msra.mxu0 %v1795
    %v1797 = vand.u32 %v417, 4294901760
    %1798 = vmatpush.msra.mxu0 %v1797
    %v1799 = vand.u32 %v415, 4294901760
    %1800 = vmatpush.msra.mxu0 %v1799
    %v1801 = vand.u32 %v413, 4294901760
    %1802 = vmatpush.msra.mxu0 %v1801
    %v1803 = vand.u32 %v378, 4294901760
    %1804 = vmatmul.f32.gmra.mxu0 %v1803
    %v1805 = vpop.f32.mrf.mxu0
    %v1806 = vadd.f32 %v1769, %v1805
    %1807 = vdwg.mxu0
    %v1808 = vsub.f32 %v232, %v1124
    %v1809 = vsub.f32 %v378, %v1806
    %v1810 = vmul.f32 %v1808, %v1808
    %v1811 = vmul.f32 %v1809, %v1809
    %v1812 = vand.u32 %v410, 4294901760
    %1813 = vmatpush.msra.mxu0 %v1812
    %v1814 = vand.u32 %v408, 4294901760
    %1815 = vmatpush.msra.mxu0 %v1814
    %v1816 = vand.u32 %v406, 4294901760
    %1817 = vmatpush.msra.mxu0 %v1816
    %v1818 = vand.u32 %v404, 4294901760
    %1819 = vmatpush.msra.mxu0 %v1818
    %v1820 = vand.u32 %v402, 4294901760
    %1821 = vmatpush.msra.mxu0 %v1820
    %v1822 = vand.u32 %v400, 4294901760
    %1823 = vmatpush.msra.mxu0 %v1822
    %v1824 = vand.u32 %v398, 4294901760
    %1825 = vmatpush.msra.mxu0 %v1824
    %v1826 = vand.u32 %v396, 4294901760
    %1827 = vmatpush.msra.mxu0 %v1826
    %v1828 = vand.u32 %v394, 4294901760
    %1829 = vmatpush.msra.mxu0 %v1828
    %v1830 = vand.u32 %v392, 4294901760
    %1831 = vmatpush.msra.mxu0 %v1830
    %v1832 = vand.u32 %v390, 4294901760
    %1833 = vmatpush.msra.mxu0 %v1832
    %v1834 = vand.u32 %v388, 4294901760
    %1835 = vmatpush.msra.mxu0 %v1834
    %v1836 = vand.u32 %v386, 4294901760
    %1837 = vmatpush.msra.mxu0 %v1836
    %v1838 = vand.u32 %v384, 4294901760
    %1839 = vmatpush.msra.mxu0 %v1838
    %v1840 = vand.u32 %v382, 4294901760
    %1841 = vmatpush.msra.mxu0 %v1840
    %v1842 = vand.u32 %v380, 4294901760
    %1843 = vmatpush.msra.mxu0 %v1842
    %v1844 = vand.u32 %v1810, 4294901760
    %v1845 = vsub.f32 %v1810, %v1844
    %v1846 = vand.u32 %v1845, 4294901760
    %v1847 = vsub.f32 %v1845, %v1846
    %v1848 = vand.u32 %v1847, 4294901760
    %1849 = vmatmul.f32.gmra.mxu0 %v1848
    %v1850 = vpop.f32.mrf.mxu0
    %v1851 = vadd.f32 1e-12, %v1850
    %1852 = vdwg.mxu0
    %v1853 = vand.u32 %v410, 4294901760
    %v1854 = vsub.f32 %v410, %v1853
    %v1855 = vand.u32 %v1854, 4294901760
    %v1856 = vsub.f32 %v1854, %v1855
    %v1857 = vand.u32 %v1856, 4294901760
    %1858 = vmatpush.msra.mxu0 %v1857
    %v1859 = vand.u32 %v408, 4294901760
    %v1860 = vsub.f32 %v408, %v1859
    %v1861 = vand.u32 %v1860, 4294901760
    %v1862 = vsub.f32 %v1860, %v1861
    %v1863 = vand.u32 %v1862, 4294901760
    %1864 = vmatpush.msra.mxu0 %v1863
    %v1865 = vand.u32 %v406, 4294901760
    %v1866 = vsub.f32 %v406, %v1865
    %v1867 = vand.u32 %v1866, 4294901760
    %v1868 = vsub.f32 %v1866, %v1867
    %v1869 = vand.u32 %v1868, 4294901760
    %1870 = vmatpush.msra.mxu0 %v1869
    %v1871 = vand.u32 %v404, 4294901760
    %v1872 = vsub.f32 %v404, %v1871
    %v1873 = vand.u32 %v1872, 4294901760
    %v1874 = vsub.f32 %v1872, %v1873
    %v1875 = vand.u32 %v1874, 4294901760
    %1876 = vmatpush.msra.mxu0 %v1875
    %v1877 = vand.u32 %v402, 4294901760
    %v1878 = vsub.f32 %v402, %v1877
    %v1879 = vand.u32 %v1878, 4294901760
    %v1880 = vsub.f32 %v1878, %v1879
    %v1881 = vand.u32 %v1880, 4294901760
    %1882 = vmatpush.msra.mxu0 %v1881
    %v1883 = vand.u32 %v400, 4294901760
    %v1884 = vsub.f32 %v400, %v1883
    %v1885 = vand.u32 %v1884, 4294901760
    %v1886 = vsub.f32 %v1884, %v1885
    %v1887 = vand.u32 %v1886, 4294901760
    %1888 = vmatpush.msra.mxu0 %v1887
    %v1889 = vand.u32 %v398, 4294901760
    %v1890 = vsub.f32 %v398, %v1889
    %v1891 = vand.u32 %v1890, 4294901760
    %v1892 = vsub.f32 %v1890, %v1891
    %v1893 = vand.u32 %v1892, 4294901760
    %1894 = vmatpush.msra.mxu0 %v1893
    %v1895 = vand.u32 %v396, 4294901760
    %v1896 = vsub.f32 %v396, %v1895
    %v1897 = vand.u32 %v1896, 4294901760
    %v1898 = vsub.f32 %v1896, %v1897
    %v1899 = vand.u32 %v1898, 4294901760
    %1900 = vmatpush.msra.mxu0 %v1899
    %v1901 = vand.u32 %v394, 4294901760
    %v1902 = vsub.f32 %v394, %v1901
    %v1903 = vand.u32 %v1902, 4294901760
    %v1904 = vsub.f32 %v1902, %v1903
    %v1905 = vand.u32 %v1904, 4294901760
    %1906 = vmatpush.msra.mxu0 %v1905
    %v1907 = vand.u32 %v392, 4294901760
    %v1908 = vsub.f32 %v392, %v1907
    %v1909 = vand.u32 %v1908, 4294901760
    %v1910 = vsub.f32 %v1908, %v1909
    %v1911 = vand.u32 %v1910, 4294901760
    %1912 = vmatpush.msra.mxu0 %v1911
    %v1913 = vand.u32 %v390, 4294901760
    %v1914 = vsub.f32 %v390, %v1913
    %v1915 = vand.u32 %v1914, 4294901760
    %v1916 = vsub.f32 %v1914, %v1915
    %v1917 = vand.u32 %v1916, 4294901760
    %1918 = vmatpush.msra.mxu0 %v1917
    %v1919 = vand.u32 %v388, 4294901760
    %v1920 = vsub.f32 %v388, %v1919
    %v1921 = vand.u32 %v1920, 4294901760
    %v1922 = vsub.f32 %v1920, %v1921
    %v1923 = vand.u32 %v1922, 4294901760
    %1924 = vmatpush.msra.mxu0 %v1923
    %v1925 = vand.u32 %v386, 4294901760
    %v1926 = vsub.f32 %v386, %v1925
    %v1927 = vand.u32 %v1926, 4294901760
    %v1928 = vsub.f32 %v1926, %v1927
    %v1929 = vand.u32 %v1928, 4294901760
    %1930 = vmatpush.msra.mxu0 %v1929
    %v1931 = vand.u32 %v384, 4294901760
    %v1932 = vsub.f32 %v384, %v1931
    %v1933 = vand.u32 %v1932, 4294901760
    %v1934 = vsub.f32 %v1932, %v1933
    %v1935 = vand.u32 %v1934, 4294901760
    %1936 = vmatpush.msra.mxu0 %v1935
    %v1937 = vand.u32 %v382, 4294901760
    %v1938 = vsub.f32 %v382, %v1937
    %v1939 = vand.u32 %v1938, 4294901760
    %v1940 = vsub.f32 %v1938, %v1939
    %v1941 = vand.u32 %v1940, 4294901760
    %1942 = vmatpush.msra.mxu0 %v1941
    %v1943 = vand.u32 %v380, 4294901760
    %v1944 = vsub.f32 %v380, %v1943
    %v1945 = vand.u32 %v1944, 4294901760
    %v1946 = vsub.f32 %v1944, %v1945
    %v1947 = vand.u32 %v1946, 4294901760
    %1948 = vmatpush.msra.mxu0 %v1947
    %v1949 = vand.u32 %v1810, 4294901760
    %1950 = vmatmul.f32.gmra.mxu0 %v1949
    %v1951 = vpop.f32.mrf.mxu0
    %v1952 = vadd.f32 %v1851, %v1951
    %1953 = vdwg.mxu0
    %v1954 = vand.u32 %v410, 4294901760
    %v1955 = vsub.f32 %v410, %v1954
    %1956 = vmatpush.msra.mxu0 %v1955
    %v1957 = vand.u32 %v408, 4294901760
    %v1958 = vsub.f32 %v408, %v1957
    %1959 = vmatpush.msra.mxu0 %v1958
    %v1960 = vand.u32 %v406, 4294901760
    %v1961 = vsub.f32 %v406, %v1960
    %1962 = vmatpush.msra.mxu0 %v1961
    %v1963 = vand.u32 %v404, 4294901760
    %v1964 = vsub.f32 %v404, %v1963
    %1965 = vmatpush.msra.mxu0 %v1964
    %v1966 = vand.u32 %v402, 4294901760
    %v1967 = vsub.f32 %v402, %v1966
    %1968 = vmatpush.msra.mxu0 %v1967
    %v1969 = vand.u32 %v400, 4294901760
    %v1970 = vsub.f32 %v400, %v1969
    %1971 = vmatpush.msra.mxu0 %v1970
    %v1972 = vand.u32 %v398, 4294901760
    %v1973 = vsub.f32 %v398, %v1972
    %1974 = vmatpush.msra.mxu0 %v1973
    %v1975 = vand.u32 %v396, 4294901760
    %v1976 = vsub.f32 %v396, %v1975
    %1977 = vmatpush.msra.mxu0 %v1976
    %v1978 = vand.u32 %v394, 4294901760
    %v1979 = vsub.f32 %v394, %v1978
    %1980 = vmatpush.msra.mxu0 %v1979
    %v1981 = vand.u32 %v392, 4294901760
    %v1982 = vsub.f32 %v392, %v1981
    %1983 = vmatpush.msra.mxu0 %v1982
    %v1984 = vand.u32 %v390, 4294901760
    %v1985 = vsub.f32 %v390, %v1984
    %1986 = vmatpush.msra.mxu0 %v1985
    %v1987 = vand.u32 %v388, 4294901760
    %v1988 = vsub.f32 %v388, %v1987
    %1989 = vmatpush.msra.mxu0 %v1988
    %v1990 = vand.u32 %v386, 4294901760
    %v1991 = vsub.f32 %v386, %v1990
    %1992 = vmatpush.msra.mxu0 %v1991
    %v1993 = vand.u32 %v384, 4294901760
    %v1994 = vsub.f32 %v384, %v1993
    %1995 = vmatpush.msra.mxu0 %v1994
    %v1996 = vand.u32 %v382, 4294901760
    %v1997 = vsub.f32 %v382, %v1996
    %1998 = vmatpush.msra.mxu0 %v1997
    %v1999 = vand.u32 %v380, 4294901760
    %v2000 = vsub.f32 %v380, %v1999
    %2001 = vmatpush.msra.mxu0 %v2000
    %v2002 = vand.u32 %v1810, 4294901760
    %v2003 = vsub.f32 %v1810, %v2002
    %2004 = vmatmul.f32.gmra.mxu0 %v2003
    %v2005 = vpop.f32.mrf.mxu0
    %v2006 = vadd.f32 %v1952, %v2005
    %2007 = vdwg.mxu0
    %v2008 = vand.u32 %v410, 4294901760
    %2009 = vmatpush.msra.mxu0 %v2008
    %v2010 = vand.u32 %v408, 4294901760
    %2011 = vmatpush.msra.mxu0 %v2010
    %v2012 = vand.u32 %v406, 4294901760
    %2013 = vmatpush.msra.mxu0 %v2012
    %v2014 = vand.u32 %v404, 4294901760
    %2015 = vmatpush.msra.mxu0 %v2014
    %v2016 = vand.u32 %v402, 4294901760
    %2017 = vmatpush.msra.mxu0 %v2016
    %v2018 = vand.u32 %v400, 4294901760
    %2019 = vmatpush.msra.mxu0 %v2018
    %v2020 = vand.u32 %v398, 4294901760
    %2021 = vmatpush.msra.mxu0 %v2020
    %v2022 = vand.u32 %v396, 4294901760
    %2023 = vmatpush.msra.mxu0 %v2022
    %v2024 = vand.u32 %v394, 4294901760
    %2025 = vmatpush.msra.mxu0 %v2024
    %v2026 = vand.u32 %v392, 4294901760
    %2027 = vmatpush.msra.mxu0 %v2026
    %v2028 = vand.u32 %v390, 4294901760
    %2029 = vmatpush.msra.mxu0 %v2028
    %v2030 = vand.u32 %v388, 4294901760
    %2031 = vmatpush.msra.mxu0 %v2030
    %v2032 = vand.u32 %v386, 4294901760
    %2033 = vmatpush.msra.mxu0 %v2032
    %v2034 = vand.u32 %v384, 4294901760
    %2035 = vmatpush.msra.mxu0 %v2034
    %v2036 = vand.u32 %v382, 4294901760
    %2037 = vmatpush.msra.mxu0 %v2036
    %v2038 = vand.u32 %v380, 4294901760
    %2039 = vmatpush.msra.mxu0 %v2038
    %v2040 = vand.u32 %v1810, 4294901760
    %v2041 = vsub.f32 %v1810, %v2040
    %v2042 = vand.u32 %v2041, 4294901760
    %2043 = vmatmul.f32.gmra.mxu0 %v2042
    %v2044 = vpop.f32.mrf.mxu0
    %v2045 = vadd.f32 %v2006, %v2044
    %2046 = vdwg.mxu0
    %v2047 = vand.u32 %v410, 4294901760
    %v2048 = vsub.f32 %v410, %v2047
    %v2049 = vand.u32 %v2048, 4294901760
    %2050 = vmatpush.msra.mxu0 %v2049
    %v2051 = vand.u32 %v408, 4294901760
    %v2052 = vsub.f32 %v408, %v2051
    %v2053 = vand.u32 %v2052, 4294901760
    %2054 = vmatpush.msra.mxu0 %v2053
    %v2055 = vand.u32 %v406, 4294901760
    %v2056 = vsub.f32 %v406, %v2055
    %v2057 = vand.u32 %v2056, 4294901760
    %2058 = vmatpush.msra.mxu0 %v2057
    %v2059 = vand.u32 %v404, 4294901760
    %v2060 = vsub.f32 %v404, %v2059
    %v2061 = vand.u32 %v2060, 4294901760
    %2062 = vmatpush.msra.mxu0 %v2061
    %v2063 = vand.u32 %v402, 4294901760
    %v2064 = vsub.f32 %v402, %v2063
    %v2065 = vand.u32 %v2064, 4294901760
    %2066 = vmatpush.msra.mxu0 %v2065
    %v2067 = vand.u32 %v400, 4294901760
    %v2068 = vsub.f32 %v400, %v2067
    %v2069 = vand.u32 %v2068, 4294901760
    %2070 = vmatpush.msra.mxu0 %v2069
    %v2071 = vand.u32 %v398, 4294901760
    %v2072 = vsub.f32 %v398, %v2071
    %v2073 = vand.u32 %v2072, 4294901760
    %2074 = vmatpush.msra.mxu0 %v2073
    %v2075 = vand.u32 %v396, 4294901760
    %v2076 = vsub.f32 %v396, %v2075
    %v2077 = vand.u32 %v2076, 4294901760
    %2078 = vmatpush.msra.mxu0 %v2077
    %v2079 = vand.u32 %v394, 4294901760
    %v2080 = vsub.f32 %v394, %v2079
    %v2081 = vand.u32 %v2080, 4294901760
    %2082 = vmatpush.msra.mxu0 %v2081
    %v2083 = vand.u32 %v392, 4294901760
    %v2084 = vsub.f32 %v392, %v2083
    %v2085 = vand.u32 %v2084, 4294901760
    %2086 = vmatpush.msra.mxu0 %v2085
    %v2087 = vand.u32 %v390, 4294901760
    %v2088 = vsub.f32 %v390, %v2087
    %v2089 = vand.u32 %v2088, 4294901760
    %2090 = vmatpush.msra.mxu0 %v2089
    %v2091 = vand.u32 %v388, 4294901760
    %v2092 = vsub.f32 %v388, %v2091
    %v2093 = vand.u32 %v2092, 4294901760
    %2094 = vmatpush.msra.mxu0 %v2093
    %v2095 = vand.u32 %v386, 4294901760
    %v2096 = vsub.f32 %v386, %v2095
    %v2097 = vand.u32 %v2096, 4294901760
    %2098 = vmatpush.msra.mxu0 %v2097
    %v2099 = vand.u32 %v384, 4294901760
    %v2100 = vsub.f32 %v384, %v2099
    %v2101 = vand.u32 %v2100, 4294901760
    %2102 = vmatpush.msra.mxu0 %v2101
    %v2103 = vand.u32 %v382, 4294901760
    %v2104 = vsub.f32 %v382, %v2103
    %v2105 = vand.u32 %v2104, 4294901760
    %2106 = vmatpush.msra.mxu0 %v2105
    %v2107 = vand.u32 %v380, 4294901760
    %v2108 = vsub.f32 %v380, %v2107
    %v2109 = vand.u32 %v2108, 4294901760
    %2110 = vmatpush.msra.mxu0 %v2109
    %v2111 = vand.u32 %v1810, 4294901760
    %2112 = vmatmul.f32.gmra.mxu0 %v2111
    %v2113 = vpop.f32.mrf.mxu0
    %v2114 = vadd.f32 %v2045, %v2113
    %2115 = vdwg.mxu0
    %v2116 = vand.u32 %v410, 4294901760
    %2117 = vmatpush.msra.mxu0 %v2116
    %v2118 = vand.u32 %v408, 4294901760
    %2119 = vmatpush.msra.mxu0 %v2118
    %v2120 = vand.u32 %v406, 4294901760
    %2121 = vmatpush.msra.mxu0 %v2120
    %v2122 = vand.u32 %v404, 4294901760
    %2123 = vmatpush.msra.mxu0 %v2122
    %v2124 = vand.u32 %v402, 4294901760
    %2125 = vmatpush.msra.mxu0 %v2124
    %v2126 = vand.u32 %v400, 4294901760
    %2127 = vmatpush.msra.mxu0 %v2126
    %v2128 = vand.u32 %v398, 4294901760
    %2129 = vmatpush.msra.mxu0 %v2128
    %v2130 = vand.u32 %v396, 4294901760
    %2131 = vmatpush.msra.mxu0 %v2130
    %v2132 = vand.u32 %v394, 4294901760
    %2133 = vmatpush.msra.mxu0 %v2132
    %v2134 = vand.u32 %v392, 4294901760
    %2135 = vmatpush.msra.mxu0 %v2134
    %v2136 = vand.u32 %v390, 4294901760
    %2137 = vmatpush.msra.mxu0 %v2136
    %v2138 = vand.u32 %v388, 4294901760
    %2139 = vmatpush.msra.mxu0 %v2138
    %v2140 = vand.u32 %v386, 4294901760
    %2141 = vmatpush.msra.mxu0 %v2140
    %v2142 = vand.u32 %v384, 4294901760
    %2143 = vmatpush.msra.mxu0 %v2142
    %v2144 = vand.u32 %v382, 4294901760
    %2145 = vmatpush.msra.mxu0 %v2144
    %v2146 = vand.u32 %v380, 4294901760
    %2147 = vmatpush.msra.mxu0 %v2146
    %v2148 = vand.u32 %v1810, 4294901760
    %2149 = vmatmul.f32.gmra.mxu0 %v2148
    %v2150 = vpop.f32.mrf.mxu0
    %v2151 = vadd.f32 %v2114, %v2150
    %2152 = vdwg.mxu0
    %v2153 = vand.u32 %v442, 4294901760
    %2154 = vmatpush.msra.mxu0 %v2153
    %v2155 = vand.u32 %v440, 4294901760
    %2156 = vmatpush.msra.mxu0 %v2155
    %v2157 = vand.u32 %v438, 4294901760
    %2158 = vmatpush.msra.mxu0 %v2157
    %v2159 = vand.u32 %v436, 4294901760
    %2160 = vmatpush.msra.mxu0 %v2159
    %v2161 = vand.u32 %v434, 4294901760
    %2162 = vmatpush.msra.mxu0 %v2161
    %v2163 = vand.u32 %v432, 4294901760
    %2164 = vmatpush.msra.mxu0 %v2163
    %v2165 = vand.u32 %v430, 4294901760
    %2166 = vmatpush.msra.mxu0 %v2165
    %v2167 = vand.u32 %v428, 4294901760
    %2168 = vmatpush.msra.mxu0 %v2167
    %v2169 = vand.u32 %v426, 4294901760
    %2170 = vmatpush.msra.mxu0 %v2169
    %v2171 = vand.u32 %v424, 4294901760
    %2172 = vmatpush.msra.mxu0 %v2171
    %v2173 = vand.u32 %v422, 4294901760
    %2174 = vmatpush.msra.mxu0 %v2173
    %v2175 = vand.u32 %v420, 4294901760
    %2176 = vmatpush.msra.mxu0 %v2175
    %v2177 = vand.u32 %v418, 4294901760
    %2178 = vmatpush.msra.mxu0 %v2177
    %v2179 = vand.u32 %v416, 4294901760
    %2180 = vmatpush.msra.mxu0 %v2179
    %v2181 = vand.u32 %v414, 4294901760
    %2182 = vmatpush.msra.mxu0 %v2181
    %v2183 = vand.u32 %v412, 4294901760
    %2184 = vmatpush.msra.mxu0 %v2183
    %v2185 = vand.u32 %v1811, 4294901760
    %v2186 = vsub.f32 %v1811, %v2185
    %v2187 = vand.u32 %v2186, 4294901760
    %v2188 = vsub.f32 %v2186, %v2187
    %v2189 = vand.u32 %v2188, 4294901760
    %2190 = vmatmul.f32.gmra.mxu0 %v2189
    %v2191 = vpop.f32.mrf.mxu0
    %v2192 = vadd.f32 %v2151, %v2191
    %2193 = vdwg.mxu0
    %v2194 = vand.u32 %v442, 4294901760
    %v2195 = vsub.f32 %v442, %v2194
    %v2196 = vand.u32 %v2195, 4294901760
    %v2197 = vsub.f32 %v2195, %v2196
    %v2198 = vand.u32 %v2197, 4294901760
    %2199 = vmatpush.msra.mxu0 %v2198
    %v2200 = vand.u32 %v440, 4294901760
    %v2201 = vsub.f32 %v440, %v2200
    %v2202 = vand.u32 %v2201, 4294901760
    %v2203 = vsub.f32 %v2201, %v2202
    %v2204 = vand.u32 %v2203, 4294901760
    %2205 = vmatpush.msra.mxu0 %v2204
    %v2206 = vand.u32 %v438, 4294901760
    %v2207 = vsub.f32 %v438, %v2206
    %v2208 = vand.u32 %v2207, 4294901760
    %v2209 = vsub.f32 %v2207, %v2208
    %v2210 = vand.u32 %v2209, 4294901760
    %2211 = vmatpush.msra.mxu0 %v2210
    %v2212 = vand.u32 %v436, 4294901760
    %v2213 = vsub.f32 %v436, %v2212
    %v2214 = vand.u32 %v2213, 4294901760
    %v2215 = vsub.f32 %v2213, %v2214
    %v2216 = vand.u32 %v2215, 4294901760
    %2217 = vmatpush.msra.mxu0 %v2216
    %v2218 = vand.u32 %v434, 4294901760
    %v2219 = vsub.f32 %v434, %v2218
    %v2220 = vand.u32 %v2219, 4294901760
    %v2221 = vsub.f32 %v2219, %v2220
    %v2222 = vand.u32 %v2221, 4294901760
    %2223 = vmatpush.msra.mxu0 %v2222
    %v2224 = vand.u32 %v432, 4294901760
    %v2225 = vsub.f32 %v432, %v2224
    %v2226 = vand.u32 %v2225, 4294901760
    %v2227 = vsub.f32 %v2225, %v2226
    %v2228 = vand.u32 %v2227, 4294901760
    %2229 = vmatpush.msra.mxu0 %v2228
    %v2230 = vand.u32 %v430, 4294901760
    %v2231 = vsub.f32 %v430, %v2230
    %v2232 = vand.u32 %v2231, 4294901760
    %v2233 = vsub.f32 %v2231, %v2232
    %v2234 = vand.u32 %v2233, 4294901760
    %2235 = vmatpush.msra.mxu0 %v2234
    %v2236 = vand.u32 %v428, 4294901760
    %v2237 = vsub.f32 %v428, %v2236
    %v2238 = vand.u32 %v2237, 4294901760
    %v2239 = vsub.f32 %v2237, %v2238
    %v2240 = vand.u32 %v2239, 4294901760
    %2241 = vmatpush.msra.mxu0 %v2240
    %v2242 = vand.u32 %v426, 4294901760
    %v2243 = vsub.f32 %v426, %v2242
    %v2244 = vand.u32 %v2243, 4294901760
    %v2245 = vsub.f32 %v2243, %v2244
    %v2246 = vand.u32 %v2245, 4294901760
    %2247 = vmatpush.msra.mxu0 %v2246
    %v2248 = vand.u32 %v424, 4294901760
    %v2249 = vsub.f32 %v424, %v2248
    %v2250 = vand.u32 %v2249, 4294901760
    %v2251 = vsub.f32 %v2249, %v2250
    %v2252 = vand.u32 %v2251, 4294901760
    %2253 = vmatpush.msra.mxu0 %v2252
    %v2254 = vand.u32 %v422, 4294901760
    %v2255 = vsub.f32 %v422, %v2254
    %v2256 = vand.u32 %v2255, 4294901760
    %v2257 = vsub.f32 %v2255, %v2256
    %v2258 = vand.u32 %v2257, 4294901760
    %2259 = vmatpush.msra.mxu0 %v2258
    %v2260 = vand.u32 %v420, 4294901760
    %v2261 = vsub.f32 %v420, %v2260
    %v2262 = vand.u32 %v2261, 4294901760
    %v2263 = vsub.f32 %v2261, %v2262
    %v2264 = vand.u32 %v2263, 4294901760
    %2265 = vmatpush.msra.mxu0 %v2264
    %v2266 = vand.u32 %v418, 4294901760
    %v2267 = vsub.f32 %v418, %v2266
    %v2268 = vand.u32 %v2267, 4294901760
    %v2269 = vsub.f32 %v2267, %v2268
    %v2270 = vand.u32 %v2269, 4294901760
    %2271 = vmatpush.msra.mxu0 %v2270
    %v2272 = vand.u32 %v416, 4294901760
    %v2273 = vsub.f32 %v416, %v2272
    %v2274 = vand.u32 %v2273, 4294901760
    %v2275 = vsub.f32 %v2273, %v2274
    %v2276 = vand.u32 %v2275, 4294901760
    %2277 = vmatpush.msra.mxu0 %v2276
    %v2278 = vand.u32 %v414, 4294901760
    %v2279 = vsub.f32 %v414, %v2278
    %v2280 = vand.u32 %v2279, 4294901760
    %v2281 = vsub.f32 %v2279, %v2280
    %v2282 = vand.u32 %v2281, 4294901760
    %2283 = vmatpush.msra.mxu0 %v2282
    %v2284 = vand.u32 %v412, 4294901760
    %v2285 = vsub.f32 %v412, %v2284
    %v2286 = vand.u32 %v2285, 4294901760
    %v2287 = vsub.f32 %v2285, %v2286
    %v2288 = vand.u32 %v2287, 4294901760
    %2289 = vmatpush.msra.mxu0 %v2288
    %v2290 = vand.u32 %v1811, 4294901760
    %2291 = vmatmul.f32.gmra.mxu0 %v2290
    %v2292 = vpop.f32.mrf.mxu0
    %v2293 = vadd.f32 %v2192, %v2292
    %2294 = vdwg.mxu0
    %v2295 = vand.u32 %v442, 4294901760
    %v2296 = vsub.f32 %v442, %v2295
    %2297 = vmatpush.msra.mxu0 %v2296
    %v2298 = vand.u32 %v440, 4294901760
    %v2299 = vsub.f32 %v440, %v2298
    %2300 = vmatpush.msra.mxu0 %v2299
    %v2301 = vand.u32 %v438, 4294901760
    %v2302 = vsub.f32 %v438, %v2301
    %2303 = vmatpush.msra.mxu0 %v2302
    %v2304 = vand.u32 %v436, 4294901760
    %v2305 = vsub.f32 %v436, %v2304
    %2306 = vmatpush.msra.mxu0 %v2305
    %v2307 = vand.u32 %v434, 4294901760
    %v2308 = vsub.f32 %v434, %v2307
    %2309 = vmatpush.msra.mxu0 %v2308
    %v2310 = vand.u32 %v432, 4294901760
    %v2311 = vsub.f32 %v432, %v2310
    %2312 = vmatpush.msra.mxu0 %v2311
    %v2313 = vand.u32 %v430, 4294901760
    %v2314 = vsub.f32 %v430, %v2313
    %2315 = vmatpush.msra.mxu0 %v2314
    %v2316 = vand.u32 %v428, 4294901760
    %v2317 = vsub.f32 %v428, %v2316
    %2318 = vmatpush.msra.mxu0 %v2317
    %v2319 = vand.u32 %v426, 4294901760
    %v2320 = vsub.f32 %v426, %v2319
    %2321 = vmatpush.msra.mxu0 %v2320
    %v2322 = vand.u32 %v424, 4294901760
    %v2323 = vsub.f32 %v424, %v2322
    %2324 = vmatpush.msra.mxu0 %v2323
    %v2325 = vand.u32 %v422, 4294901760
    %v2326 = vsub.f32 %v422, %v2325
    %2327 = vmatpush.msra.mxu0 %v2326
    %v2328 = vand.u32 %v420, 4294901760
    %v2329 = vsub.f32 %v420, %v2328
    %2330 = vmatpush.msra.mxu0 %v2329
    %v2331 = vand.u32 %v418, 4294901760
    %v2332 = vsub.f32 %v418, %v2331
    %2333 = vmatpush.msra.mxu0 %v2332
    %v2334 = vand.u32 %v416, 4294901760
    %v2335 = vsub.f32 %v416, %v2334
    %2336 = vmatpush.msra.mxu0 %v2335
    %v2337 = vand.u32 %v414, 4294901760
    %v2338 = vsub.f32 %v414, %v2337
    %2339 = vmatpush.msra.mxu0 %v2338
    %v2340 = vand.u32 %v412, 4294901760
    %v2341 = vsub.f32 %v412, %v2340
    %2342 = vmatpush.msra.mxu0 %v2341
    %v2343 = vand.u32 %v1811, 4294901760
    %v2344 = vsub.f32 %v1811, %v2343
    %2345 = vmatmul.f32.gmra.mxu0 %v2344
    %v2346 = vpop.f32.mrf.mxu0
    %v2347 = vadd.f32 %v2293, %v2346
    %2348 = vdwg.mxu0
    %v2349 = vand.u32 %v442, 4294901760
    %2350 = vmatpush.msra.mxu0 %v2349
    %v2351 = vand.u32 %v440, 4294901760
    %2352 = vmatpush.msra.mxu0 %v2351
    %v2353 = vand.u32 %v438, 4294901760
    %2354 = vmatpush.msra.mxu0 %v2353
    %v2355 = vand.u32 %v436, 4294901760
    %2356 = vmatpush.msra.mxu0 %v2355
    %v2357 = vand.u32 %v434, 4294901760
    %2358 = vmatpush.msra.mxu0 %v2357
    %v2359 = vand.u32 %v432, 4294901760
    %2360 = vmatpush.msra.mxu0 %v2359
    %v2361 = vand.u32 %v430, 4294901760
    %2362 = vmatpush.msra.mxu0 %v2361
    %v2363 = vand.u32 %v428, 4294901760
    %2364 = vmatpush.msra.mxu0 %v2363
    %v2365 = vand.u32 %v426, 4294901760
    %2366 = vmatpush.msra.mxu0 %v2365
    %v2367 = vand.u32 %v424, 4294901760
    %2368 = vmatpush.msra.mxu0 %v2367
    %v2369 = vand.u32 %v422, 4294901760
    %2370 = vmatpush.msra.mxu0 %v2369
    %v2371 = vand.u32 %v420, 4294901760
    %2372 = vmatpush.msra.mxu0 %v2371
    %v2373 = vand.u32 %v418, 4294901760
    %2374 = vmatpush.msra.mxu0 %v2373
    %v2375 = vand.u32 %v416, 4294901760
    %2376 = vmatpush.msra.mxu0 %v2375
    %v2377 = vand.u32 %v414, 4294901760
    %2378 = vmatpush.msra.mxu0 %v2377
    %v2379 = vand.u32 %v412, 4294901760
    %2380 = vmatpush.msra.mxu0 %v2379
    %v2381 = vand.u32 %v1811, 4294901760
    %v2382 = vsub.f32 %v1811, %v2381
    %v2383 = vand.u32 %v2382, 4294901760
    %2384 = vmatmul.f32.gmra.mxu0 %v2383
    %v2385 = vpop.f32.mrf.mxu0
    %v2386 = vadd.f32 %v2347, %v2385
    %2387 = vdwg.mxu0
    %v2388 = vand.u32 %v442, 4294901760
    %v2389 = vsub.f32 %v442, %v2388
    %v2390 = vand.u32 %v2389, 4294901760
    %2391 = vmatpush.msra.mxu0 %v2390
    %v2392 = vand.u32 %v440, 4294901760
    %v2393 = vsub.f32 %v440, %v2392
    %v2394 = vand.u32 %v2393, 4294901760
    %2395 = vmatpush.msra.mxu0 %v2394
    %v2396 = vand.u32 %v438, 4294901760
    %v2397 = vsub.f32 %v438, %v2396
    %v2398 = vand.u32 %v2397, 4294901760
    %2399 = vmatpush.msra.mxu0 %v2398
    %v2400 = vand.u32 %v436, 4294901760
    %v2401 = vsub.f32 %v436, %v2400
    %v2402 = vand.u32 %v2401, 4294901760
    %2403 = vmatpush.msra.mxu0 %v2402
    %v2404 = vand.u32 %v434, 4294901760
    %v2405 = vsub.f32 %v434, %v2404
    %v2406 = vand.u32 %v2405, 4294901760
    %2407 = vmatpush.msra.mxu0 %v2406
    %v2408 = vand.u32 %v432, 4294901760
    %v2409 = vsub.f32 %v432, %v2408
    %v2410 = vand.u32 %v2409, 4294901760
    %2411 = vmatpush.msra.mxu0 %v2410
    %v2412 = vand.u32 %v430, 4294901760
    %v2413 = vsub.f32 %v430, %v2412
    %v2414 = vand.u32 %v2413, 4294901760
    %2415 = vmatpush.msra.mxu0 %v2414
    %v2416 = vand.u32 %v428, 4294901760
    %v2417 = vsub.f32 %v428, %v2416
    %v2418 = vand.u32 %v2417, 4294901760
    %2419 = vmatpush.msra.mxu0 %v2418
    %v2420 = vand.u32 %v426, 4294901760
    %v2421 = vsub.f32 %v426, %v2420
    %v2422 = vand.u32 %v2421, 4294901760
    %2423 = vmatpush.msra.mxu0 %v2422
    %v2424 = vand.u32 %v424, 4294901760
    %v2425 = vsub.f32 %v424, %v2424
    %v2426 = vand.u32 %v2425, 4294901760
    %2427 = vmatpush.msra.mxu0 %v2426
    %v2428 = vand.u32 %v422, 4294901760
    %v2429 = vsub.f32 %v422, %v2428
    %v2430 = vand.u32 %v2429, 4294901760
    %2431 = vmatpush.msra.mxu0 %v2430
    %v2432 = vand.u32 %v420, 4294901760
    %v2433 = vsub.f32 %v420, %v2432
    %v2434 = vand.u32 %v2433, 4294901760
    %2435 = vmatpush.msra.mxu0 %v2434
    %v2436 = vand.u32 %v418, 4294901760
    %v2437 = vsub.f32 %v418, %v2436
    %v2438 = vand.u32 %v2437, 4294901760
    %2439 = vmatpush.msra.mxu0 %v2438
    %v2440 = vand.u32 %v416, 4294901760
    %v2441 = vsub.f32 %v416, %v2440
    %v2442 = vand.u32 %v2441, 4294901760
    %2443 = vmatpush.msra.mxu0 %v2442
    %v2444 = vand.u32 %v414, 4294901760
    %v2445 = vsub.f32 %v414, %v2444
    %v2446 = vand.u32 %v2445, 4294901760
    %2447 = vmatpush.msra.mxu0 %v2446
    %v2448 = vand.u32 %v412, 4294901760
    %v2449 = vsub.f32 %v412, %v2448
    %v2450 = vand.u32 %v2449, 4294901760
    %2451 = vmatpush.msra.mxu0 %v2450
    %v2452 = vand.u32 %v1811, 4294901760
    %2453 = vmatmul.f32.gmra.mxu0 %v2452
    %v2454 = vpop.f32.mrf.mxu0
    %v2455 = vadd.f32 %v2386, %v2454
    %2456 = vdwg.mxu0
    %v2457 = vand.u32 %v442, 4294901760
    %2458 = vmatpush.msra.mxu0 %v2457
    %v2459 = vand.u32 %v440, 4294901760
    %2460 = vmatpush.msra.mxu0 %v2459
    %v2461 = vand.u32 %v438, 4294901760
    %2462 = vmatpush.msra.mxu0 %v2461
    %v2463 = vand.u32 %v436, 4294901760
    %2464 = vmatpush.msra.mxu0 %v2463
    %v2465 = vand.u32 %v434, 4294901760
    %2466 = vmatpush.msra.mxu0 %v2465
    %v2467 = vand.u32 %v432, 4294901760
    %2468 = vmatpush.msra.mxu0 %v2467
    %v2469 = vand.u32 %v430, 4294901760
    %2470 = vmatpush.msra.mxu0 %v2469
    %v2471 = vand.u32 %v428, 4294901760
    %2472 = vmatpush.msra.mxu0 %v2471
    %v2473 = vand.u32 %v426, 4294901760
    %2474 = vmatpush.msra.mxu0 %v2473
    %v2475 = vand.u32 %v424, 4294901760
    %2476 = vmatpush.msra.mxu0 %v2475
    %v2477 = vand.u32 %v422, 4294901760
    %2478 = vmatpush.msra.mxu0 %v2477
    %v2479 = vand.u32 %v420, 4294901760
    %2480 = vmatpush.msra.mxu0 %v2479
    %v2481 = vand.u32 %v418, 4294901760
    %2482 = vmatpush.msra.mxu0 %v2481
    %v2483 = vand.u32 %v416, 4294901760
    %2484 = vmatpush.msra.mxu0 %v2483
    %v2485 = vand.u32 %v414, 4294901760
    %2486 = vmatpush.msra.mxu0 %v2485
    %v2487 = vand.u32 %v412, 4294901760
    %2488 = vmatpush.msra.mxu0 %v2487
    %v2489 = vand.u32 %v1811, 4294901760
    %2490 = vmatmul.f32.gmra.mxu0 %v2489
    %v2491 = vpop.f32.mrf.mxu0
    %v2492 = vadd.f32 %v2455, %v2491
    %2493 = vdwg.mxu0
    %v2494 = vand.u32 %v411, 4294901760
    %2495 = vmatpush.msra.mxu0 %v2494
    %v2496 = vand.u32 %v409, 4294901760
    %2497 = vmatpush.msra.mxu0 %v2496
    %v2498 = vand.u32 %v407, 4294901760
    %2499 = vmatpush.msra.mxu0 %v2498
    %v2500 = vand.u32 %v405, 4294901760
    %2501 = vmatpush.msra.mxu0 %v2500
    %v2502 = vand.u32 %v403, 4294901760
    %2503 = vmatpush.msra.mxu0 %v2502
    %v2504 = vand.u32 %v401, 4294901760
    %2505 = vmatpush.msra.mxu0 %v2504
    %v2506 = vand.u32 %v399, 4294901760
    %2507 = vmatpush.msra.mxu0 %v2506
    %v2508 = vand.u32 %v397, 4294901760
    %2509 = vmatpush.msra.mxu0 %v2508
    %v2510 = vand.u32 %v395, 4294901760
    %2511 = vmatpush.msra.mxu0 %v2510
    %v2512 = vand.u32 %v393, 4294901760
    %2513 = vmatpush.msra.mxu0 %v2512
    %v2514 = vand.u32 %v391, 4294901760
    %2515 = vmatpush.msra.mxu0 %v2514
    %v2516 = vand.u32 %v389, 4294901760
    %2517 = vmatpush.msra.mxu0 %v2516
    %v2518 = vand.u32 %v387, 4294901760
    %2519 = vmatpush.msra.mxu0 %v2518
    %v2520 = vand.u32 %v385, 4294901760
    %2521 = vmatpush.msra.mxu0 %v2520
    %v2522 = vand.u32 %v383, 4294901760
    %2523 = vmatpush.msra.mxu0 %v2522
    %v2524 = vand.u32 %v381, 4294901760
    %2525 = vmatpush.msra.mxu0 %v2524
    %v2526 = vand.u32 %v1810, 4294901760
    %v2527 = vsub.f32 %v1810, %v2526
    %v2528 = vand.u32 %v2527, 4294901760
    %v2529 = vsub.f32 %v2527, %v2528
    %v2530 = vand.u32 %v2529, 4294901760
    %2531 = vmatmul.f32.gmra.mxu0 %v2530
    %v2532 = vpop.f32.mrf.mxu0
    %v2533 = vadd.f32 1e-12, %v2532
    %2534 = vdwg.mxu0
    %v2535 = vand.u32 %v411, 4294901760
    %v2536 = vsub.f32 %v411, %v2535
    %v2537 = vand.u32 %v2536, 4294901760
    %v2538 = vsub.f32 %v2536, %v2537
    %v2539 = vand.u32 %v2538, 4294901760
    %2540 = vmatpush.msra.mxu0 %v2539
    %v2541 = vand.u32 %v409, 4294901760
    %v2542 = vsub.f32 %v409, %v2541
    %v2543 = vand.u32 %v2542, 4294901760
    %v2544 = vsub.f32 %v2542, %v2543
    %v2545 = vand.u32 %v2544, 4294901760
    %2546 = vmatpush.msra.mxu0 %v2545
    %v2547 = vand.u32 %v407, 4294901760
    %v2548 = vsub.f32 %v407, %v2547
    %v2549 = vand.u32 %v2548, 4294901760
    %v2550 = vsub.f32 %v2548, %v2549
    %v2551 = vand.u32 %v2550, 4294901760
    %2552 = vmatpush.msra.mxu0 %v2551
    %v2553 = vand.u32 %v405, 4294901760
    %v2554 = vsub.f32 %v405, %v2553
    %v2555 = vand.u32 %v2554, 4294901760
    %v2556 = vsub.f32 %v2554, %v2555
    %v2557 = vand.u32 %v2556, 4294901760
    %2558 = vmatpush.msra.mxu0 %v2557
    %v2559 = vand.u32 %v403, 4294901760
    %v2560 = vsub.f32 %v403, %v2559
    %v2561 = vand.u32 %v2560, 4294901760
    %v2562 = vsub.f32 %v2560, %v2561
    %v2563 = vand.u32 %v2562, 4294901760
    %2564 = vmatpush.msra.mxu0 %v2563
    %v2565 = vand.u32 %v401, 4294901760
    %v2566 = vsub.f32 %v401, %v2565
    %v2567 = vand.u32 %v2566, 4294901760
    %v2568 = vsub.f32 %v2566, %v2567
    %v2569 = vand.u32 %v2568, 4294901760
    %2570 = vmatpush.msra.mxu0 %v2569
    %v2571 = vand.u32 %v399, 4294901760
    %v2572 = vsub.f32 %v399, %v2571
    %v2573 = vand.u32 %v2572, 4294901760
    %v2574 = vsub.f32 %v2572, %v2573
    %v2575 = vand.u32 %v2574, 4294901760
    %2576 = vmatpush.msra.mxu0 %v2575
    %v2577 = vand.u32 %v397, 4294901760
    %v2578 = vsub.f32 %v397, %v2577
    %v2579 = vand.u32 %v2578, 4294901760
    %v2580 = vsub.f32 %v2578, %v2579
    %v2581 = vand.u32 %v2580, 4294901760
    %2582 = vmatpush.msra.mxu0 %v2581
    %v2583 = vand.u32 %v395, 4294901760
    %v2584 = vsub.f32 %v395, %v2583
    %v2585 = vand.u32 %v2584, 4294901760
    %v2586 = vsub.f32 %v2584, %v2585
    %v2587 = vand.u32 %v2586, 4294901760
    %2588 = vmatpush.msra.mxu0 %v2587
    %v2589 = vand.u32 %v393, 4294901760
    %v2590 = vsub.f32 %v393, %v2589
    %v2591 = vand.u32 %v2590, 4294901760
    %v2592 = vsub.f32 %v2590, %v2591
    %v2593 = vand.u32 %v2592, 4294901760
    %2594 = vmatpush.msra.mxu0 %v2593
    %v2595 = vand.u32 %v391, 4294901760
    %v2596 = vsub.f32 %v391, %v2595
    %v2597 = vand.u32 %v2596, 4294901760
    %v2598 = vsub.f32 %v2596, %v2597
    %v2599 = vand.u32 %v2598, 4294901760
    %2600 = vmatpush.msra.mxu0 %v2599
    %v2601 = vand.u32 %v389, 4294901760
    %v2602 = vsub.f32 %v389, %v2601
    %v2603 = vand.u32 %v2602, 4294901760
    %v2604 = vsub.f32 %v2602, %v2603
    %v2605 = vand.u32 %v2604, 4294901760
    %2606 = vmatpush.msra.mxu0 %v2605
    %v2607 = vand.u32 %v387, 4294901760
    %v2608 = vsub.f32 %v387, %v2607
    %v2609 = vand.u32 %v2608, 4294901760
    %v2610 = vsub.f32 %v2608, %v2609
    %v2611 = vand.u32 %v2610, 4294901760
    %2612 = vmatpush.msra.mxu0 %v2611
    %v2613 = vand.u32 %v385, 4294901760
    %v2614 = vsub.f32 %v385, %v2613
    %v2615 = vand.u32 %v2614, 4294901760
    %v2616 = vsub.f32 %v2614, %v2615
    %v2617 = vand.u32 %v2616, 4294901760
    %2618 = vmatpush.msra.mxu0 %v2617
    %v2619 = vand.u32 %v383, 4294901760
    %v2620 = vsub.f32 %v383, %v2619
    %v2621 = vand.u32 %v2620, 4294901760
    %v2622 = vsub.f32 %v2620, %v2621
    %v2623 = vand.u32 %v2622, 4294901760
    %2624 = vmatpush.msra.mxu0 %v2623
    %v2625 = vand.u32 %v381, 4294901760
    %v2626 = vsub.f32 %v381, %v2625
    %v2627 = vand.u32 %v2626, 4294901760
    %v2628 = vsub.f32 %v2626, %v2627
    %v2629 = vand.u32 %v2628, 4294901760
    %2630 = vmatpush.msra.mxu0 %v2629
    %v2631 = vand.u32 %v1810, 4294901760
    %2632 = vmatmul.f32.gmra.mxu0 %v2631
    %v2633 = vpop.f32.mrf.mxu0
    %v2634 = vadd.f32 %v2533, %v2633
    %2635 = vdwg.mxu0
    %v2636 = vand.u32 %v411, 4294901760
    %v2637 = vsub.f32 %v411, %v2636
    %2638 = vmatpush.msra.mxu0 %v2637
    %v2639 = vand.u32 %v409, 4294901760
    %v2640 = vsub.f32 %v409, %v2639
    %2641 = vmatpush.msra.mxu0 %v2640
    %v2642 = vand.u32 %v407, 4294901760
    %v2643 = vsub.f32 %v407, %v2642
    %2644 = vmatpush.msra.mxu0 %v2643
    %v2645 = vand.u32 %v405, 4294901760
    %v2646 = vsub.f32 %v405, %v2645
    %2647 = vmatpush.msra.mxu0 %v2646
    %v2648 = vand.u32 %v403, 4294901760
    %v2649 = vsub.f32 %v403, %v2648
    %2650 = vmatpush.msra.mxu0 %v2649
    %v2651 = vand.u32 %v401, 4294901760
    %v2652 = vsub.f32 %v401, %v2651
    %2653 = vmatpush.msra.mxu0 %v2652
    %v2654 = vand.u32 %v399, 4294901760
    %v2655 = vsub.f32 %v399, %v2654
    %2656 = vmatpush.msra.mxu0 %v2655
    %v2657 = vand.u32 %v397, 4294901760
    %v2658 = vsub.f32 %v397, %v2657
    %2659 = vmatpush.msra.mxu0 %v2658
    %v2660 = vand.u32 %v395, 4294901760
    %v2661 = vsub.f32 %v395, %v2660
    %2662 = vmatpush.msra.mxu0 %v2661
    %v2663 = vand.u32 %v393, 4294901760
    %v2664 = vsub.f32 %v393, %v2663
    %2665 = vmatpush.msra.mxu0 %v2664
    %v2666 = vand.u32 %v391, 4294901760
    %v2667 = vsub.f32 %v391, %v2666
    %2668 = vmatpush.msra.mxu0 %v2667
    %v2669 = vand.u32 %v389, 4294901760
    %v2670 = vsub.f32 %v389, %v2669
    %2671 = vmatpush.msra.mxu0 %v2670
    %v2672 = vand.u32 %v387, 4294901760
    %v2673 = vsub.f32 %v387, %v2672
    %2674 = vmatpush.msra.mxu0 %v2673
    %v2675 = vand.u32 %v385, 4294901760
    %v2676 = vsub.f32 %v385, %v2675
    %2677 = vmatpush.msra.mxu0 %v2676
    %v2678 = vand.u32 %v383, 4294901760
    %v2679 = vsub.f32 %v383, %v2678
    %2680 = vmatpush.msra.mxu0 %v2679
    %v2681 = vand.u32 %v381, 4294901760
    %v2682 = vsub.f32 %v381, %v2681
    %2683 = vmatpush.msra.mxu0 %v2682
    %v2684 = vand.u32 %v1810, 4294901760
    %v2685 = vsub.f32 %v1810, %v2684
    %2686 = vmatmul.f32.gmra.mxu0 %v2685
    %v2687 = vpop.f32.mrf.mxu0
    %v2688 = vadd.f32 %v2634, %v2687
    %2689 = vdwg.mxu0
    %v2690 = vand.u32 %v411, 4294901760
    %2691 = vmatpush.msra.mxu0 %v2690
    %v2692 = vand.u32 %v409, 4294901760
    %2693 = vmatpush.msra.mxu0 %v2692
    %v2694 = vand.u32 %v407, 4294901760
    %2695 = vmatpush.msra.mxu0 %v2694
    %v2696 = vand.u32 %v405, 4294901760
    %2697 = vmatpush.msra.mxu0 %v2696
    %v2698 = vand.u32 %v403, 4294901760
    %2699 = vmatpush.msra.mxu0 %v2698
    %v2700 = vand.u32 %v401, 4294901760
    %2701 = vmatpush.msra.mxu0 %v2700
    %v2702 = vand.u32 %v399, 4294901760
    %2703 = vmatpush.msra.mxu0 %v2702
    %v2704 = vand.u32 %v397, 4294901760
    %2705 = vmatpush.msra.mxu0 %v2704
    %v2706 = vand.u32 %v395, 4294901760
    %2707 = vmatpush.msra.mxu0 %v2706
    %v2708 = vand.u32 %v393, 4294901760
    %2709 = vmatpush.msra.mxu0 %v2708
    %v2710 = vand.u32 %v391, 4294901760
    %2711 = vmatpush.msra.mxu0 %v2710
    %v2712 = vand.u32 %v389, 4294901760
    %2713 = vmatpush.msra.mxu0 %v2712
    %v2714 = vand.u32 %v387, 4294901760
    %2715 = vmatpush.msra.mxu0 %v2714
    %v2716 = vand.u32 %v385, 4294901760
    %2717 = vmatpush.msra.mxu0 %v2716
    %v2718 = vand.u32 %v383, 4294901760
    %2719 = vmatpush.msra.mxu0 %v2718
    %v2720 = vand.u32 %v381, 4294901760
    %2721 = vmatpush.msra.mxu0 %v2720
    %v2722 = vand.u32 %v1810, 4294901760
    %v2723 = vsub.f32 %v1810, %v2722
    %v2724 = vand.u32 %v2723, 4294901760
    %2725 = vmatmul.f32.gmra.mxu0 %v2724
    %v2726 = vpop.f32.mrf.mxu0
    %v2727 = vadd.f32 %v2688, %v2726
    %2728 = vdwg.mxu0
    %v2729 = vand.u32 %v411, 4294901760
    %v2730 = vsub.f32 %v411, %v2729
    %v2731 = vand.u32 %v2730, 4294901760
    %2732 = vmatpush.msra.mxu0 %v2731
    %v2733 = vand.u32 %v409, 4294901760
    %v2734 = vsub.f32 %v409, %v2733
    %v2735 = vand.u32 %v2734, 4294901760
    %2736 = vmatpush.msra.mxu0 %v2735
    %v2737 = vand.u32 %v407, 4294901760
    %v2738 = vsub.f32 %v407, %v2737
    %v2739 = vand.u32 %v2738, 4294901760
    %2740 = vmatpush.msra.mxu0 %v2739
    %v2741 = vand.u32 %v405, 4294901760
    %v2742 = vsub.f32 %v405, %v2741
    %v2743 = vand.u32 %v2742, 4294901760
    %2744 = vmatpush.msra.mxu0 %v2743
    %v2745 = vand.u32 %v403, 4294901760
    %v2746 = vsub.f32 %v403, %v2745
    %v2747 = vand.u32 %v2746, 4294901760
    %2748 = vmatpush.msra.mxu0 %v2747
    %v2749 = vand.u32 %v401, 4294901760
    %v2750 = vsub.f32 %v401, %v2749
    %v2751 = vand.u32 %v2750, 4294901760
    %2752 = vmatpush.msra.mxu0 %v2751
    %v2753 = vand.u32 %v399, 4294901760
    %v2754 = vsub.f32 %v399, %v2753
    %v2755 = vand.u32 %v2754, 4294901760
    %2756 = vmatpush.msra.mxu0 %v2755
    %v2757 = vand.u32 %v397, 4294901760
    %v2758 = vsub.f32 %v397, %v2757
    %v2759 = vand.u32 %v2758, 4294901760
    %2760 = vmatpush.msra.mxu0 %v2759
    %v2761 = vand.u32 %v395, 4294901760
    %v2762 = vsub.f32 %v395, %v2761
    %v2763 = vand.u32 %v2762, 4294901760
    %2764 = vmatpush.msra.mxu0 %v2763
    %v2765 = vand.u32 %v393, 4294901760
    %v2766 = vsub.f32 %v393, %v2765
    %v2767 = vand.u32 %v2766, 4294901760
    %2768 = vmatpush.msra.mxu0 %v2767
    %v2769 = vand.u32 %v391, 4294901760
    %v2770 = vsub.f32 %v391, %v2769
    %v2771 = vand.u32 %v2770, 4294901760
    %2772 = vmatpush.msra.mxu0 %v2771
    %v2773 = vand.u32 %v389, 4294901760
    %v2774 = vsub.f32 %v389, %v2773
    %v2775 = vand.u32 %v2774, 4294901760
    %2776 = vmatpush.msra.mxu0 %v2775
    %v2777 = vand.u32 %v387, 4294901760
    %v2778 = vsub.f32 %v387, %v2777
    %v2779 = vand.u32 %v2778, 4294901760
    %2780 = vmatpush.msra.mxu0 %v2779
    %v2781 = vand.u32 %v385, 4294901760
    %v2782 = vsub.f32 %v385, %v2781
    %v2783 = vand.u32 %v2782, 4294901760
    %2784 = vmatpush.msra.mxu0 %v2783
    %v2785 = vand.u32 %v383, 4294901760
    %v2786 = vsub.f32 %v383, %v2785
    %v2787 = vand.u32 %v2786, 4294901760
    %2788 = vmatpush.msra.mxu0 %v2787
    %v2789 = vand.u32 %v381, 4294901760
    %v2790 = vsub.f32 %v381, %v2789
    %v2791 = vand.u32 %v2790, 4294901760
    %2792 = vmatpush.msra.mxu0 %v2791
    %v2793 = vand.u32 %v1810, 4294901760
    %2794 = vmatmul.f32.gmra.mxu0 %v2793
    %v2795 = vpop.f32.mrf.mxu0
    %v2796 = vadd.f32 %v2727, %v2795
    %2797 = vdwg.mxu0
    %v2798 = vand.u32 %v411, 4294901760
    %2799 = vmatpush.msra.mxu0 %v2798
    %v2800 = vand.u32 %v409, 4294901760
    %2801 = vmatpush.msra.mxu0 %v2800
    %v2802 = vand.u32 %v407, 4294901760
    %2803 = vmatpush.msra.mxu0 %v2802
    %v2804 = vand.u32 %v405, 4294901760
    %2805 = vmatpush.msra.mxu0 %v2804
    %v2806 = vand.u32 %v403, 4294901760
    %2807 = vmatpush.msra.mxu0 %v2806
    %v2808 = vand.u32 %v401, 4294901760
    %2809 = vmatpush.msra.mxu0 %v2808
    %v2810 = vand.u32 %v399, 4294901760
    %2811 = vmatpush.msra.mxu0 %v2810
    %v2812 = vand.u32 %v397, 4294901760
    %2813 = vmatpush.msra.mxu0 %v2812
    %v2814 = vand.u32 %v395, 4294901760
    %2815 = vmatpush.msra.mxu0 %v2814
    %v2816 = vand.u32 %v393, 4294901760
    %2817 = vmatpush.msra.mxu0 %v2816
    %v2818 = vand.u32 %v391, 4294901760
    %2819 = vmatpush.msra.mxu0 %v2818
    %v2820 = vand.u32 %v389, 4294901760
    %2821 = vmatpush.msra.mxu0 %v2820
    %v2822 = vand.u32 %v387, 4294901760
    %2823 = vmatpush.msra.mxu0 %v2822
    %v2824 = vand.u32 %v385, 4294901760
    %2825 = vmatpush.msra.mxu0 %v2824
    %v2826 = vand.u32 %v383, 4294901760
    %2827 = vmatpush.msra.mxu0 %v2826
    %v2828 = vand.u32 %v381, 4294901760
    %2829 = vmatpush.msra.mxu0 %v2828
    %v2830 = vand.u32 %v1810, 4294901760
    %2831 = vmatmul.f32.gmra.mxu0 %v2830
    %v2832 = vpop.f32.mrf.mxu0
    %v2833 = vadd.f32 %v2796, %v2832
    %2834 = vdwg.mxu0
    %v2835 = vand.u32 %v443, 4294901760
    %2836 = vmatpush.msra.mxu0 %v2835
    %v2837 = vand.u32 %v441, 4294901760
    %2838 = vmatpush.msra.mxu0 %v2837
    %v2839 = vand.u32 %v439, 4294901760
    %2840 = vmatpush.msra.mxu0 %v2839
    %v2841 = vand.u32 %v437, 4294901760
    %2842 = vmatpush.msra.mxu0 %v2841
    %v2843 = vand.u32 %v435, 4294901760
    %2844 = vmatpush.msra.mxu0 %v2843
    %v2845 = vand.u32 %v433, 4294901760
    %2846 = vmatpush.msra.mxu0 %v2845
    %v2847 = vand.u32 %v431, 4294901760
    %2848 = vmatpush.msra.mxu0 %v2847
    %v2849 = vand.u32 %v429, 4294901760
    %2850 = vmatpush.msra.mxu0 %v2849
    %v2851 = vand.u32 %v427, 4294901760
    %2852 = vmatpush.msra.mxu0 %v2851
    %v2853 = vand.u32 %v425, 4294901760
    %2854 = vmatpush.msra.mxu0 %v2853
    %v2855 = vand.u32 %v423, 4294901760
    %2856 = vmatpush.msra.mxu0 %v2855
    %v2857 = vand.u32 %v421, 4294901760
    %2858 = vmatpush.msra.mxu0 %v2857
    %v2859 = vand.u32 %v419, 4294901760
    %2860 = vmatpush.msra.mxu0 %v2859
    %v2861 = vand.u32 %v417, 4294901760
    %2862 = vmatpush.msra.mxu0 %v2861
    %v2863 = vand.u32 %v415, 4294901760
    %2864 = vmatpush.msra.mxu0 %v2863
    %v2865 = vand.u32 %v413, 4294901760
    %2866 = vmatpush.msra.mxu0 %v2865
    %v2867 = vand.u32 %v1811, 4294901760
    %v2868 = vsub.f32 %v1811, %v2867
    %v2869 = vand.u32 %v2868, 4294901760
    %v2870 = vsub.f32 %v2868, %v2869
    %v2871 = vand.u32 %v2870, 4294901760
    %2872 = vmatmul.f32.gmra.mxu0 %v2871
    %v2873 = vpop.f32.mrf.mxu0
    %v2874 = vadd.f32 %v2833, %v2873
    %2875 = vdwg.mxu0
    %v2876 = vand.u32 %v443, 4294901760
    %v2877 = vsub.f32 %v443, %v2876
    %v2878 = vand.u32 %v2877, 4294901760
    %v2879 = vsub.f32 %v2877, %v2878
    %v2880 = vand.u32 %v2879, 4294901760
    %2881 = vmatpush.msra.mxu0 %v2880
    %v2882 = vand.u32 %v441, 4294901760
    %v2883 = vsub.f32 %v441, %v2882
    %v2884 = vand.u32 %v2883, 4294901760
    %v2885 = vsub.f32 %v2883, %v2884
    %v2886 = vand.u32 %v2885, 4294901760
    %2887 = vmatpush.msra.mxu0 %v2886
    %v2888 = vand.u32 %v439, 4294901760
    %v2889 = vsub.f32 %v439, %v2888
    %v2890 = vand.u32 %v2889, 4294901760
    %v2891 = vsub.f32 %v2889, %v2890
    %v2892 = vand.u32 %v2891, 4294901760
    %2893 = vmatpush.msra.mxu0 %v2892
    %v2894 = vand.u32 %v437, 4294901760
    %v2895 = vsub.f32 %v437, %v2894
    %v2896 = vand.u32 %v2895, 4294901760
    %v2897 = vsub.f32 %v2895, %v2896
    %v2898 = vand.u32 %v2897, 4294901760
    %2899 = vmatpush.msra.mxu0 %v2898
    %v2900 = vand.u32 %v435, 4294901760
    %v2901 = vsub.f32 %v435, %v2900
    %v2902 = vand.u32 %v2901, 4294901760
    %v2903 = vsub.f32 %v2901, %v2902
    %v2904 = vand.u32 %v2903, 4294901760
    %2905 = vmatpush.msra.mxu0 %v2904
    %v2906 = vand.u32 %v433, 4294901760
    %v2907 = vsub.f32 %v433, %v2906
    %v2908 = vand.u32 %v2907, 4294901760
    %v2909 = vsub.f32 %v2907, %v2908
    %v2910 = vand.u32 %v2909, 4294901760
    %2911 = vmatpush.msra.mxu0 %v2910
    %v2912 = vand.u32 %v431, 4294901760
    %v2913 = vsub.f32 %v431, %v2912
    %v2914 = vand.u32 %v2913, 4294901760
    %v2915 = vsub.f32 %v2913, %v2914
    %v2916 = vand.u32 %v2915, 4294901760
    %2917 = vmatpush.msra.mxu0 %v2916
    %v2918 = vand.u32 %v429, 4294901760
    %v2919 = vsub.f32 %v429, %v2918
    %v2920 = vand.u32 %v2919, 4294901760
    %v2921 = vsub.f32 %v2919, %v2920
    %v2922 = vand.u32 %v2921, 4294901760
    %2923 = vmatpush.msra.mxu0 %v2922
    %v2924 = vand.u32 %v427, 4294901760
    %v2925 = vsub.f32 %v427, %v2924
    %v2926 = vand.u32 %v2925, 4294901760
    %v2927 = vsub.f32 %v2925, %v2926
    %v2928 = vand.u32 %v2927, 4294901760
    %2929 = vmatpush.msra.mxu0 %v2928
    %v2930 = vand.u32 %v425, 4294901760
    %v2931 = vsub.f32 %v425, %v2930
    %v2932 = vand.u32 %v2931, 4294901760
    %v2933 = vsub.f32 %v2931, %v2932
    %v2934 = vand.u32 %v2933, 4294901760
    %2935 = vmatpush.msra.mxu0 %v2934
    %v2936 = vand.u32 %v423, 4294901760
    %v2937 = vsub.f32 %v423, %v2936
    %v2938 = vand.u32 %v2937, 4294901760
    %v2939 = vsub.f32 %v2937, %v2938
    %v2940 = vand.u32 %v2939, 4294901760
    %2941 = vmatpush.msra.mxu0 %v2940
    %v2942 = vand.u32 %v421, 4294901760
    %v2943 = vsub.f32 %v421, %v2942
    %v2944 = vand.u32 %v2943, 4294901760
    %v2945 = vsub.f32 %v2943, %v2944
    %v2946 = vand.u32 %v2945, 4294901760
    %2947 = vmatpush.msra.mxu0 %v2946
    %v2948 = vand.u32 %v419, 4294901760
    %v2949 = vsub.f32 %v419, %v2948
    %v2950 = vand.u32 %v2949, 4294901760
    %v2951 = vsub.f32 %v2949, %v2950
    %v2952 = vand.u32 %v2951, 4294901760
    %2953 = vmatpush.msra.mxu0 %v2952
    %v2954 = vand.u32 %v417, 4294901760
    %v2955 = vsub.f32 %v417, %v2954
    %v2956 = vand.u32 %v2955, 4294901760
    %v2957 = vsub.f32 %v2955, %v2956
    %v2958 = vand.u32 %v2957, 4294901760
    %2959 = vmatpush.msra.mxu0 %v2958
    %v2960 = vand.u32 %v415, 4294901760
    %v2961 = vsub.f32 %v415, %v2960
    %v2962 = vand.u32 %v2961, 4294901760
    %v2963 = vsub.f32 %v2961, %v2962
    %v2964 = vand.u32 %v2963, 4294901760
    %2965 = vmatpush.msra.mxu0 %v2964
    %v2966 = vand.u32 %v413, 4294901760
    %v2967 = vsub.f32 %v413, %v2966
    %v2968 = vand.u32 %v2967, 4294901760
    %v2969 = vsub.f32 %v2967, %v2968
    %v2970 = vand.u32 %v2969, 4294901760
    %2971 = vmatpush.msra.mxu0 %v2970
    %v2972 = vand.u32 %v1811, 4294901760
    %2973 = vmatmul.f32.gmra.mxu0 %v2972
    %v2974 = vpop.f32.mrf.mxu0
    %v2975 = vadd.f32 %v2874, %v2974
    %2976 = vdwg.mxu0
    %v2977 = vand.u32 %v443, 4294901760
    %v2978 = vsub.f32 %v443, %v2977
    %2979 = vmatpush.msra.mxu0 %v2978
    %v2980 = vand.u32 %v441, 4294901760
    %v2981 = vsub.f32 %v441, %v2980
    %2982 = vmatpush.msra.mxu0 %v2981
    %v2983 = vand.u32 %v439, 4294901760
    %v2984 = vsub.f32 %v439, %v2983
    %2985 = vmatpush.msra.mxu0 %v2984
    %v2986 = vand.u32 %v437, 4294901760
    %v2987 = vsub.f32 %v437, %v2986
    %2988 = vmatpush.msra.mxu0 %v2987
    %v2989 = vand.u32 %v435, 4294901760
    %v2990 = vsub.f32 %v435, %v2989
    %2991 = vmatpush.msra.mxu0 %v2990
    %v2992 = vand.u32 %v433, 4294901760
    %v2993 = vsub.f32 %v433, %v2992
    %2994 = vmatpush.msra.mxu0 %v2993
    %v2995 = vand.u32 %v431, 4294901760
    %v2996 = vsub.f32 %v431, %v2995
    %2997 = vmatpush.msra.mxu0 %v2996
    %v2998 = vand.u32 %v429, 4294901760
    %v2999 = vsub.f32 %v429, %v2998
    %3000 = vmatpush.msra.mxu0 %v2999
    %v3001 = vand.u32 %v427, 4294901760
    %v3002 = vsub.f32 %v427, %v3001
    %3003 = vmatpush.msra.mxu0 %v3002
    %v3004 = vand.u32 %v425, 4294901760
    %v3005 = vsub.f32 %v425, %v3004
    %3006 = vmatpush.msra.mxu0 %v3005
    %v3007 = vand.u32 %v423, 4294901760
    %v3008 = vsub.f32 %v423, %v3007
    %3009 = vmatpush.msra.mxu0 %v3008
    %v3010 = vand.u32 %v421, 4294901760
    %v3011 = vsub.f32 %v421, %v3010
    %3012 = vmatpush.msra.mxu0 %v3011
    %v3013 = vand.u32 %v419, 4294901760
    %v3014 = vsub.f32 %v419, %v3013
    %3015 = vmatpush.msra.mxu0 %v3014
    %v3016 = vand.u32 %v417, 4294901760
    %v3017 = vsub.f32 %v417, %v3016
    %3018 = vmatpush.msra.mxu0 %v3017
    %v3019 = vand.u32 %v415, 4294901760
    %v3020 = vsub.f32 %v415, %v3019
    %3021 = vmatpush.msra.mxu0 %v3020
    %v3022 = vand.u32 %v413, 4294901760
    %v3023 = vsub.f32 %v413, %v3022
    %3024 = vmatpush.msra.mxu0 %v3023
    %v3025 = vand.u32 %v1811, 4294901760
    %v3026 = vsub.f32 %v1811, %v3025
    %3027 = vmatmul.f32.gmra.mxu0 %v3026
    %v3028 = vpop.f32.mrf.mxu0
    %v3029 = vadd.f32 %v2975, %v3028
    %3030 = vdwg.mxu0
    %v3031 = vand.u32 %v443, 4294901760
    %3032 = vmatpush.msra.mxu0 %v3031
    %v3033 = vand.u32 %v441, 4294901760
    %3034 = vmatpush.msra.mxu0 %v3033
    %v3035 = vand.u32 %v439, 4294901760
    %3036 = vmatpush.msra.mxu0 %v3035
    %v3037 = vand.u32 %v437, 4294901760
    %3038 = vmatpush.msra.mxu0 %v3037
    %v3039 = vand.u32 %v435, 4294901760
    %3040 = vmatpush.msra.mxu0 %v3039
    %v3041 = vand.u32 %v433, 4294901760
    %3042 = vmatpush.msra.mxu0 %v3041
    %v3043 = vand.u32 %v431, 4294901760
    %3044 = vmatpush.msra.mxu0 %v3043
    %v3045 = vand.u32 %v429, 4294901760
    %3046 = vmatpush.msra.mxu0 %v3045
    %v3047 = vand.u32 %v427, 4294901760
    %3048 = vmatpush.msra.mxu0 %v3047
    %v3049 = vand.u32 %v425, 4294901760
    %3050 = vmatpush.msra.mxu0 %v3049
    %v3051 = vand.u32 %v423, 4294901760
    %3052 = vmatpush.msra.mxu0 %v3051
    %v3053 = vand.u32 %v421, 4294901760
    %3054 = vmatpush.msra.mxu0 %v3053
    %v3055 = vand.u32 %v419, 4294901760
    %3056 = vmatpush.msra.mxu0 %v3055
    %v3057 = vand.u32 %v417, 4294901760
    %3058 = vmatpush.msra.mxu0 %v3057
    %v3059 = vand.u32 %v415, 4294901760
    %3060 = vmatpush.msra.mxu0 %v3059
    %v3061 = vand.u32 %v413, 4294901760
    %3062 = vmatpush.msra.mxu0 %v3061
    %v3063 = vand.u32 %v1811, 4294901760
    %v3064 = vsub.f32 %v1811, %v3063
    %v3065 = vand.u32 %v3064, 4294901760
    %3066 = vmatmul.f32.gmra.mxu0 %v3065
    %v3067 = vpop.f32.mrf.mxu0
    %v3068 = vadd.f32 %v3029, %v3067
    %3069 = vdwg.mxu0
    %v3070 = vand.u32 %v443, 4294901760
    %v3071 = vsub.f32 %v443, %v3070
    %v3072 = vand.u32 %v3071, 4294901760
    %3073 = vmatpush.msra.mxu0 %v3072
    %v3074 = vand.u32 %v441, 4294901760
    %v3075 = vsub.f32 %v441, %v3074
    %v3076 = vand.u32 %v3075, 4294901760
    %3077 = vmatpush.msra.mxu0 %v3076
    %v3078 = vand.u32 %v439, 4294901760
    %v3079 = vsub.f32 %v439, %v3078
    %v3080 = vand.u32 %v3079, 4294901760
    %3081 = vmatpush.msra.mxu0 %v3080
    %v3082 = vand.u32 %v437, 4294901760
    %v3083 = vsub.f32 %v437, %v3082
    %v3084 = vand.u32 %v3083, 4294901760
    %3085 = vmatpush.msra.mxu0 %v3084
    %v3086 = vand.u32 %v435, 4294901760
    %v3087 = vsub.f32 %v435, %v3086
    %v3088 = vand.u32 %v3087, 4294901760
    %3089 = vmatpush.msra.mxu0 %v3088
    %v3090 = vand.u32 %v433, 4294901760
    %v3091 = vsub.f32 %v433, %v3090
    %v3092 = vand.u32 %v3091, 4294901760
    %3093 = vmatpush.msra.mxu0 %v3092
    %v3094 = vand.u32 %v431, 4294901760
    %v3095 = vsub.f32 %v431, %v3094
    %v3096 = vand.u32 %v3095, 4294901760
    %3097 = vmatpush.msra.mxu0 %v3096
    %v3098 = vand.u32 %v429, 4294901760
    %v3099 = vsub.f32 %v429, %v3098
    %v3100 = vand.u32 %v3099, 4294901760
    %3101 = vmatpush.msra.mxu0 %v3100
    %v3102 = vand.u32 %v427, 4294901760
    %v3103 = vsub.f32 %v427, %v3102
    %v3104 = vand.u32 %v3103, 4294901760
    %3105 = vmatpush.msra.mxu0 %v3104
    %v3106 = vand.u32 %v425, 4294901760
    %v3107 = vsub.f32 %v425, %v3106
    %v3108 = vand.u32 %v3107, 4294901760
    %3109 = vmatpush.msra.mxu0 %v3108
    %v3110 = vand.u32 %v423, 4294901760
    %v3111 = vsub.f32 %v423, %v3110
    %v3112 = vand.u32 %v3111, 4294901760
    %3113 = vmatpush.msra.mxu0 %v3112
    %v3114 = vand.u32 %v421, 4294901760
    %v3115 = vsub.f32 %v421, %v3114
    %v3116 = vand.u32 %v3115, 4294901760
    %3117 = vmatpush.msra.mxu0 %v3116
    %v3118 = vand.u32 %v419, 4294901760
    %v3119 = vsub.f32 %v419, %v3118
    %v3120 = vand.u32 %v3119, 4294901760
    %3121 = vmatpush.msra.mxu0 %v3120
    %v3122 = vand.u32 %v417, 4294901760
    %v3123 = vsub.f32 %v417, %v3122
    %v3124 = vand.u32 %v3123, 4294901760
    %3125 = vmatpush.msra.mxu0 %v3124
    %v3126 = vand.u32 %v415, 4294901760
    %v3127 = vsub.f32 %v415, %v3126
    %v3128 = vand.u32 %v3127, 4294901760
    %3129 = vmatpush.msra.mxu0 %v3128
    %v3130 = vand.u32 %v413, 4294901760
    %v3131 = vsub.f32 %v413, %v3130
    %v3132 = vand.u32 %v3131, 4294901760
    %3133 = vmatpush.msra.mxu0 %v3132
    %v3134 = vand.u32 %v1811, 4294901760
    %3135 = vmatmul.f32.gmra.mxu0 %v3134
    %v3136 = vpop.f32.mrf.mxu0
    %v3137 = vadd.f32 %v3068, %v3136
    %3138 = vdwg.mxu0
    %v3139 = vand.u32 %v443, 4294901760
    %3140 = vmatpush.msra.mxu0 %v3139
    %v3141 = vand.u32 %v441, 4294901760
    %3142 = vmatpush.msra.mxu0 %v3141
    %v3143 = vand.u32 %v439, 4294901760
    %3144 = vmatpush.msra.mxu0 %v3143
    %v3145 = vand.u32 %v437, 4294901760
    %3146 = vmatpush.msra.mxu0 %v3145
    %v3147 = vand.u32 %v435, 4294901760
    %3148 = vmatpush.msra.mxu0 %v3147
    %v3149 = vand.u32 %v433, 4294901760
    %3150 = vmatpush.msra.mxu0 %v3149
    %v3151 = vand.u32 %v431, 4294901760
    %3152 = vmatpush.msra.mxu0 %v3151
    %v3153 = vand.u32 %v429, 4294901760
    %3154 = vmatpush.msra.mxu0 %v3153
    %v3155 = vand.u32 %v427, 4294901760
    %3156 = vmatpush.msra.mxu0 %v3155
    %v3157 = vand.u32 %v425, 4294901760
    %3158 = vmatpush.msra.mxu0 %v3157
    %v3159 = vand.u32 %v423, 4294901760
    %3160 = vmatpush.msra.mxu0 %v3159
    %v3161 = vand.u32 %v421, 4294901760
    %3162 = vmatpush.msra.mxu0 %v3161
    %v3163 = vand.u32 %v419, 4294901760
    %3164 = vmatpush.msra.mxu0 %v3163
    %v3165 = vand.u32 %v417, 4294901760
    %3166 = vmatpush.msra.mxu0 %v3165
    %v3167 = vand.u32 %v415, 4294901760
    %3168 = vmatpush.msra.mxu0 %v3167
    %v3169 = vand.u32 %v413, 4294901760
    %3170 = vmatpush.msra.mxu0 %v3169
    %v3171 = vand.u32 %v1811, 4294901760
    %3172 = vmatmul.f32.gmra.mxu0 %v3171
    %v3173 = vpop.f32.mrf.mxu0
    %v3174 = vadd.f32 %v3137, %v3173
    %3175 = vdwg.mxu0
    %v3176 = vrsqrt.pop %v2492
    %v3177 = vmul.f32 %v3176, %v2492
    %v3178 = vmul.f32 %v3177, %v3176
    %v3179 = vmul.f32 0.5, %v3178
    %v3180 = vsub.f32 1.5, %v3179
    %v3181 = vmul.f32 %v3176, %v3180
    %vm3182 = vweird.f32 %v2492
    %vm3183 = vweird.f32 %v3176
    %vm3184 = vmor %vm3182, %vm3183
    %v3185 = vsel %vm3184, %v3176, %v3181
    %v3186 = vrsqrt.pop %v3174
    %v3187 = vmul.f32 %v3186, %v3174
    %v3188 = vmul.f32 %v3187, %v3186
    %v3189 = vmul.f32 0.5, %v3188
    %v3190 = vsub.f32 1.5, %v3189
    %v3191 = vmul.f32 %v3186, %v3190
    %vm3192 = vweird.f32 %v3174
    %vm3193 = vweird.f32 %v3186
    %vm3194 = vmor %vm3192, %vm3193
    %v3195 = vsel %vm3194, %v3186, %v3191
    %v3196 = vmul.f32 %v1808, %v3185
    %v3197 = vmul.f32 %v1809, %v3195
    %s3198 = scalar_lea.vmem [#allocation8], 1
    %v3199 = vld [vmem:[%s3198] ss:$4 sm:$0x3]
    %v3201 = vperm.slane %v3199, 0
    %v3202 = vperm.slane %v3199, 1
    %v3205 = vmul.f32 %v3196, %v3201
    %v3206 = vmul.f32 %v3197, %v3202
    %s3207 = scalar_lea.vmem [#allocation8], 2
    %v3208 = vld [vmem:[%s3207] ss:$4 sm:$0x3]
    %v3210 = vperm.slane %v3208, 0
    %v3211 = vperm.slane %v3208, 1
    %v3214 = vadd.f32 %v3205, %v3210
    %v3215 = vadd.f32 %v3206, %v3211
    %v3218 = vrot.slane %v3215, 6
    %vm3219 = vcmask 1041408
    %v3220 = vsel %vm3219, %v3214, %v3218
    %3222 = vst [vmem:[#allocation10] sm:$0xf] %v3220
    // Predicated region
    $region34: #{tpu_custom_call.1} parent=1 // pred_check
      _
    $region35: #{tpu_custom_call.1} parent=1 // pred_check_branch
      %3224 = sbr.rel (0) target = $region37
    $region36: #{tpu_custom_call.1} parent=1 // pred_region
      %3226 = vsyncadd [#allocation4], 0
      %s3228 = sshll.u32 [#allocation10], 4
      %s3229 = int_to_ptr.vmem [resolvable:$true] %s3228
      %s3230 = sshll.u32 %s4, 4
      %s3231 = int_to_ptr.hbm [resolvable:$true] %s3230
      %3233 = dma.vmem_to_hbm [thread:$0]  %s3229, 64, %s3231, [#allocation4]
    $region37: #{tpu_custom_call.1} parent=1 // pred_fallthru
      _
    // Predicated region
    $region38: #{tpu_custom_call.1} parent=1 // pred_check
      _
    $region39: #{tpu_custom_call.1} parent=1 // pred_check_branch
      %3235 = sbr.rel (0) target = $region41
    $region40: #{tpu_custom_call.1} parent=1 // pred_region
      %3237 = dma.done [#allocation4], 64
    $region41: #{tpu_custom_call.1} parent=1 // pred_fallthru
      _
    %3238 = vsyncpa [#allocation3], 1
    %3239 = vsyncpa [#allocation6], 1
    %3240 = vsyncpa [#allocation9], 1
    %3241 = vsyncpa [#allocation4], 1

</llo_original>
